<compile_context>
chip_gen: v7x
topology: tpu7x:2x2x1
jax: 0.10.0
libtpu: 0.0.40
codegen_flags: <defaults>
</compile_context>

<pallas_src>
import jax
import jax.numpy as jnp
from jax.experimental import pallas as pl
from jax.experimental.pallas import tpu as pltpu

# ----------------------- config (small synthetic BERT) -----------------------
VOCAB = 100
MAX_POS = 32
TYPE_VOCAB = 2
HIDDEN = 128          # stand-in for 768
N_HEADS = 4
HEAD_DIM = HIDDEN // N_HEADS
INTERMEDIATE = 256    # stand-in for 3072
N_LAYERS = 2          # stand-in for 12
UTT_SIZE = 128
BATCH = 2
SEQ = 8
LN_EPS = 1e-12

# ------------------- packed parameter slab layout (static) -------------------
# Weight slab (bf16): rows x 384 lanes, per-layer block of 640 rows.
W_COLS = 3 * HIDDEN                       # 384
W_QKV = 0                                 # (HIDDEN, 3*HIDDEN)
W_WO = HIDDEN                             # (HIDDEN, HIDDEN)
W_W1 = 2 * HIDDEN                         # (HIDDEN, INTERMEDIATE)
W_W2 = 3 * HIDDEN                         # (INTERMEDIATE, HIDDEN)
W_ROWS_PER_LAYER = 3 * HIDDEN + INTERMEDIATE        # 640
W_POOL = N_LAYERS * W_ROWS_PER_LAYER                 # pooler weight (H, H)
W_LIN = W_POOL + HIDDEN                               # final linear (H, UTT)
W_ROWS = W_LIN + HIDDEN                               # 1536 total rows

# Vector slab (f32): one row per bias / LN vector, 384 lanes wide.
VP_COLS = 3 * HIDDEN
VP_EMB_G = 0
VP_EMB_B = 1
VP_LAYER0 = 2
(VP_BQKV, VP_BO, VP_LN1G, VP_LN1B, VP_B1, VP_B2, VP_LN2G, VP_LN2B) = range(8)
VP_ROWS_PER_LAYER = 8
VP_POOLB = VP_LAYER0 + N_LAYERS * VP_ROWS_PER_LAYER
VP_LINB = VP_POOLB + 1
VP_ROWS = ((VP_LINB + 1 + 7) // 8) * 8


# ------------------------------ fused kernel ---------------------------------
def _encoder_kernel(emb_ref, w_ref, vp_ref, out_ref):
    bf16 = jnp.bfloat16
    H, I, NH, Dh = HIDDEN, INTERMEDIATE, N_HEADS, HEAD_DIM
    B, S = BATCH, SEQ
    BS = B * S

    def vp(row, width=H):                      # (1, width) f32 bias / LN vector
        return vp_ref[row:row + 1, 0:width]

    def wmat(row, nrows, ncols):               # bf16 weight block (static slice)
        return w_ref[row:row + nrows, 0:ncols]

    def ln(y, g, b):                           # one-pass variance: E[x^2]-mean^2
        mu = jnp.mean(y, axis=-1, keepdims=True)
        ms = jnp.mean(y * y, axis=-1, keepdims=True)
        var = ms - mu * mu
        return (y - mu) * jax.lax.rsqrt(var + LN_EPS) * g + b

    def mm(a_f32, w_bf16):                     # bf16 MXU operands, f32 accumulate
        return jnp.dot(a_f32.astype(bf16), w_bf16,
                       preferred_element_type=jnp.float32)

    # --- embedding LayerNorm (word + pos + type already summed on host) ------
    x = ln(emb_ref[...], vp(VP_EMB_G), vp(VP_EMB_B))          # (BS, H) f32

    for l in range(N_LAYERS):                  # static unroll, N_LAYERS=2
        wrow = l * W_ROWS_PER_LAYER
        vrow = VP_LAYER0 + l * VP_ROWS_PER_LAYER

        # ------------- self-attention (fused QKV, batched over heads) --------
        # 1/sqrt(Dh) scale is pre-folded into the Q columns of wqkv.
        qkv = mm(x, wmat(wrow + W_QKV, H, 3 * H)) + vp(vrow + VP_BQKV, 3 * H)

        # (BS, 3H) -> q/k/v, each (NH*B, S, Dh): lane-aligned slices, stacked
        # along a leading axis (cheap), then a leading-dim merge reshape.
        def split_heads(col0):
            t3 = qkv[:, col0:col0 + H].reshape(B, S, H)
            return jnp.stack(
                [t3[:, :, h * Dh:(h + 1) * Dh] for h in range(NH)],
                axis=0).reshape(NH * B, S, Dh)

        q = split_heads(0).astype(bf16)
        k = split_heads(H).astype(bf16)
        v = split_heads(2 * H).astype(bf16)

        # No attention mask: reference forward calls self.bert(x) without one.
        s = jnp.einsum("xqd,xkd->xqk", q, k,
                       preferred_element_type=jnp.float32)     # (NH*B, S, S)
        m = jnp.max(s, axis=-1, keepdims=True)
        p = jnp.exp(s - m)
        denom = jnp.sum(p, axis=-1, keepdims=True)
        p = p * pl.reciprocal(denom, approx=True)              # EUP, not VPU div
        ctx = jnp.einsum("xqk,xkd->xqd", p.astype(bf16), v,
                         preferred_element_type=jnp.float32)   # (NH*B, S, Dh)

        # merge heads back onto lanes: head h -> lanes [h*Dh, (h+1)*Dh)
        ctx4 = ctx.reshape(NH, B, S, Dh)
        ctx_all = jnp.concatenate([ctx4[h] for h in range(NH)], axis=-1)
        ctx_all = ctx_all.reshape(BS, H)                        # (BS, H) lane-dense

        attn_out = mm(ctx_all, wmat(wrow + W_WO, H, H)) + vp(vrow + VP_BO)
        x = ln(x + attn_out, vp(vrow + VP_LN1G), vp(vrow + VP_LN1B))

        # ------------- feed-forward -------------------------------------------
        hdn = mm(x, wmat(wrow + W_W1, H, I)) + vp(vrow + VP_B1, I)
        hdn = jax.nn.gelu(hdn, approximate=True)   # TODO(synk): HF uses erf GELU
        ffn = mm(hdn, wmat(wrow + W_W2, I, H)) + vp(vrow + VP_B2)
        x = ln(x + ffn, vp(vrow + VP_LN2G), vp(vrow + VP_LN2B))

    # --- BERT pooler (tanh(W_p * h[CLS] + b_p)) + final Linear, fused ---------
    cls = x.reshape(B, S, H)[:, 0, :]                           # (B, H)
    pooled = jnp.tanh(mm(cls, wmat(W_POOL, H, H)) + vp(VP_POOLB))
    out = mm(pooled, wmat(W_LIN, H, UTT_SIZE)) + vp(VP_LINB, UTT_SIZE)
    out_ref[...] = out.astype(out_ref.dtype)


# ------------------------------- parameters ----------------------------------
def init_params(key):
    f32 = jnp.float32

    def nrm(k, shape):
        return 0.02 * jax.random.normal(k, shape, f32)

    keys = iter(jax.random.split(key, 16))
    word_emb = nrm(next(keys), (VOCAB, HIDDEN))
    pos_emb = nrm(next(keys), (MAX_POS, HIDDEN))
    type_emb = nrm(next(keys), (TYPE_VOCAB, HIDDEN))

    w = jnp.zeros((W_ROWS, W_COLS), f32)
    vpv = jnp.zeros((VP_ROWS, VP_COLS), f32)

    # embedding LayerNorm gamma=1, beta=0
    vpv = vpv.at[VP_EMB_G, :HIDDEN].set(1.0)

    scale = 1.0 / float(HEAD_DIM) ** 0.5
    for l in range(N_LAYERS):
        wrow = l * W_ROWS_PER_LAYER
        vrow = VP_LAYER0 + l * VP_ROWS_PER_LAYER

        wqkv = nrm(next(keys), (HIDDEN, 3 * HIDDEN))
        # fold the 1/sqrt(HEAD_DIM) attention scale into the Q projection
        wqkv = wqkv.at[:, :HIDDEN].multiply(scale)
        wo = nrm(next(keys), (HIDDEN, HIDDEN))
        w1 = nrm(next(keys), (HIDDEN, INTERMEDIATE))
        w2 = nrm(next(keys), (INTERMEDIATE, HIDDEN))

        w = w.at[wrow + W_QKV:wrow + W_QKV + HIDDEN, :3 * HIDDEN].set(wqkv)
        w = w.at[wrow + W_WO:wrow + W_WO + HIDDEN, :HIDDEN].set(wo)
        w = w.at[wrow + W_W1:wrow + W_W1 + HIDDEN, :INTERMEDIATE].set(w1)
        w = w.at[wrow + W_W2:wrow + W_W2 + INTERMEDIATE, :HIDDEN].set(w2)

        # biases stay zero (Q-scale fold on bqkv is a no-op); LN gammas = 1
        vpv = vpv.at[vrow + VP_LN1G, :HIDDEN].set(1.0)
        vpv = vpv.at[vrow + VP_LN2G, :HIDDEN].set(1.0)

    pool_w = nrm(next(keys), (HIDDEN, HIDDEN))
    lin_w = nrm(next(keys), (HIDDEN, UTT_SIZE))
    w = w.at[W_POOL:W_POOL + HIDDEN, :HIDDEN].set(pool_w)
    w = w.at[W_LIN:W_LIN + HIDDEN, :UTT_SIZE].set(lin_w)

    return {
        "word_emb": word_emb,
        "pos_emb": pos_emb,
        "type_emb": type_emb,
        "w_slab": w.astype(jnp.bfloat16),   # all matmul weights, one bf16 slab
        "vp_slab": vpv,                     # all LN vectors + biases, one f32 slab
    }


# -------------------------------- forward ------------------------------------
def bert_utt_encoder(params, token_ids):
    B, S = token_ids.shape
    assert B == BATCH and S == SEQ, (B, S)

    # Embedding lookups (gather) stay in plain JAX glue; everything from the
    # embedding LayerNorm to the final Linear runs in ONE Pallas kernel.
    we = jnp.take(params["word_emb"], token_ids, axis=0)          # (B, S, H)
    pe = params["pos_emb"][:S][None, :, :]                        # (1, S, H)
    te = params["type_emb"][0][None, None, :]                     # (1, 1, H)
    emb = (we + pe + te).reshape(B * S, HIDDEN).astype(jnp.float32)

    bs = B * S
    flops = int(
        2 * bs * N_LAYERS * (HIDDEN * 3 * HIDDEN + HIDDEN * HIDDEN
                             + 2 * HIDDEN * INTERMEDIATE)
        + 2 * N_LAYERS * 2 * (N_HEADS * B) * SEQ * SEQ * HEAD_DIM
        + 2 * B * (HIDDEN * HIDDEN + HIDDEN * UTT_SIZE))
    transcendentals = int(
        N_LAYERS * (N_HEADS * B * SEQ * SEQ + bs * INTERMEDIATE)
        + B * HIDDEN + 5 * bs)
    bytes_accessed = int(
        emb.size * 4 + params["w_slab"].size * 2
        + params["vp_slab"].size * 4 + B * UTT_SIZE * 4)

    vmem = pl.BlockSpec(memory_space=pltpu.MemorySpace.VMEM)      # full array in VMEM
    return pl.pallas_call(
        _encoder_kernel,
        out_shape=jax.ShapeDtypeStruct((B, UTT_SIZE), jnp.float32),
        in_specs=[vmem, vmem, vmem],
        out_specs=vmem,
        cost_estimate=pl.CostEstimate(flops=flops,
                                      transcendentals=transcendentals,
                                      bytes_accessed=bytes_accessed),
    )(emb, params["w_slab"], params["vp_slab"])


# ---------------------------------- main --------------------------------------
if __name__ == "__main__":
    root = jax.random.PRNGKey(0)
    k_params, k_ids = jax.random.split(root)
    params = init_params(k_params)
    token_ids = jax.random.randint(k_ids, (BATCH, SEQ), 0, VOCAB, dtype=jnp.int32)

    fwd = jax.jit(bert_utt_encoder)
    out = jax.block_until_ready(fwd(params, token_ids))

    assert out.shape == (BATCH, UTT_SIZE), out.shape
    assert out.dtype == jnp.float32
    assert bool(jnp.all(jnp.isfinite(out)))
    print("KERNEL_OK")
</pallas_src>

<mosaic_0001>
module attributes {stable_mosaic.version = 11 : i64} {
  func.func @_encoder_kernel(%arg0: memref<16x128xf32, #tpu.memory_space<vmem>>, %arg1: memref<1536x384xbf16, #tpu.memory_space<vmem>>, %arg2: memref<24x384xf32, #tpu.memory_space<vmem>>, %arg3: memref<2x128xf32, #tpu.memory_space<vmem>>) attributes {dimension_semantics = [], scalar_prefetch = 0 : i64, scratch_operands = 0 : i64, tpu.core_type = #tpu.core_type<tc>} {
    %c0 = arith.constant 0 : index
    %c0_0 = arith.constant 0 : index
    %0 = vector.load %arg0[%c0, %c0_0] : memref<16x128xf32, #tpu.memory_space<vmem>>, vector<16x128xf32>
    %c0_1 = arith.constant 0 : index
    %c0_2 = arith.constant 0 : index
    %1 = vector.load %arg2[%c0_1, %c0_2] : memref<24x384xf32, #tpu.memory_space<vmem>>, vector<1x128xf32>
    %c1 = arith.constant 1 : index
    %c0_3 = arith.constant 0 : index
    %2 = vector.load %arg2[%c1, %c0_3] : memref<24x384xf32, #tpu.memory_space<vmem>>, vector<1x128xf32>
    %cst = arith.constant dense<0.000000e+00> : vector<16xf32>
    %3 = vector.multi_reduction <add>, %0, %cst [1] : vector<16x128xf32> to vector<16xf32>
    %4 = vector.shape_cast %3 : vector<16xf32> to vector<16x1xf32>
    %cst_4 = arith.constant 1.280000e+02 : f32
    %5 = vector.broadcast %cst_4 : f32 to vector<16x1xf32>
    %6 = arith.divf %4, %5 : vector<16x1xf32>
    %7 = arith.mulf %0, %0 : vector<16x128xf32>
    %cst_5 = arith.constant dense<0.000000e+00> : vector<16xf32>
    %8 = vector.multi_reduction <add>, %7, %cst_5 [1] : vector<16x128xf32> to vector<16xf32>
    %9 = vector.shape_cast %8 : vector<16xf32> to vector<16x1xf32>
    %cst_6 = arith.constant 1.280000e+02 : f32
    %10 = vector.broadcast %cst_6 : f32 to vector<16x1xf32>
    %11 = arith.divf %9, %10 : vector<16x1xf32>
    %12 = arith.mulf %6, %6 : vector<16x1xf32>
    %13 = arith.subf %11, %12 : vector<16x1xf32>
    %14 = vector.broadcast %6 : vector<16x1xf32> to vector<16x128xf32>
    %15 = arith.subf %0, %14 : vector<16x128xf32>
    %cst_7 = arith.constant 9.99999996E-13 : f32
    %16 = vector.broadcast %cst_7 : f32 to vector<16x1xf32>
    %17 = arith.addf %13, %16 : vector<16x1xf32>
    %18 = math.rsqrt %17 : vector<16x1xf32>
    %19 = vector.broadcast %18 : vector<16x1xf32> to vector<16x128xf32>
    %20 = arith.mulf %15, %19 : vector<16x128xf32>
    %21 = vector.broadcast %1 : vector<1x128xf32> to vector<16x128xf32>
    %22 = arith.mulf %20, %21 : vector<16x128xf32>
    %23 = vector.broadcast %2 : vector<1x128xf32> to vector<16x128xf32>
    %24 = arith.addf %22, %23 : vector<16x128xf32>
    %c0_8 = arith.constant 0 : index
    %c0_9 = arith.constant 0 : index
    %25 = vector.load %arg1[%c0_8, %c0_9] : memref<1536x384xbf16, #tpu.memory_space<vmem>>, vector<128x384xbf16>
    %26 = arith.truncf %24 : vector<16x128xf32> to vector<16x128xbf16>
    %cst_10 = arith.constant dense<0.000000e+00> : vector<16x384xf32>
    %27 = tpu.matmul %26, %25, %cst_10 {dimension_numbers = #tpu.dot_dimension_numbers<[1], [0], [0], [1], [0, 0, 1, 1], [], []>} : vector<16x128xbf16>, vector<128x384xbf16>, vector<16x384xf32> -> vector<16x384xf32>
    %c2 = arith.constant 2 : index
    %c0_11 = arith.constant 0 : index
    %28 = vector.load %arg2[%c2, %c0_11] : memref<24x384xf32, #tpu.memory_space<vmem>>, vector<1x384xf32>
    %29 = vector.broadcast %28 : vector<1x384xf32> to vector<16x384xf32>
    %30 = arith.addf %27, %29 : vector<16x384xf32>
    %31 = vector.extract_strided_slice %30 {offsets = [0, 0], sizes = [16, 128], strides = [1, 1]} : vector<16x384xf32> to vector<16x128xf32>
    %32 = vector.shape_cast %31 : vector<16x128xf32> to vector<2x8x128xf32>
    %33 = vector.extract_strided_slice %32 {offsets = [0, 0, 0], sizes = [2, 8, 32], strides = [1, 1, 1]} : vector<2x8x128xf32> to vector<2x8x32xf32>
    %34 = vector.extract_strided_slice %32 {offsets = [0, 0, 32], sizes = [2, 8, 32], strides = [1, 1, 1]} : vector<2x8x128xf32> to vector<2x8x32xf32>
    %35 = vector.extract_strided_slice %32 {offsets = [0, 0, 64], sizes = [2, 8, 32], strides = [1, 1, 1]} : vector<2x8x128xf32> to vector<2x8x32xf32>
    %36 = vector.extract_strided_slice %32 {offsets = [0, 0, 96], sizes = [2, 8, 32], strides = [1, 1, 1]} : vector<2x8x128xf32> to vector<2x8x32xf32>
    %37 = vector.shape_cast %33 : vector<2x8x32xf32> to vector<1x2x8x32xf32>
    %38 = vector.shape_cast %34 : vector<2x8x32xf32> to vector<1x2x8x32xf32>
    %39 = vector.shape_cast %35 : vector<2x8x32xf32> to vector<1x2x8x32xf32>
    %40 = vector.shape_cast %36 : vector<2x8x32xf32> to vector<1x2x8x32xf32>
    %41 = tpu.concatenate %37, %38, %39, %40 in 0 : vector<1x2x8x32xf32>, vector<1x2x8x32xf32>, vector<1x2x8x32xf32>, vector<1x2x8x32xf32> -> vector<4x2x8x32xf32>
    %42 = vector.shape_cast %41 : vector<4x2x8x32xf32> to vector<8x8x32xf32>
    %43 = arith.truncf %42 : vector<8x8x32xf32> to vector<8x8x32xbf16>
    %44 = vector.extract_strided_slice %30 {offsets = [0, 128], sizes = [16, 128], strides = [1, 1]} : vector<16x384xf32> to vector<16x128xf32>
    %45 = vector.shape_cast %44 : vector<16x128xf32> to vector<2x8x128xf32>
    %46 = vector.extract_strided_slice %45 {offsets = [0, 0, 0], sizes = [2, 8, 32], strides = [1, 1, 1]} : vector<2x8x128xf32> to vector<2x8x32xf32>
    %47 = vector.extract_strided_slice %45 {offsets = [0, 0, 32], sizes = [2, 8, 32], strides = [1, 1, 1]} : vector<2x8x128xf32> to vector<2x8x32xf32>
    %48 = vector.extract_strided_slice %45 {offsets = [0, 0, 64], sizes = [2, 8, 32], strides = [1, 1, 1]} : vector<2x8x128xf32> to vector<2x8x32xf32>
    %49 = vector.extract_strided_slice %45 {offsets = [0, 0, 96], sizes = [2, 8, 32], strides = [1, 1, 1]} : vector<2x8x128xf32> to vector<2x8x32xf32>
    %50 = vector.shape_cast %46 : vector<2x8x32xf32> to vector<1x2x8x32xf32>
    %51 = vector.shape_cast %47 : vector<2x8x32xf32> to vector<1x2x8x32xf32>
    %52 = vector.shape_cast %48 : vector<2x8x32xf32> to vector<1x2x8x32xf32>
    %53 = vector.shape_cast %49 : vector<2x8x32xf32> to vector<1x2x8x32xf32>
    %54 = tpu.concatenate %50, %51, %52, %53 in 0 : vector<1x2x8x32xf32>, vector<1x2x8x32xf32>, vector<1x2x8x32xf32>, vector<1x2x8x32xf32> -> vector<4x2x8x32xf32>
    %55 = vector.shape_cast %54 : vector<4x2x8x32xf32> to vector<8x8x32xf32>
    %56 = arith.truncf %55 : vector<8x8x32xf32> to vector<8x8x32xbf16>
    %57 = vector.extract_strided_slice %30 {offsets = [0, 256], sizes = [16, 128], strides = [1, 1]} : vector<16x384xf32> to vector<16x128xf32>
    %58 = vector.shape_cast %57 : vector<16x128xf32> to vector<2x8x128xf32>
    %59 = vector.extract_strided_slice %58 {offsets = [0, 0, 0], sizes = [2, 8, 32], strides = [1, 1, 1]} : vector<2x8x128xf32> to vector<2x8x32xf32>
    %60 = vector.extract_strided_slice %58 {offsets = [0, 0, 32], sizes = [2, 8, 32], strides = [1, 1, 1]} : vector<2x8x128xf32> to vector<2x8x32xf32>
    %61 = vector.extract_strided_slice %58 {offsets = [0, 0, 64], sizes = [2, 8, 32], strides = [1, 1, 1]} : vector<2x8x128xf32> to vector<2x8x32xf32>
    %62 = vector.extract_strided_slice %58 {offsets = [0, 0, 96], sizes = [2, 8, 32], strides = [1, 1, 1]} : vector<2x8x128xf32> to vector<2x8x32xf32>
    %63 = vector.shape_cast %59 : vector<2x8x32xf32> to vector<1x2x8x32xf32>
    %64 = vector.shape_cast %60 : vector<2x8x32xf32> to vector<1x2x8x32xf32>
    %65 = vector.shape_cast %61 : vector<2x8x32xf32> to vector<1x2x8x32xf32>
    %66 = vector.shape_cast %62 : vector<2x8x32xf32> to vector<1x2x8x32xf32>
    %67 = tpu.concatenate %63, %64, %65, %66 in 0 : vector<1x2x8x32xf32>, vector<1x2x8x32xf32>, vector<1x2x8x32xf32>, vector<1x2x8x32xf32> -> vector<4x2x8x32xf32>
    %68 = vector.shape_cast %67 : vector<4x2x8x32xf32> to vector<8x8x32xf32>
    %69 = arith.truncf %68 : vector<8x8x32xf32> to vector<8x8x32xbf16>
    "tpu.trace_start"() <{level = 10 : i32, message = "xqd,xkd->xqk"}> : () -> ()
    %cst_12 = arith.constant dense<0.000000e+00> : vector<8x8x8xf32>
    %70 = tpu.matmul %43, %56, %cst_12 {dimension_numbers = #tpu.dot_dimension_numbers<[2], [2], [1], [1], [0, 0, 0, 1, 1, 1], [0], [0]>} : vector<8x8x32xbf16>, vector<8x8x32xbf16>, vector<8x8x8xf32> -> vector<8x8x8xf32>
    "tpu.trace_stop"() : () -> ()
    %cst_13 = arith.constant dense<0xFF800000> : vector<8x8xf32>
    %71 = vector.multi_reduction <maximumf>, %70, %cst_13 [2] : vector<8x8x8xf32> to vector<8x8xf32>
    %72 = vector.shape_cast %71 : vector<8x8xf32> to vector<8x8x1xf32>
    %73 = vector.broadcast %72 : vector<8x8x1xf32> to vector<8x8x8xf32>
    %74 = arith.subf %70, %73 : vector<8x8x8xf32>
    %75 = math.exp %74 : vector<8x8x8xf32>
    %cst_14 = arith.constant dense<0.000000e+00> : vector<8x8xf32>
    %76 = vector.multi_reduction <add>, %75, %cst_14 [2] : vector<8x8x8xf32> to vector<8x8xf32>
    %77 = vector.shape_cast %76 : vector<8x8xf32> to vector<8x8x1xf32>
    %78 = tpu.reciprocal %77 {approx = true} : vector<8x8x1xf32> -> vector<8x8x1xf32>
    %79 = vector.broadcast %78 : vector<8x8x1xf32> to vector<8x8x8xf32>
    %80 = arith.mulf %75, %79 : vector<8x8x8xf32>
    %81 = arith.truncf %80 : vector<8x8x8xf32> to vector<8x8x8xbf16>
    "tpu.trace_start"() <{level = 10 : i32, message = "xqk,xkd->xqd"}> : () -> ()
    %cst_15 = arith.constant dense<0.000000e+00> : vector<8x8x32xf32>
    %82 = tpu.matmul %81, %69, %cst_15 {dimension_numbers = #tpu.dot_dimension_numbers<[2], [1], [1], [2], [0, 0, 0, 1, 1, 2], [0], [0]>} : vector<8x8x8xbf16>, vector<8x8x32xbf16>, vector<8x8x32xf32> -> vector<8x8x32xf32>
    "tpu.trace_stop"() : () -> ()
    %83 = vector.shape_cast %82 : vector<8x8x32xf32> to vector<4x2x8x32xf32>
    %84 = vector.extract_strided_slice %83 {offsets = [0, 0, 0, 0], sizes = [1, 2, 8, 32], strides = [1, 1, 1, 1]} : vector<4x2x8x32xf32> to vector<1x2x8x32xf32>
    %85 = vector.shape_cast %84 : vector<1x2x8x32xf32> to vector<2x8x32xf32>
    %86 = vector.extract_strided_slice %83 {offsets = [1, 0, 0, 0], sizes = [1, 2, 8, 32], strides = [1, 1, 1, 1]} : vector<4x2x8x32xf32> to vector<1x2x8x32xf32>
    %87 = vector.shape_cast %86 : vector<1x2x8x32xf32> to vector<2x8x32xf32>
    %88 = vector.extract_strided_slice %83 {offsets = [2, 0, 0, 0], sizes = [1, 2, 8, 32], strides = [1, 1, 1, 1]} : vector<4x2x8x32xf32> to vector<1x2x8x32xf32>
    %89 = vector.shape_cast %88 : vector<1x2x8x32xf32> to vector<2x8x32xf32>
    %90 = vector.extract_strided_slice %83 {offsets = [3, 0, 0, 0], sizes = [1, 2, 8, 32], strides = [1, 1, 1, 1]} : vector<4x2x8x32xf32> to vector<1x2x8x32xf32>
    %91 = vector.shape_cast %90 : vector<1x2x8x32xf32> to vector<2x8x32xf32>
    %92 = tpu.concatenate %85, %87, %89, %91 in 2 : vector<2x8x32xf32>, vector<2x8x32xf32>, vector<2x8x32xf32>, vector<2x8x32xf32> -> vector<2x8x128xf32>
    %93 = vector.shape_cast %92 : vector<2x8x128xf32> to vector<16x128xf32>
    %c128 = arith.constant 128 : index
    %c0_16 = arith.constant 0 : index
    %94 = vector.load %arg1[%c128, %c0_16] : memref<1536x384xbf16, #tpu.memory_space<vmem>>, vector<128x128xbf16>
    %95 = arith.truncf %93 : vector<16x128xf32> to vector<16x128xbf16>
    %cst_17 = arith.constant dense<0.000000e+00> : vector<16x128xf32>
    %96 = tpu.matmul %95, %94, %cst_17 {dimension_numbers = #tpu.dot_dimension_numbers<[1], [0], [0], [1], [0, 0, 1, 1], [], []>} : vector<16x128xbf16>, vector<128x128xbf16>, vector<16x128xf32> -> vector<16x128xf32>
    %c3 = arith.constant 3 : index
    %c0_18 = arith.constant 0 : index
    %97 = vector.load %arg2[%c3, %c0_18] : memref<24x384xf32, #tpu.memory_space<vmem>>, vector<1x128xf32>
    %98 = vector.broadcast %97 : vector<1x128xf32> to vector<16x128xf32>
    %99 = arith.addf %96, %98 : vector<16x128xf32>
    %100 = arith.addf %24, %99 : vector<16x128xf32>
    %c4 = arith.constant 4 : index
    %c0_19 = arith.constant 0 : index
    %101 = vector.load %arg2[%c4, %c0_19] : memref<24x384xf32, #tpu.memory_space<vmem>>, vector<1x128xf32>
    %c5 = arith.constant 5 : index
    %c0_20 = arith.constant 0 : index
    %102 = vector.load %arg2[%c5, %c0_20] : memref<24x384xf32, #tpu.memory_space<vmem>>, vector<1x128xf32>
    %cst_21 = arith.constant dense<0.000000e+00> : vector<16xf32>
    %103 = vector.multi_reduction <add>, %100, %cst_21 [1] : vector<16x128xf32> to vector<16xf32>
    %104 = vector.shape_cast %103 : vector<16xf32> to vector<16x1xf32>
    %cst_22 = arith.constant 1.280000e+02 : f32
    %105 = vector.broadcast %cst_22 : f32 to vector<16x1xf32>
    %106 = arith.divf %104, %105 : vector<16x1xf32>
    %107 = arith.mulf %100, %100 : vector<16x128xf32>
    %cst_23 = arith.constant dense<0.000000e+00> : vector<16xf32>
    %108 = vector.multi_reduction <add>, %107, %cst_23 [1] : vector<16x128xf32> to vector<16xf32>
    %109 = vector.shape_cast %108 : vector<16xf32> to vector<16x1xf32>
    %cst_24 = arith.constant 1.280000e+02 : f32
    %110 = vector.broadcast %cst_24 : f32 to vector<16x1xf32>
    %111 = arith.divf %109, %110 : vector<16x1xf32>
    %112 = arith.mulf %106, %106 : vector<16x1xf32>
    %113 = arith.subf %111, %112 : vector<16x1xf32>
    %114 = vector.broadcast %106 : vector<16x1xf32> to vector<16x128xf32>
    %115 = arith.subf %100, %114 : vector<16x128xf32>
    %cst_25 = arith.constant 9.99999996E-13 : f32
    %116 = vector.broadcast %cst_25 : f32 to vector<16x1xf32>
    %117 = arith.addf %113, %116 : vector<16x1xf32>
    %118 = math.rsqrt %117 : vector<16x1xf32>
    %119 = vector.broadcast %118 : vector<16x1xf32> to vector<16x128xf32>
    %120 = arith.mulf %115, %119 : vector<16x128xf32>
    %121 = vector.broadcast %101 : vector<1x128xf32> to vector<16x128xf32>
    %122 = arith.mulf %120, %121 : vector<16x128xf32>
    %123 = vector.broadcast %102 : vector<1x128xf32> to vector<16x128xf32>
    %124 = arith.addf %122, %123 : vector<16x128xf32>
    %c256 = arith.constant 256 : index
    %c0_26 = arith.constant 0 : index
    %125 = vector.load %arg1[%c256, %c0_26] : memref<1536x384xbf16, #tpu.memory_space<vmem>>, vector<128x256xbf16>
    %126 = arith.truncf %124 : vector<16x128xf32> to vector<16x128xbf16>
    %cst_27 = arith.constant dense<0.000000e+00> : vector<16x256xf32>
    %127 = tpu.matmul %126, %125, %cst_27 {dimension_numbers = #tpu.dot_dimension_numbers<[1], [0], [0], [1], [0, 0, 1, 1], [], []>} : vector<16x128xbf16>, vector<128x256xbf16>, vector<16x256xf32> -> vector<16x256xf32>
    %c6 = arith.constant 6 : index
    %c0_28 = arith.constant 0 : index
    %128 = vector.load %arg2[%c6, %c0_28] : memref<24x384xf32, #tpu.memory_space<vmem>>, vector<1x256xf32>
    %129 = vector.broadcast %128 : vector<1x256xf32> to vector<16x256xf32>
    %130 = arith.addf %127, %129 : vector<16x256xf32>
    %131 = arith.mulf %130, %130 : vector<16x256xf32>
    %132 = arith.mulf %130, %131 : vector<16x256xf32>
    %cst_29 = arith.constant 4.471500e-02 : f32
    %133 = vector.broadcast %cst_29 : f32 to vector<16x256xf32>
    %134 = arith.mulf %133, %132 : vector<16x256xf32>
    %135 = arith.addf %130, %134 : vector<16x256xf32>
    %cst_30 = arith.constant 0.797884583 : f32
    %136 = vector.broadcast %cst_30 : f32 to vector<16x256xf32>
    %137 = arith.mulf %136, %135 : vector<16x256xf32>
    %138 = math.tanh %137 : vector<16x256xf32>
    %cst_31 = arith.constant 1.000000e+00 : f32
    %139 = vector.broadcast %cst_31 : f32 to vector<16x256xf32>
    %140 = arith.addf %139, %138 : vector<16x256xf32>
    %cst_32 = arith.constant 5.000000e-01 : f32
    %141 = vector.broadcast %cst_32 : f32 to vector<16x256xf32>
    %142 = arith.mulf %141, %140 : vector<16x256xf32>
    %143 = arith.mulf %130, %142 : vector<16x256xf32>
    %c384 = arith.constant 384 : index
    %c0_33 = arith.constant 0 : index
    %144 = vector.load %arg1[%c384, %c0_33] : memref<1536x384xbf16, #tpu.memory_space<vmem>>, vector<256x128xbf16>
    %145 = arith.truncf %143 : vector<16x256xf32> to vector<16x256xbf16>
    %cst_34 = arith.constant dense<0.000000e+00> : vector<16x128xf32>
    %146 = tpu.matmul %145, %144, %cst_34 {dimension_numbers = #tpu.dot_dimension_numbers<[1], [0], [0], [1], [0, 0, 1, 1], [], []>} : vector<16x256xbf16>, vector<256x128xbf16>, vector<16x128xf32> -> vector<16x128xf32>
    %c7 = arith.constant 7 : index
    %c0_35 = arith.constant 0 : index
    %147 = vector.load %arg2[%c7, %c0_35] : memref<24x384xf32, #tpu.memory_space<vmem>>, vector<1x128xf32>
    %148 = vector.broadcast %147 : vector<1x128xf32> to vector<16x128xf32>
    %149 = arith.addf %146, %148 : vector<16x128xf32>
    %150 = arith.addf %124, %149 : vector<16x128xf32>
    %c8 = arith.constant 8 : index
    %c0_36 = arith.constant 0 : index
    %151 = vector.load %arg2[%c8, %c0_36] : memref<24x384xf32, #tpu.memory_space<vmem>>, vector<1x128xf32>
    %c9 = arith.constant 9 : index
    %c0_37 = arith.constant 0 : index
    %152 = vector.load %arg2[%c9, %c0_37] : memref<24x384xf32, #tpu.memory_space<vmem>>, vector<1x128xf32>
    %cst_38 = arith.constant dense<0.000000e+00> : vector<16xf32>
    %153 = vector.multi_reduction <add>, %150, %cst_38 [1] : vector<16x128xf32> to vector<16xf32>
    %154 = vector.shape_cast %153 : vector<16xf32> to vector<16x1xf32>
    %cst_39 = arith.constant 1.280000e+02 : f32
    %155 = vector.broadcast %cst_39 : f32 to vector<16x1xf32>
    %156 = arith.divf %154, %155 : vector<16x1xf32>
    %157 = arith.mulf %150, %150 : vector<16x128xf32>
    %cst_40 = arith.constant dense<0.000000e+00> : vector<16xf32>
    %158 = vector.multi_reduction <add>, %157, %cst_40 [1] : vector<16x128xf32> to vector<16xf32>
    %159 = vector.shape_cast %158 : vector<16xf32> to vector<16x1xf32>
    %cst_41 = arith.constant 1.280000e+02 : f32
    %160 = vector.broadcast %cst_41 : f32 to vector<16x1xf32>
    %161 = arith.divf %159, %160 : vector<16x1xf32>
    %162 = arith.mulf %156, %156 : vector<16x1xf32>
    %163 = arith.subf %161, %162 : vector<16x1xf32>
    %164 = vector.broadcast %156 : vector<16x1xf32> to vector<16x128xf32>
    %165 = arith.subf %150, %164 : vector<16x128xf32>
    %cst_42 = arith.constant 9.99999996E-13 : f32
    %166 = vector.broadcast %cst_42 : f32 to vector<16x1xf32>
    %167 = arith.addf %163, %166 : vector<16x1xf32>
    %168 = math.rsqrt %167 : vector<16x1xf32>
    %169 = vector.broadcast %168 : vector<16x1xf32> to vector<16x128xf32>
    %170 = arith.mulf %165, %169 : vector<16x128xf32>
    %171 = vector.broadcast %151 : vector<1x128xf32> to vector<16x128xf32>
    %172 = arith.mulf %170, %171 : vector<16x128xf32>
    %173 = vector.broadcast %152 : vector<1x128xf32> to vector<16x128xf32>
    %174 = arith.addf %172, %173 : vector<16x128xf32>
    %c640 = arith.constant 640 : index
    %c0_43 = arith.constant 0 : index
    %175 = vector.load %arg1[%c640, %c0_43] : memref<1536x384xbf16, #tpu.memory_space<vmem>>, vector<128x384xbf16>
    %176 = arith.truncf %174 : vector<16x128xf32> to vector<16x128xbf16>
    %cst_44 = arith.constant dense<0.000000e+00> : vector<16x384xf32>
    %177 = tpu.matmul %176, %175, %cst_44 {dimension_numbers = #tpu.dot_dimension_numbers<[1], [0], [0], [1], [0, 0, 1, 1], [], []>} : vector<16x128xbf16>, vector<128x384xbf16>, vector<16x384xf32> -> vector<16x384xf32>
    %c10 = arith.constant 10 : index
    %c0_45 = arith.constant 0 : index
    %178 = vector.load %arg2[%c10, %c0_45] : memref<24x384xf32, #tpu.memory_space<vmem>>, vector<1x384xf32>
    %179 = vector.broadcast %178 : vector<1x384xf32> to vector<16x384xf32>
    %180 = arith.addf %177, %179 : vector<16x384xf32>
    %181 = vector.extract_strided_slice %180 {offsets = [0, 0], sizes = [16, 128], strides = [1, 1]} : vector<16x384xf32> to vector<16x128xf32>
    %182 = vector.shape_cast %181 : vector<16x128xf32> to vector<2x8x128xf32>
    %183 = vector.extract_strided_slice %182 {offsets = [0, 0, 0], sizes = [2, 8, 32], strides = [1, 1, 1]} : vector<2x8x128xf32> to vector<2x8x32xf32>
    %184 = vector.extract_strided_slice %182 {offsets = [0, 0, 32], sizes = [2, 8, 32], strides = [1, 1, 1]} : vector<2x8x128xf32> to vector<2x8x32xf32>
    %185 = vector.extract_strided_slice %182 {offsets = [0, 0, 64], sizes = [2, 8, 32], strides = [1, 1, 1]} : vector<2x8x128xf32> to vector<2x8x32xf32>
    %186 = vector.extract_strided_slice %182 {offsets = [0, 0, 96], sizes = [2, 8, 32], strides = [1, 1, 1]} : vector<2x8x128xf32> to vector<2x8x32xf32>
    %187 = vector.shape_cast %183 : vector<2x8x32xf32> to vector<1x2x8x32xf32>
    %188 = vector.shape_cast %184 : vector<2x8x32xf32> to vector<1x2x8x32xf32>
    %189 = vector.shape_cast %185 : vector<2x8x32xf32> to vector<1x2x8x32xf32>
    %190 = vector.shape_cast %186 : vector<2x8x32xf32> to vector<1x2x8x32xf32>
    %191 = tpu.concatenate %187, %188, %189, %190 in 0 : vector<1x2x8x32xf32>, vector<1x2x8x32xf32>, vector<1x2x8x32xf32>, vector<1x2x8x32xf32> -> vector<4x2x8x32xf32>
    %192 = vector.shape_cast %191 : vector<4x2x8x32xf32> to vector<8x8x32xf32>
    %193 = arith.truncf %192 : vector<8x8x32xf32> to vector<8x8x32xbf16>
    %194 = vector.extract_strided_slice %180 {offsets = [0, 128], sizes = [16, 128], strides = [1, 1]} : vector<16x384xf32> to vector<16x128xf32>
    %195 = vector.shape_cast %194 : vector<16x128xf32> to vector<2x8x128xf32>
    %196 = vector.extract_strided_slice %195 {offsets = [0, 0, 0], sizes = [2, 8, 32], strides = [1, 1, 1]} : vector<2x8x128xf32> to vector<2x8x32xf32>
    %197 = vector.extract_strided_slice %195 {offsets = [0, 0, 32], sizes = [2, 8, 32], strides = [1, 1, 1]} : vector<2x8x128xf32> to vector<2x8x32xf32>
    %198 = vector.extract_strided_slice %195 {offsets = [0, 0, 64], sizes = [2, 8, 32], strides = [1, 1, 1]} : vector<2x8x128xf32> to vector<2x8x32xf32>
    %199 = vector.extract_strided_slice %195 {offsets = [0, 0, 96], sizes = [2, 8, 32], strides = [1, 1, 1]} : vector<2x8x128xf32> to vector<2x8x32xf32>
    %200 = vector.shape_cast %196 : vector<2x8x32xf32> to vector<1x2x8x32xf32>
    %201 = vector.shape_cast %197 : vector<2x8x32xf32> to vector<1x2x8x32xf32>
    %202 = vector.shape_cast %198 : vector<2x8x32xf32> to vector<1x2x8x32xf32>
    %203 = vector.shape_cast %199 : vector<2x8x32xf32> to vector<1x2x8x32xf32>
    %204 = tpu.concatenate %200, %201, %202, %203 in 0 : vector<1x2x8x32xf32>, vector<1x2x8x32xf32>, vector<1x2x8x32xf32>, vector<1x2x8x32xf32> -> vector<4x2x8x32xf32>
    %205 = vector.shape_cast %204 : vector<4x2x8x32xf32> to vector<8x8x32xf32>
    %206 = arith.truncf %205 : vector<8x8x32xf32> to vector<8x8x32xbf16>
    %207 = vector.extract_strided_slice %180 {offsets = [0, 256], sizes = [16, 128], strides = [1, 1]} : vector<16x384xf32> to vector<16x128xf32>
    %208 = vector.shape_cast %207 : vector<16x128xf32> to vector<2x8x128xf32>
    %209 = vector.extract_strided_slice %208 {offsets = [0, 0, 0], sizes = [2, 8, 32], strides = [1, 1, 1]} : vector<2x8x128xf32> to vector<2x8x32xf32>
    %210 = vector.extract_strided_slice %208 {offsets = [0, 0, 32], sizes = [2, 8, 32], strides = [1, 1, 1]} : vector<2x8x128xf32> to vector<2x8x32xf32>
    %211 = vector.extract_strided_slice %208 {offsets = [0, 0, 64], sizes = [2, 8, 32], strides = [1, 1, 1]} : vector<2x8x128xf32> to vector<2x8x32xf32>
    %212 = vector.extract_strided_slice %208 {offsets = [0, 0, 96], sizes = [2, 8, 32], strides = [1, 1, 1]} : vector<2x8x128xf32> to vector<2x8x32xf32>
    %213 = vector.shape_cast %209 : vector<2x8x32xf32> to vector<1x2x8x32xf32>
    %214 = vector.shape_cast %210 : vector<2x8x32xf32> to vector<1x2x8x32xf32>
    %215 = vector.shape_cast %211 : vector<2x8x32xf32> to vector<1x2x8x32xf32>
    %216 = vector.shape_cast %212 : vector<2x8x32xf32> to vector<1x2x8x32xf32>
    %217 = tpu.concatenate %213, %214, %215, %216 in 0 : vector<1x2x8x32xf32>, vector<1x2x8x32xf32>, vector<1x2x8x32xf32>, vector<1x2x8x32xf32> -> vector<4x2x8x32xf32>
    %218 = vector.shape_cast %217 : vector<4x2x8x32xf32> to vector<8x8x32xf32>
    %219 = arith.truncf %218 : vector<8x8x32xf32> to vector<8x8x32xbf16>
    "tpu.trace_start"() <{level = 10 : i32, message = "xqd,xkd->xqk"}> : () -> ()
    %cst_46 = arith.constant dense<0.000000e+00> : vector<8x8x8xf32>
    %220 = tpu.matmul %193, %206, %cst_46 {dimension_numbers = #tpu.dot_dimension_numbers<[2], [2], [1], [1], [0, 0, 0, 1, 1, 1], [0], [0]>} : vector<8x8x32xbf16>, vector<8x8x32xbf16>, vector<8x8x8xf32> -> vector<8x8x8xf32>
    "tpu.trace_stop"() : () -> ()
    %cst_47 = arith.constant dense<0xFF800000> : vector<8x8xf32>
    %221 = vector.multi_reduction <maximumf>, %220, %cst_47 [2] : vector<8x8x8xf32> to vector<8x8xf32>
    %222 = vector.shape_cast %221 : vector<8x8xf32> to vector<8x8x1xf32>
    %223 = vector.broadcast %222 : vector<8x8x1xf32> to vector<8x8x8xf32>
    %224 = arith.subf %220, %223 : vector<8x8x8xf32>
    %225 = math.exp %224 : vector<8x8x8xf32>
    %cst_48 = arith.constant dense<0.000000e+00> : vector<8x8xf32>
    %226 = vector.multi_reduction <add>, %225, %cst_48 [2] : vector<8x8x8xf32> to vector<8x8xf32>
    %227 = vector.shape_cast %226 : vector<8x8xf32> to vector<8x8x1xf32>
    %228 = tpu.reciprocal %227 {approx = true} : vector<8x8x1xf32> -> vector<8x8x1xf32>
    %229 = vector.broadcast %228 : vector<8x8x1xf32> to vector<8x8x8xf32>
    %230 = arith.mulf %225, %229 : vector<8x8x8xf32>
    %231 = arith.truncf %230 : vector<8x8x8xf32> to vector<8x8x8xbf16>
    "tpu.trace_start"() <{level = 10 : i32, message = "xqk,xkd->xqd"}> : () -> ()
    %cst_49 = arith.constant dense<0.000000e+00> : vector<8x8x32xf32>
    %232 = tpu.matmul %231, %219, %cst_49 {dimension_numbers = #tpu.dot_dimension_numbers<[2], [1], [1], [2], [0, 0, 0, 1, 1, 2], [0], [0]>} : vector<8x8x8xbf16>, vector<8x8x32xbf16>, vector<8x8x32xf32> -> vector<8x8x32xf32>
    "tpu.trace_stop"() : () -> ()
    %233 = vector.shape_cast %232 : vector<8x8x32xf32> to vector<4x2x8x32xf32>
    %234 = vector.extract_strided_slice %233 {offsets = [0, 0, 0, 0], sizes = [1, 2, 8, 32], strides = [1, 1, 1, 1]} : vector<4x2x8x32xf32> to vector<1x2x8x32xf32>
    %235 = vector.shape_cast %234 : vector<1x2x8x32xf32> to vector<2x8x32xf32>
    %236 = vector.extract_strided_slice %233 {offsets = [1, 0, 0, 0], sizes = [1, 2, 8, 32], strides = [1, 1, 1, 1]} : vector<4x2x8x32xf32> to vector<1x2x8x32xf32>
    %237 = vector.shape_cast %236 : vector<1x2x8x32xf32> to vector<2x8x32xf32>
    %238 = vector.extract_strided_slice %233 {offsets = [2, 0, 0, 0], sizes = [1, 2, 8, 32], strides = [1, 1, 1, 1]} : vector<4x2x8x32xf32> to vector<1x2x8x32xf32>
    %239 = vector.shape_cast %238 : vector<1x2x8x32xf32> to vector<2x8x32xf32>
    %240 = vector.extract_strided_slice %233 {offsets = [3, 0, 0, 0], sizes = [1, 2, 8, 32], strides = [1, 1, 1, 1]} : vector<4x2x8x32xf32> to vector<1x2x8x32xf32>
    %241 = vector.shape_cast %240 : vector<1x2x8x32xf32> to vector<2x8x32xf32>
    %242 = tpu.concatenate %235, %237, %239, %241 in 2 : vector<2x8x32xf32>, vector<2x8x32xf32>, vector<2x8x32xf32>, vector<2x8x32xf32> -> vector<2x8x128xf32>
    %243 = vector.shape_cast %242 : vector<2x8x128xf32> to vector<16x128xf32>
    %c768 = arith.constant 768 : index
    %c0_50 = arith.constant 0 : index
    %244 = vector.load %arg1[%c768, %c0_50] : memref<1536x384xbf16, #tpu.memory_space<vmem>>, vector<128x128xbf16>
    %245 = arith.truncf %243 : vector<16x128xf32> to vector<16x128xbf16>
    %cst_51 = arith.constant dense<0.000000e+00> : vector<16x128xf32>
    %246 = tpu.matmul %245, %244, %cst_51 {dimension_numbers = #tpu.dot_dimension_numbers<[1], [0], [0], [1], [0, 0, 1, 1], [], []>} : vector<16x128xbf16>, vector<128x128xbf16>, vector<16x128xf32> -> vector<16x128xf32>
    %c11 = arith.constant 11 : index
    %c0_52 = arith.constant 0 : index
    %247 = vector.load %arg2[%c11, %c0_52] : memref<24x384xf32, #tpu.memory_space<vmem>>, vector<1x128xf32>
    %248 = vector.broadcast %247 : vector<1x128xf32> to vector<16x128xf32>
    %249 = arith.addf %246, %248 : vector<16x128xf32>
    %250 = arith.addf %174, %249 : vector<16x128xf32>
    %c12 = arith.constant 12 : index
    %c0_53 = arith.constant 0 : index
    %251 = vector.load %arg2[%c12, %c0_53] : memref<24x384xf32, #tpu.memory_space<vmem>>, vector<1x128xf32>
    %c13 = arith.constant 13 : index
    %c0_54 = arith.constant 0 : index
    %252 = vector.load %arg2[%c13, %c0_54] : memref<24x384xf32, #tpu.memory_space<vmem>>, vector<1x128xf32>
    %cst_55 = arith.constant dense<0.000000e+00> : vector<16xf32>
    %253 = vector.multi_reduction <add>, %250, %cst_55 [1] : vector<16x128xf32> to vector<16xf32>
    %254 = vector.shape_cast %253 : vector<16xf32> to vector<16x1xf32>
    %cst_56 = arith.constant 1.280000e+02 : f32
    %255 = vector.broadcast %cst_56 : f32 to vector<16x1xf32>
    %256 = arith.divf %254, %255 : vector<16x1xf32>
    %257 = arith.mulf %250, %250 : vector<16x128xf32>
    %cst_57 = arith.constant dense<0.000000e+00> : vector<16xf32>
    %258 = vector.multi_reduction <add>, %257, %cst_57 [1] : vector<16x128xf32> to vector<16xf32>
    %259 = vector.shape_cast %258 : vector<16xf32> to vector<16x1xf32>
    %cst_58 = arith.constant 1.280000e+02 : f32
    %260 = vector.broadcast %cst_58 : f32 to vector<16x1xf32>
    %261 = arith.divf %259, %260 : vector<16x1xf32>
    %262 = arith.mulf %256, %256 : vector<16x1xf32>
    %263 = arith.subf %261, %262 : vector<16x1xf32>
    %264 = vector.broadcast %256 : vector<16x1xf32> to vector<16x128xf32>
    %265 = arith.subf %250, %264 : vector<16x128xf32>
    %cst_59 = arith.constant 9.99999996E-13 : f32
    %266 = vector.broadcast %cst_59 : f32 to vector<16x1xf32>
    %267 = arith.addf %263, %266 : vector<16x1xf32>
    %268 = math.rsqrt %267 : vector<16x1xf32>
    %269 = vector.broadcast %268 : vector<16x1xf32> to vector<16x128xf32>
    %270 = arith.mulf %265, %269 : vector<16x128xf32>
    %271 = vector.broadcast %251 : vector<1x128xf32> to vector<16x128xf32>
    %272 = arith.mulf %270, %271 : vector<16x128xf32>
    %273 = vector.broadcast %252 : vector<1x128xf32> to vector<16x128xf32>
    %274 = arith.addf %272, %273 : vector<16x128xf32>
    %c896 = arith.constant 896 : index
    %c0_60 = arith.constant 0 : index
    %275 = vector.load %arg1[%c896, %c0_60] : memref<1536x384xbf16, #tpu.memory_space<vmem>>, vector<128x256xbf16>
    %276 = arith.truncf %274 : vector<16x128xf32> to vector<16x128xbf16>
    %cst_61 = arith.constant dense<0.000000e+00> : vector<16x256xf32>
    %277 = tpu.matmul %276, %275, %cst_61 {dimension_numbers = #tpu.dot_dimension_numbers<[1], [0], [0], [1], [0, 0, 1, 1], [], []>} : vector<16x128xbf16>, vector<128x256xbf16>, vector<16x256xf32> -> vector<16x256xf32>
    %c14 = arith.constant 14 : index
    %c0_62 = arith.constant 0 : index
    %278 = vector.load %arg2[%c14, %c0_62] : memref<24x384xf32, #tpu.memory_space<vmem>>, vector<1x256xf32>
    %279 = vector.broadcast %278 : vector<1x256xf32> to vector<16x256xf32>
    %280 = arith.addf %277, %279 : vector<16x256xf32>
    %281 = arith.mulf %280, %280 : vector<16x256xf32>
    %282 = arith.mulf %280, %281 : vector<16x256xf32>
    %cst_63 = arith.constant 4.471500e-02 : f32
    %283 = vector.broadcast %cst_63 : f32 to vector<16x256xf32>
    %284 = arith.mulf %283, %282 : vector<16x256xf32>
    %285 = arith.addf %280, %284 : vector<16x256xf32>
    %cst_64 = arith.constant 0.797884583 : f32
    %286 = vector.broadcast %cst_64 : f32 to vector<16x256xf32>
    %287 = arith.mulf %286, %285 : vector<16x256xf32>
    %288 = math.tanh %287 : vector<16x256xf32>
    %cst_65 = arith.constant 1.000000e+00 : f32
    %289 = vector.broadcast %cst_65 : f32 to vector<16x256xf32>
    %290 = arith.addf %289, %288 : vector<16x256xf32>
    %cst_66 = arith.constant 5.000000e-01 : f32
    %291 = vector.broadcast %cst_66 : f32 to vector<16x256xf32>
    %292 = arith.mulf %291, %290 : vector<16x256xf32>
    %293 = arith.mulf %280, %292 : vector<16x256xf32>
    %c1024 = arith.constant 1024 : index
    %c0_67 = arith.constant 0 : index
    %294 = vector.load %arg1[%c1024, %c0_67] : memref<1536x384xbf16, #tpu.memory_space<vmem>>, vector<256x128xbf16>
    %295 = arith.truncf %293 : vector<16x256xf32> to vector<16x256xbf16>
    %cst_68 = arith.constant dense<0.000000e+00> : vector<16x128xf32>
    %296 = tpu.matmul %295, %294, %cst_68 {dimension_numbers = #tpu.dot_dimension_numbers<[1], [0], [0], [1], [0, 0, 1, 1], [], []>} : vector<16x256xbf16>, vector<256x128xbf16>, vector<16x128xf32> -> vector<16x128xf32>
    %c15 = arith.constant 15 : index
    %c0_69 = arith.constant 0 : index
    %297 = vector.load %arg2[%c15, %c0_69] : memref<24x384xf32, #tpu.memory_space<vmem>>, vector<1x128xf32>
    %298 = vector.broadcast %297 : vector<1x128xf32> to vector<16x128xf32>
    %299 = arith.addf %296, %298 : vector<16x128xf32>
    %300 = arith.addf %274, %299 : vector<16x128xf32>
    %c16 = arith.constant 16 : index
    %c0_70 = arith.constant 0 : index
    %301 = vector.load %arg2[%c16, %c0_70] : memref<24x384xf32, #tpu.memory_space<vmem>>, vector<1x128xf32>
    %c17 = arith.constant 17 : index
    %c0_71 = arith.constant 0 : index
    %302 = vector.load %arg2[%c17, %c0_71] : memref<24x384xf32, #tpu.memory_space<vmem>>, vector<1x128xf32>
    %cst_72 = arith.constant dense<0.000000e+00> : vector<16xf32>
    %303 = vector.multi_reduction <add>, %300, %cst_72 [1] : vector<16x128xf32> to vector<16xf32>
    %304 = vector.shape_cast %303 : vector<16xf32> to vector<16x1xf32>
    %cst_73 = arith.constant 1.280000e+02 : f32
    %305 = vector.broadcast %cst_73 : f32 to vector<16x1xf32>
    %306 = arith.divf %304, %305 : vector<16x1xf32>
    %307 = arith.mulf %300, %300 : vector<16x128xf32>
    %cst_74 = arith.constant dense<0.000000e+00> : vector<16xf32>
    %308 = vector.multi_reduction <add>, %307, %cst_74 [1] : vector<16x128xf32> to vector<16xf32>
    %309 = vector.shape_cast %308 : vector<16xf32> to vector<16x1xf32>
    %cst_75 = arith.constant 1.280000e+02 : f32
    %310 = vector.broadcast %cst_75 : f32 to vector<16x1xf32>
    %311 = arith.divf %309, %310 : vector<16x1xf32>
    %312 = arith.mulf %306, %306 : vector<16x1xf32>
    %313 = arith.subf %311, %312 : vector<16x1xf32>
    %314 = vector.broadcast %306 : vector<16x1xf32> to vector<16x128xf32>
    %315 = arith.subf %300, %314 : vector<16x128xf32>
    %cst_76 = arith.constant 9.99999996E-13 : f32
    %316 = vector.broadcast %cst_76 : f32 to vector<16x1xf32>
    %317 = arith.addf %313, %316 : vector<16x1xf32>
    %318 = math.rsqrt %317 : vector<16x1xf32>
    %319 = vector.broadcast %318 : vector<16x1xf32> to vector<16x128xf32>
    %320 = arith.mulf %315, %319 : vector<16x128xf32>
    %321 = vector.broadcast %301 : vector<1x128xf32> to vector<16x128xf32>
    %322 = arith.mulf %320, %321 : vector<16x128xf32>
    %323 = vector.broadcast %302 : vector<1x128xf32> to vector<16x128xf32>
    %324 = arith.addf %322, %323 : vector<16x128xf32>
    %325 = vector.shape_cast %324 : vector<16x128xf32> to vector<2x8x128xf32>
    %326 = vector.extract_strided_slice %325 {offsets = [0, 0, 0], sizes = [2, 1, 128], strides = [1, 1, 1]} : vector<2x8x128xf32> to vector<2x1x128xf32>
    %327 = vector.shape_cast %326 : vector<2x1x128xf32> to vector<2x128xf32>
    %c1280 = arith.constant 1280 : index
    %c0_77 = arith.constant 0 : index
    %328 = vector.load %arg1[%c1280, %c0_77] : memref<1536x384xbf16, #tpu.memory_space<vmem>>, vector<128x128xbf16>
    %329 = arith.truncf %327 : vector<2x128xf32> to vector<2x128xbf16>
    %cst_78 = arith.constant dense<0.000000e+00> : vector<2x128xf32>
    %330 = tpu.matmul %329, %328, %cst_78 {dimension_numbers = #tpu.dot_dimension_numbers<[1], [0], [0], [1], [0, 0, 1, 1], [], []>} : vector<2x128xbf16>, vector<128x128xbf16>, vector<2x128xf32> -> vector<2x128xf32>
    %c18 = arith.constant 18 : index
    %c0_79 = arith.constant 0 : index
    %331 = vector.load %arg2[%c18, %c0_79] : memref<24x384xf32, #tpu.memory_space<vmem>>, vector<1x128xf32>
    %332 = vector.broadcast %331 : vector<1x128xf32> to vector<2x128xf32>
    %333 = arith.addf %330, %332 : vector<2x128xf32>
    %334 = math.tanh %333 : vector<2x128xf32>
    %c1408 = arith.constant 1408 : index
    %c0_80 = arith.constant 0 : index
    %335 = vector.load %arg1[%c1408, %c0_80] : memref<1536x384xbf16, #tpu.memory_space<vmem>>, vector<128x128xbf16>
    %336 = arith.truncf %334 : vector<2x128xf32> to vector<2x128xbf16>
    %cst_81 = arith.constant dense<0.000000e+00> : vector<2x128xf32>
    %337 = tpu.matmul %336, %335, %cst_81 {dimension_numbers = #tpu.dot_dimension_numbers<[1], [0], [0], [1], [0, 0, 1, 1], [], []>} : vector<2x128xbf16>, vector<128x128xbf16>, vector<2x128xf32> -> vector<2x128xf32>
    %c19 = arith.constant 19 : index
    %c0_82 = arith.constant 0 : index
    %338 = vector.load %arg2[%c19, %c0_82] : memref<24x384xf32, #tpu.memory_space<vmem>>, vector<1x128xf32>
    %339 = vector.broadcast %338 : vector<1x128xf32> to vector<2x128xf32>
    %340 = arith.addf %337, %339 : vector<2x128xf32>
    %c0_83 = arith.constant 0 : index
    %c0_84 = arith.constant 0 : index
    %341 = vector.load %arg3[%c0_83, %c0_84] : memref<2x128xf32, #tpu.memory_space<vmem>>, vector<2x128xf32>
    tpu.vector_store %arg3[%c0_83, %c0_84], %340 {strides = array<i32>} : memref<2x128xf32, #tpu.memory_space<vmem>>, vector<2x128xf32>,
    return
  }
}

</mosaic_0001>

<llo_original>
// kernel: bert_utt_encoder.1
$region0: #{bert_utt_encoder.1}
  #allocation0 [shape = 'u32[]', space=smem, size = 0x4, offset = 0x4, fixed_abs, tag = 'smem constant byte address 0x4 - core index']
  #allocation1 [shape = 'u32[144,128]{1,0:T(1,128)}', space=vmem, size = 0x12000, scoped, tag = 'internal scratch']
  %s0 = inlined_call_operand.vmem [shape: f32[16,128], index: 0, kind: input, shape index: {}]
  %s1 = inlined_call_operand.hbm [shape: bf16[1536,384], index: 1, kind: input, shape index: {}]
  %s2 = inlined_call_operand.hbm [shape: f32[24,384], index: 2, kind: input, shape index: {}]
  %s3 = inlined_call_operand.hbm [shape: f32[2,128], index: 3, kind: output, shape index: {}]
  %s4 = sld [smem:[#allocation0]]
  $region30: #{bert_utt_encoder.1} parent=0
    _
  %s6 = ssub.s32 1, %s4
  %s7 = scalar_select 0, %s6, %s4
  $region1: #{bert_utt_encoder.1} parent=0
    #allocation2 [shape = 'u8[1179648]{0}', space=vmem, size = 0x120000, scoped, tag = 'input window, operand 1, single buffered']
    #allocation3 [shape = 's32[1]{0}', space=sflag, size = 0x4, scoped, tag = 'scoped memory for bert_utt_encoder.1']
    #allocation4 [shape = 's32[1]{0}', space=sflag, size = 0x4, scoped, tag = 'scoped memory for bert_utt_encoder.1']
    #allocation5 [shape = 'u8[36864]{0}', space=vmem, size = 0x9000, scoped, tag = 'input window, operand 2, single buffered']
    #allocation6 [shape = 's32[1]{0}', space=sflag, size = 0x4, scoped, tag = 'scoped memory for bert_utt_encoder.1']
    #allocation7 [shape = 'u8[1024]{0}', space=vmem, size = 0x400, scoped, tag = 'output window, operand 0, single buffered']
    %8 = vsyncpa [#allocation3], 0
    %9 = vsyncpa [#allocation6], 0
    %10 = vsyncpa [#allocation4], 0
    // Predicated region
    $region2: #{bert_utt_encoder.1} parent=1 // pred_check
      _
    $region3: #{bert_utt_encoder.1} parent=1 // pred_check_branch
      %12 = sbr.rel (0) target = $region5
    $region4: #{bert_utt_encoder.1} parent=1 // pred_region
      _
    $region5: #{bert_utt_encoder.1} parent=1 // pred_fallthru
      _
    // Predicated region
    $region6: #{bert_utt_encoder.1} parent=1 // pred_check
      _
    $region7: #{bert_utt_encoder.1} parent=1 // pred_check_branch
      %14 = sbr.rel (0) target = $region9
    $region8: #{bert_utt_encoder.1} parent=1 // pred_region
      %s16 = ssub.s32 36864, 36864
      %17 = vsyncadd [#allocation3], %s16
      %s18 = sshll.u32 [#allocation2], 4
      %s19 = int_to_ptr.vmem [resolvable:$true] %s18
      %24 = dma.hbm_to_vmem [thread:$0]  %s1, 36864, %s19, [#allocation3], 192, 192, 12
    $region9: #{bert_utt_encoder.1} parent=1 // pred_fallthru
      _
    // Predicated region
    $region10: #{bert_utt_encoder.1} parent=1 // pred_check
      _
    $region11: #{bert_utt_encoder.1} parent=1 // pred_check_branch
      %26 = sbr.rel (0) target = $region13
    $region12: #{bert_utt_encoder.1} parent=1 // pred_region
      %s28 = ssub.s32 1152, 1152
      %29 = vsyncadd [#allocation6], %s28
      %s30 = sshll.u32 [#allocation5], 4
      %s31 = int_to_ptr.vmem [resolvable:$true] %s30
      %36 = dma.hbm_to_vmem [thread:$0]  %s2, 1152, %s31, [#allocation6], 384, 384, 24
    $region13: #{bert_utt_encoder.1} parent=1 // pred_fallthru
      _
    // Predicated region
    $region14: #{bert_utt_encoder.1} parent=1 // pred_check
      _
    $region15: #{bert_utt_encoder.1} parent=1 // pred_check_branch
      %38 = sbr.rel (0) target = $region17
    $region16: #{bert_utt_encoder.1} parent=1 // pred_region
      %39 = dma.done [#allocation3], 36864
    $region17: #{bert_utt_encoder.1} parent=1 // pred_fallthru
      _
    // Predicated region
    $region18: #{bert_utt_encoder.1} parent=1 // pred_check
      _
    $region19: #{bert_utt_encoder.1} parent=1 // pred_check_branch
      %41 = sbr.rel (0) target = $region21
    $region20: #{bert_utt_encoder.1} parent=1 // pred_region
      %42 = dma.done [#allocation6], 1152
    $region21: #{bert_utt_encoder.1} parent=1 // pred_fallthru
      _
    %v44 = vld [vmem:[%s0] sm:$0xff]
    %v45 = vld [vmem:[%s0 + $0x8] sm:$0xff]
    %v46 = vld [vmem:[#allocation5] ss:$0 sm:$0xff]
    %v47 = vld [vmem:[#allocation5 + $0x1] ss:$0 sm:$0xff]
    %48 = vadd.xlane.f32.xlu0 %v44
    %v49 = vpop.xlane.xlu0 %48
    %50 = vadd.xlane.f32.xlu0 %v45
    %v51 = vpop.xlane.xlu0 %50
    %v52 = vrcp.pop 128.0
    %v53 = vmul.f32 %v49, %v52
    %v54 = vmul.f32 %v51, %v52
    %v55 = vmul.f32 %v44, %v44
    %v56 = vmul.f32 %v45, %v45
    %57 = vadd.xlane.f32.xlu0 %v55
    %v58 = vpop.xlane.xlu0 %57
    %59 = vadd.xlane.f32.xlu0 %v56
    %v60 = vpop.xlane.xlu0 %59
    %v61 = vmul.f32 %v58, %v52
    %v62 = vmul.f32 %v60, %v52
    %v63 = vmul.f32 %v53, %v53
    %v64 = vmul.f32 %v54, %v54
    %v65 = vsub.f32 %v61, %v63
    %v66 = vsub.f32 %v62, %v64
    %v67 = vsub.f32 %v44, %v53
    %v68 = vsub.f32 %v45, %v54
    %v69 = vadd.f32 %v65, 1e-12
    %v70 = vadd.f32 %v66, 1e-12
    %v71 = vrsqrt.pop %v69
    %v72 = vrsqrt.pop %v70
    %v73 = vmul.f32 %v67, %v71
    %v74 = vmul.f32 %v68, %v72
    %v75 = vmul.f32 %v73, %v46
    %v76 = vmul.f32 %v74, %v46
    %v77 = vadd.f32 %v75, %v47
    %v78 = vadd.f32 %v76, %v47
    %v79 = vld [vmem:[#allocation2] sm:$0xff]
    %v80 = vld [vmem:[#allocation2 + $0x8] sm:$0xf]
    %v81 = vld [vmem:[#allocation2 + $0xc] sm:$0xff]
    %v82 = vld [vmem:[#allocation2 + $0x14] sm:$0xf]
    %v83 = vld [vmem:[#allocation2 + $0x18] sm:$0xff]
    %v84 = vld [vmem:[#allocation2 + $0x20] sm:$0xf]
    %v85 = vld [vmem:[#allocation2 + $0x24] sm:$0xff]
    %v86 = vld [vmem:[#allocation2 + $0x2c] sm:$0xf]
    %v87 = vld [vmem:[#allocation2 + $0x30] sm:$0xff]
    %v88 = vld [vmem:[#allocation2 + $0x38] sm:$0xf]
    %v89 = vld [vmem:[#allocation2 + $0x3c] sm:$0xff]
    %v90 = vld [vmem:[#allocation2 + $0x44] sm:$0xf]
    %v91 = vld [vmem:[#allocation2 + $0x48] sm:$0xff]
    %v92 = vld [vmem:[#allocation2 + $0x50] sm:$0xf]
    %v93 = vld [vmem:[#allocation2 + $0x54] sm:$0xff]
    %v94 = vld [vmem:[#allocation2 + $0x5c] sm:$0xf]
    %v95 = vld [vmem:[#allocation2 + $0x60] sm:$0xff]
    %v96 = vld [vmem:[#allocation2 + $0x68] sm:$0xf]
    %v97 = vld [vmem:[#allocation2 + $0x6c] sm:$0xff]
    %v98 = vld [vmem:[#allocation2 + $0x74] sm:$0xf]
    %v99 = vld [vmem:[#allocation2 + $0x78] sm:$0xff]
    %v100 = vld [vmem:[#allocation2 + $0x80] sm:$0xf]
    %v101 = vld [vmem:[#allocation2 + $0x84] sm:$0xff]
    %v102 = vld [vmem:[#allocation2 + $0x8c] sm:$0xf]
    %v103 = vld [vmem:[#allocation2 + $0x90] sm:$0xff]
    %v104 = vld [vmem:[#allocation2 + $0x98] sm:$0xf]
    %v105 = vld [vmem:[#allocation2 + $0x9c] sm:$0xff]
    %v106 = vld [vmem:[#allocation2 + $0xa4] sm:$0xf]
    %v107 = vld [vmem:[#allocation2 + $0xa8] sm:$0xff]
    %v108 = vld [vmem:[#allocation2 + $0xb0] sm:$0xf]
    %v109 = vld [vmem:[#allocation2 + $0xb4] sm:$0xff]
    %v110 = vld [vmem:[#allocation2 + $0xbc] sm:$0xf]
    %v111 = vpack.c.bf16 %v78, %v77
    %s112 = scalar_lea.vmem [#allocation5], 2
    %v113 = vld [vmem:[%s112] ss:$8 sm:$0x7]
    %v115 = vlaneseq
    %v116 = vshrl.u32 %v115, 7
    %v117 = vsub.s32 0, %v116
    %v118 = vrot.slane %v113, %v117
    %v119 = vlaneseq
    %v120 = vshrl.u32 %v119, 7
    %v121 = vsub.s32 1, %v120
    %v122 = vrot.slane %v113, %v121
    %v123 = vlaneseq
    %v124 = vshrl.u32 %v123, 7
    %v125 = vsub.s32 2, %v124
    %v126 = vrot.slane %v113, %v125
    %v162 = vunpack.c.l.b16 %v79
    %v163 = vunpack.c.h.b16 %v79
    %v164 = vunpack.c.l.b16 %v80
    %v165 = vunpack.c.l.b16 %v81
    %v166 = vunpack.c.h.b16 %v81
    %v167 = vunpack.c.l.b16 %v82
    %v168 = vunpack.c.l.b16 %v83
    %v169 = vunpack.c.h.b16 %v83
    %v170 = vunpack.c.l.b16 %v84
    %v171 = vunpack.c.l.b16 %v85
    %v172 = vunpack.c.h.b16 %v85
    %v173 = vunpack.c.l.b16 %v86
    %v174 = vunpack.c.l.b16 %v87
    %v175 = vunpack.c.h.b16 %v87
    %v176 = vunpack.c.l.b16 %v88
    %v177 = vunpack.c.l.b16 %v89
    %v178 = vunpack.c.h.b16 %v89
    %v179 = vunpack.c.l.b16 %v90
    %v180 = vunpack.c.l.b16 %v91
    %v181 = vunpack.c.h.b16 %v91
    %v182 = vunpack.c.l.b16 %v92
    %v183 = vunpack.c.l.b16 %v93
    %v184 = vunpack.c.h.b16 %v93
    %v185 = vunpack.c.l.b16 %v94
    %v186 = vunpack.c.l.b16 %v95
    %v187 = vunpack.c.h.b16 %v95
    %v188 = vunpack.c.l.b16 %v96
    %v189 = vunpack.c.l.b16 %v97
    %v190 = vunpack.c.h.b16 %v97
    %v191 = vunpack.c.l.b16 %v98
    %v192 = vunpack.c.l.b16 %v99
    %v193 = vunpack.c.h.b16 %v99
    %v194 = vunpack.c.l.b16 %v100
    %v195 = vunpack.c.l.b16 %v101
    %v196 = vunpack.c.h.b16 %v101
    %v197 = vunpack.c.l.b16 %v102
    %v198 = vunpack.c.l.b16 %v103
    %v199 = vunpack.c.h.b16 %v103
    %v200 = vunpack.c.l.b16 %v104
    %v201 = vunpack.c.l.b16 %v105
    %v202 = vunpack.c.h.b16 %v105
    %v203 = vunpack.c.l.b16 %v106
    %v204 = vunpack.c.l.b16 %v107
    %v205 = vunpack.c.h.b16 %v107
    %v206 = vunpack.c.l.b16 %v108
    %v207 = vunpack.c.l.b16 %v109
    %v208 = vunpack.c.h.b16 %v109
    %v209 = vunpack.c.l.b16 %v110
    %v210 = vpack.c.b16 %v165, %v162
    %v211 = vpack.c.b16 %v166, %v163
    %v212 = vpack.c.b16 %v167, %v164
    %v213 = vpack.c.b16 %v171, %v168
    %v214 = vpack.c.b16 %v172, %v169
    %v215 = vpack.c.b16 %v173, %v170
    %v216 = vpack.c.b16 %v177, %v174
    %v217 = vpack.c.b16 %v178, %v175
    %v218 = vpack.c.b16 %v179, %v176
    %v219 = vpack.c.b16 %v183, %v180
    %v220 = vpack.c.b16 %v184, %v181
    %v221 = vpack.c.b16 %v185, %v182
    %v222 = vpack.c.b16 %v189, %v186
    %v223 = vpack.c.b16 %v190, %v187
    %v224 = vpack.c.b16 %v191, %v188
    %v225 = vpack.c.b16 %v195, %v192
    %v226 = vpack.c.b16 %v196, %v193
    %v227 = vpack.c.b16 %v197, %v194
    %v228 = vpack.c.b16 %v201, %v198
    %v229 = vpack.c.b16 %v202, %v199
    %v230 = vpack.c.b16 %v203, %v200
    %v231 = vpack.c.b16 %v207, %v204
    %v232 = vpack.c.b16 %v208, %v205
    %v233 = vpack.c.b16 %v209, %v206
    %258 = vmatprep.subr.bf16.mxu0 %v211
    %259 = vmatpush1.bf16.msra.mxu0 %v210
    %260 = vmatprep.subr.bf16.mxu0 %v214
    %261 = vmatpush1.bf16.msra.mxu0 %v213
    %262 = vmatprep.subr.bf16.mxu0 %v217
    %263 = vmatpush1.bf16.msra.mxu0 %v216
    %264 = vmatprep.subr.bf16.mxu0 %v220
    %265 = vmatpush1.bf16.msra.mxu0 %v219
    %266 = vmatprep.subr.bf16.mxu0 %v223
    %267 = vmatpush1.bf16.msra.mxu0 %v222
    %268 = vmatprep.subr.bf16.mxu0 %v226
    %269 = vmatpush1.bf16.msra.mxu0 %v225
    %270 = vmatprep.subr.bf16.mxu0 %v229
    %271 = vmatpush1.bf16.msra.mxu0 %v228
    %272 = vmatprep.subr.bf16.mxu0 %v232
    %273 = vmatpush1.bf16.msra.mxu0 %v231
    %274 = vmatprep.subr.bf16.mxu0 0
    %275 = vmatpush1.bf16.msra.mxu0 0
    %276 = vmatprep.subr.bf16.mxu0 0
    %277 = vmatpush1.bf16.msra.mxu0 0
    %278 = vmatprep.subr.bf16.mxu0 0
    %279 = vmatpush1.bf16.msra.mxu0 0
    %280 = vmatprep.subr.bf16.mxu0 0
    %281 = vmatpush1.bf16.msra.mxu0 0
    %282 = vmatprep.subr.bf16.mxu0 0
    %283 = vmatpush1.bf16.msra.mxu0 0
    %284 = vmatprep.subr.bf16.mxu0 0
    %285 = vmatpush1.bf16.msra.mxu0 0
    %286 = vmatprep.subr.bf16.mxu0 0
    %287 = vmatpush1.bf16.msra.mxu0 0
    %288 = vmatprep.subr.bf16.mxu0 0
    %289 = vmatpush1.bf16.msra.mxu0 0
    %290 = vmatprep.mubr.bf16.mxu0 0
    %291 = vmatmul.mubr.bf16.gmra.mrb[0].mxu0 %v111
    %v292 = vpop.f32.mrb[0].mxu0
    %v293 = vadd.f32 %v118, %v292
    %v294 = vpop.f32.mrb[0].mxu0
    %v295 = vadd.f32 %v122, %v294
    %v296 = vpop.f32.mrb[0].mxu0
    %v297 = vadd.f32 %v118, %v296
    %v298 = vpop.f32.mrb[0].mxu0
    %v299 = vadd.f32 %v122, %v298
    %300 = vdwg.mxu0
    %301 = vmatprep.subr.bf16.mxu0 0
    %302 = vmatpush1.bf16.msra.mxu0 %v212
    %303 = vmatprep.subr.bf16.mxu0 0
    %304 = vmatpush1.bf16.msra.mxu0 %v215
    %305 = vmatprep.subr.bf16.mxu0 0
    %306 = vmatpush1.bf16.msra.mxu0 %v218
    %307 = vmatprep.subr.bf16.mxu0 0
    %308 = vmatpush1.bf16.msra.mxu0 %v221
    %309 = vmatprep.subr.bf16.mxu0 0
    %310 = vmatpush1.bf16.msra.mxu0 %v224
    %311 = vmatprep.subr.bf16.mxu0 0
    %312 = vmatpush1.bf16.msra.mxu0 %v227
    %313 = vmatprep.subr.bf16.mxu0 0
    %314 = vmatpush1.bf16.msra.mxu0 %v230
    %315 = vmatprep.subr.bf16.mxu0 0
    %316 = vmatpush1.bf16.msra.mxu0 %v233
    %317 = vmatprep.subr.bf16.mxu0 0
    %318 = vmatpush1.bf16.msra.mxu0 0
    %319 = vmatprep.subr.bf16.mxu0 0
    %320 = vmatpush1.bf16.msra.mxu0 0
    %321 = vmatprep.subr.bf16.mxu0 0
    %322 = vmatpush1.bf16.msra.mxu0 0
    %323 = vmatprep.subr.bf16.mxu0 0
    %324 = vmatpush1.bf16.msra.mxu0 0
    %325 = vmatprep.subr.bf16.mxu0 0
    %326 = vmatpush1.bf16.msra.mxu0 0
    %327 = vmatprep.subr.bf16.mxu0 0
    %328 = vmatpush1.bf16.msra.mxu0 0
    %329 = vmatprep.subr.bf16.mxu0 0
    %330 = vmatpush1.bf16.msra.mxu0 0
    %331 = vmatprep.subr.bf16.mxu0 0
    %332 = vmatpush1.bf16.msra.mxu0 0
    %333 = vmatprep.mubr.bf16.mxu0 0
    %334 = vmatmul.mubr.bf16.gmra.mrb[0].mxu0 %v111
    %v335 = vpop.f32.mrb[0].mxu0
    %v336 = vadd.f32 %v126, %v335
    %v337 = vpop.f32.mrb[0].mxu0
    %v338 = vpop.f32.mrb[0].mxu0
    %v339 = vadd.f32 %v126, %v338
    %v340 = vpop.f32.mrb[0].mxu0
    %341 = vdwg.mxu0
    %344 = vrot.lane.b32.xlu0 %v293, 96
    %v345 = vpop.permute.xlu0 %344
    %346 = vrot.lane.b32.xlu0 %v297, 96
    %v347 = vpop.permute.xlu0 %346
    %350 = vrot.lane.b32.xlu0 %v293, 64
    %v351 = vpop.permute.xlu0 %350
    %352 = vrot.lane.b32.xlu0 %v297, 64
    %v353 = vpop.permute.xlu0 %352
    %356 = vrot.lane.b32.xlu0 %v293, 32
    %v357 = vpop.permute.xlu0 %356
    %358 = vrot.lane.b32.xlu0 %v297, 32
    %v359 = vpop.permute.xlu0 %358
    %v362 = vpack.c.bf16 %v293, %v293
    %v363 = vpack.c.bf16 %v297, %v297
    %v364 = vpack.c.bf16 %v345, %v345
    %v365 = vpack.c.bf16 %v347, %v347
    %v366 = vpack.c.bf16 %v351, %v351
    %v367 = vpack.c.bf16 %v353, %v353
    %v368 = vpack.c.bf16 %v357, %v357
    %v369 = vpack.c.bf16 %v359, %v359
    %372 = vrot.lane.b32.xlu0 %v295, 96
    %v373 = vpop.permute.xlu0 %372
    %374 = vrot.lane.b32.xlu0 %v299, 96
    %v375 = vpop.permute.xlu0 %374
    %378 = vrot.lane.b32.xlu0 %v295, 64
    %v379 = vpop.permute.xlu0 %378
    %380 = vrot.lane.b32.xlu0 %v299, 64
    %v381 = vpop.permute.xlu0 %380
    %384 = vrot.lane.b32.xlu0 %v295, 32
    %v385 = vpop.permute.xlu0 %384
    %386 = vrot.lane.b32.xlu0 %v299, 32
    %v387 = vpop.permute.xlu0 %386
    %v390 = vpack.c.bf16 %v295, %v295
    %v391 = vpack.c.bf16 %v299, %v299
    %v392 = vpack.c.bf16 %v373, %v373
    %v393 = vpack.c.bf16 %v375, %v375
    %v394 = vpack.c.bf16 %v379, %v379
    %v395 = vpack.c.bf16 %v381, %v381
    %v396 = vpack.c.bf16 %v385, %v385
    %v397 = vpack.c.bf16 %v387, %v387
    %400 = vrot.lane.b32.xlu0 %v336, 96
    %v401 = vpop.permute.xlu0 %400
    %402 = vrot.lane.b32.xlu0 %v339, 96
    %v403 = vpop.permute.xlu0 %402
    %406 = vrot.lane.b32.xlu0 %v336, 64
    %v407 = vpop.permute.xlu0 %406
    %408 = vrot.lane.b32.xlu0 %v339, 64
    %v409 = vpop.permute.xlu0 %408
    %412 = vrot.lane.b32.xlu0 %v336, 32
    %v413 = vpop.permute.xlu0 %412
    %414 = vrot.lane.b32.xlu0 %v339, 32
    %v415 = vpop.permute.xlu0 %414
    %v418 = vpack.c.bf16 %v336, %v336
    %v419 = vpack.c.bf16 %v339, %v339
    %v420 = vpack.c.bf16 %v401, %v401
    %v421 = vpack.c.bf16 %v403, %v403
    %v422 = vpack.c.bf16 %v407, %v407
    %v423 = vpack.c.bf16 %v409, %v409
    %v424 = vpack.c.bf16 %v413, %v413
    %v425 = vpack.c.bf16 %v415, %v415
    %vm426 = vcmask 261120
    %v428 = vsel %vm426, %v362, 0
    %v431 = vsel %vm426, %v390, 0
    %433 = vmatprep.subr.bf16.mxu0 0
    %434 = vmatpush1.bf16.xpose.msra.mxu0 %v431
    %435 = vmatprep.subr.bf16.mxu0 0
    %436 = vmatpush1.bf16.xpose.msra.mxu0 0
    %437 = vmatprep.subr.bf16.mxu0 0
    %438 = vmatpush1.bf16.xpose.msra.mxu0 0
    %439 = vmatprep.subr.bf16.mxu0 0
    %440 = vmatpush1.bf16.xpose.msra.mxu0 0
    %441 = vmatprep.subr.bf16.mxu0 0
    %442 = vmatpush1.bf16.xpose.msra.mxu0 0
    %443 = vmatprep.subr.bf16.mxu0 0
    %444 = vmatpush1.bf16.xpose.msra.mxu0 0
    %445 = vmatprep.subr.bf16.mxu0 0
    %446 = vmatpush1.bf16.xpose.msra.mxu0 0
    %447 = vmatprep.subr.bf16.mxu0 0
    %448 = vmatpush1.bf16.xpose.msra.mxu0 0
    %449 = vmatprep.subr.bf16.mxu0 0
    %450 = vmatpush1.bf16.xpose.msra.mxu0 0
    %451 = vmatprep.subr.bf16.mxu0 0
    %452 = vmatpush1.bf16.xpose.msra.mxu0 0
    %453 = vmatprep.subr.bf16.mxu0 0
    %454 = vmatpush1.bf16.xpose.msra.mxu0 0
    %455 = vmatprep.subr.bf16.mxu0 0
    %456 = vmatpush1.bf16.xpose.msra.mxu0 0
    %457 = vmatprep.subr.bf16.mxu0 0
    %458 = vmatpush1.bf16.xpose.msra.mxu0 0
    %459 = vmatprep.subr.bf16.mxu0 0
    %460 = vmatpush1.bf16.xpose.msra.mxu0 0
    %461 = vmatprep.subr.bf16.mxu0 0
    %462 = vmatpush1.bf16.xpose.msra.mxu0 0
    %463 = vmatprep.subr.bf16.mxu0 0
    %464 = vmatpush1.bf16.xpose.msra.mxu0 0
    %465 = vmatprep.mubr.bf16.mxu0 0
    %466 = vmatmul.mubr.bf16.gmra.mrb[0].mxu0 %v428
    %v467 = vpop.f32.mrb[0].mxu0
    %v468 = vadd.f32 0.0, %v467
    %v469 = vpop.f32.mrb[0].mxu0
    %v470 = vpop.f32.mrb[0].mxu0
    %v471 = vpop.f32.mrb[0].mxu0
    %472 = vdwg.mxu0
    %v474 = vsel %vm426, %v363, 0
    %v477 = vsel %vm426, %v391, 0
    %479 = vmatprep.subr.bf16.mxu0 0
    %480 = vmatpush1.bf16.xpose.msra.mxu0 %v477
    %481 = vmatprep.subr.bf16.mxu0 0
    %482 = vmatpush1.bf16.xpose.msra.mxu0 0
    %483 = vmatprep.subr.bf16.mxu0 0
    %484 = vmatpush1.bf16.xpose.msra.mxu0 0
    %485 = vmatprep.subr.bf16.mxu0 0
    %486 = vmatpush1.bf16.xpose.msra.mxu0 0
    %487 = vmatprep.subr.bf16.mxu0 0
    %488 = vmatpush1.bf16.xpose.msra.mxu0 0
    %489 = vmatprep.subr.bf16.mxu0 0
    %490 = vmatpush1.bf16.xpose.msra.mxu0 0
    %491 = vmatprep.subr.bf16.mxu0 0
    %492 = vmatpush1.bf16.xpose.msra.mxu0 0
    %493 = vmatprep.subr.bf16.mxu0 0
    %494 = vmatpush1.bf16.xpose.msra.mxu0 0
    %495 = vmatprep.subr.bf16.mxu0 0
    %496 = vmatpush1.bf16.xpose.msra.mxu0 0
    %497 = vmatprep.subr.bf16.mxu0 0
    %498 = vmatpush1.bf16.xpose.msra.mxu0 0
    %499 = vmatprep.subr.bf16.mxu0 0
    %500 = vmatpush1.bf16.xpose.msra.mxu0 0
    %501 = vmatprep.subr.bf16.mxu0 0
    %502 = vmatpush1.bf16.xpose.msra.mxu0 0
    %503 = vmatprep.subr.bf16.mxu0 0
    %504 = vmatpush1.bf16.xpose.msra.mxu0 0
    %505 = vmatprep.subr.bf16.mxu0 0
    %506 = vmatpush1.bf16.xpose.msra.mxu0 0
    %507 = vmatprep.subr.bf16.mxu0 0
    %508 = vmatpush1.bf16.xpose.msra.mxu0 0
    %509 = vmatprep.subr.bf16.mxu0 0
    %510 = vmatpush1.bf16.xpose.msra.mxu0 0
    %511 = vmatprep.mubr.bf16.mxu0 0
    %512 = vmatmul.mubr.bf16.gmra.mrb[0].mxu0 %v474
    %v513 = vpop.f32.mrb[0].mxu0
    %v514 = vadd.f32 0.0, %v513
    %v515 = vpop.f32.mrb[0].mxu0
    %v516 = vpop.f32.mrb[0].mxu0
    %v517 = vpop.f32.mrb[0].mxu0
    %518 = vdwg.mxu0
    %v520 = vsel %vm426, %v364, 0
    %v523 = vsel %vm426, %v392, 0
    %525 = vmatprep.subr.bf16.mxu0 0
    %526 = vmatpush1.bf16.xpose.msra.mxu0 %v523
    %527 = vmatprep.subr.bf16.mxu0 0
    %528 = vmatpush1.bf16.xpose.msra.mxu0 0
    %529 = vmatprep.subr.bf16.mxu0 0
    %530 = vmatpush1.bf16.xpose.msra.mxu0 0
    %531 = vmatprep.subr.bf16.mxu0 0
    %532 = vmatpush1.bf16.xpose.msra.mxu0 0
    %533 = vmatprep.subr.bf16.mxu0 0
    %534 = vmatpush1.bf16.xpose.msra.mxu0 0
    %535 = vmatprep.subr.bf16.mxu0 0
    %536 = vmatpush1.bf16.xpose.msra.mxu0 0
    %537 = vmatprep.subr.bf16.mxu0 0
    %538 = vmatpush1.bf16.xpose.msra.mxu0 0
    %539 = vmatprep.subr.bf16.mxu0 0
    %540 = vmatpush1.bf16.xpose.msra.mxu0 0
    %541 = vmatprep.subr.bf16.mxu0 0
    %542 = vmatpush1.bf16.xpose.msra.mxu0 0
    %543 = vmatprep.subr.bf16.mxu0 0
    %544 = vmatpush1.bf16.xpose.msra.mxu0 0
    %545 = vmatprep.subr.bf16.mxu0 0
    %546 = vmatpush1.bf16.xpose.msra.mxu0 0
    %547 = vmatprep.subr.bf16.mxu0 0
    %548 = vmatpush1.bf16.xpose.msra.mxu0 0
    %549 = vmatprep.subr.bf16.mxu0 0
    %550 = vmatpush1.bf16.xpose.msra.mxu0 0
    %551 = vmatprep.subr.bf16.mxu0 0
    %552 = vmatpush1.bf16.xpose.msra.mxu0 0
    %553 = vmatprep.subr.bf16.mxu0 0
    %554 = vmatpush1.bf16.xpose.msra.mxu0 0
    %555 = vmatprep.subr.bf16.mxu0 0
    %556 = vmatpush1.bf16.xpose.msra.mxu0 0
    %557 = vmatprep.mubr.bf16.mxu0 0
    %558 = vmatmul.mubr.bf16.gmra.mrb[0].mxu0 %v520
    %v559 = vpop.f32.mrb[0].mxu0
    %v560 = vadd.f32 0.0, %v559
    %v561 = vpop.f32.mrb[0].mxu0
    %v562 = vpop.f32.mrb[0].mxu0
    %v563 = vpop.f32.mrb[0].mxu0
    %564 = vdwg.mxu0
    %v566 = vsel %vm426, %v365, 0
    %v569 = vsel %vm426, %v393, 0
    %571 = vmatprep.subr.bf16.mxu0 0
    %572 = vmatpush1.bf16.xpose.msra.mxu0 %v569
    %573 = vmatprep.subr.bf16.mxu0 0
    %574 = vmatpush1.bf16.xpose.msra.mxu0 0
    %575 = vmatprep.subr.bf16.mxu0 0
    %576 = vmatpush1.bf16.xpose.msra.mxu0 0
    %577 = vmatprep.subr.bf16.mxu0 0
    %578 = vmatpush1.bf16.xpose.msra.mxu0 0
    %579 = vmatprep.subr.bf16.mxu0 0
    %580 = vmatpush1.bf16.xpose.msra.mxu0 0
    %581 = vmatprep.subr.bf16.mxu0 0
    %582 = vmatpush1.bf16.xpose.msra.mxu0 0
    %583 = vmatprep.subr.bf16.mxu0 0
    %584 = vmatpush1.bf16.xpose.msra.mxu0 0
    %585 = vmatprep.subr.bf16.mxu0 0
    %586 = vmatpush1.bf16.xpose.msra.mxu0 0
    %587 = vmatprep.subr.bf16.mxu0 0
    %588 = vmatpush1.bf16.xpose.msra.mxu0 0
    %589 = vmatprep.subr.bf16.mxu0 0
    %590 = vmatpush1.bf16.xpose.msra.mxu0 0
    %591 = vmatprep.subr.bf16.mxu0 0
    %592 = vmatpush1.bf16.xpose.msra.mxu0 0
    %593 = vmatprep.subr.bf16.mxu0 0
    %594 = vmatpush1.bf16.xpose.msra.mxu0 0
    %595 = vmatprep.subr.bf16.mxu0 0
    %596 = vmatpush1.bf16.xpose.msra.mxu0 0
    %597 = vmatprep.subr.bf16.mxu0 0
    %598 = vmatpush1.bf16.xpose.msra.mxu0 0
    %599 = vmatprep.subr.bf16.mxu0 0
    %600 = vmatpush1.bf16.xpose.msra.mxu0 0
    %601 = vmatprep.subr.bf16.mxu0 0
    %602 = vmatpush1.bf16.xpose.msra.mxu0 0
    %603 = vmatprep.mubr.bf16.mxu0 0
    %604 = vmatmul.mubr.bf16.gmra.mrb[0].mxu0 %v566
    %v605 = vpop.f32.mrb[0].mxu0
    %v606 = vadd.f32 0.0, %v605
    %v607 = vpop.f32.mrb[0].mxu0
    %v608 = vpop.f32.mrb[0].mxu0
    %v609 = vpop.f32.mrb[0].mxu0
    %610 = vdwg.mxu0
    %v612 = vsel %vm426, %v366, 0
    %v615 = vsel %vm426, %v394, 0
    %617 = vmatprep.subr.bf16.mxu0 0
    %618 = vmatpush1.bf16.xpose.msra.mxu0 %v615
    %619 = vmatprep.subr.bf16.mxu0 0
    %620 = vmatpush1.bf16.xpose.msra.mxu0 0
    %621 = vmatprep.subr.bf16.mxu0 0
    %622 = vmatpush1.bf16.xpose.msra.mxu0 0
    %623 = vmatprep.subr.bf16.mxu0 0
    %624 = vmatpush1.bf16.xpose.msra.mxu0 0
    %625 = vmatprep.subr.bf16.mxu0 0
    %626 = vmatpush1.bf16.xpose.msra.mxu0 0
    %627 = vmatprep.subr.bf16.mxu0 0
    %628 = vmatpush1.bf16.xpose.msra.mxu0 0
    %629 = vmatprep.subr.bf16.mxu0 0
    %630 = vmatpush1.bf16.xpose.msra.mxu0 0
    %631 = vmatprep.subr.bf16.mxu0 0
    %632 = vmatpush1.bf16.xpose.msra.mxu0 0
    %633 = vmatprep.subr.bf16.mxu0 0
    %634 = vmatpush1.bf16.xpose.msra.mxu0 0
    %635 = vmatprep.subr.bf16.mxu0 0
    %636 = vmatpush1.bf16.xpose.msra.mxu0 0
    %637 = vmatprep.subr.bf16.mxu0 0
    %638 = vmatpush1.bf16.xpose.msra.mxu0 0
    %639 = vmatprep.subr.bf16.mxu0 0
    %640 = vmatpush1.bf16.xpose.msra.mxu0 0
    %641 = vmatprep.subr.bf16.mxu0 0
    %642 = vmatpush1.bf16.xpose.msra.mxu0 0
    %643 = vmatprep.subr.bf16.mxu0 0
    %644 = vmatpush1.bf16.xpose.msra.mxu0 0
    %645 = vmatprep.subr.bf16.mxu0 0
    %646 = vmatpush1.bf16.xpose.msra.mxu0 0
    %647 = vmatprep.subr.bf16.mxu0 0
    %648 = vmatpush1.bf16.xpose.msra.mxu0 0
    %649 = vmatprep.mubr.bf16.mxu0 0
    %650 = vmatmul.mubr.bf16.gmra.mrb[0].mxu0 %v612
    %v651 = vpop.f32.mrb[0].mxu0
    %v652 = vadd.f32 0.0, %v651
    %v653 = vpop.f32.mrb[0].mxu0
    %v654 = vpop.f32.mrb[0].mxu0
    %v655 = vpop.f32.mrb[0].mxu0
    %656 = vdwg.mxu0
    %v658 = vsel %vm426, %v367, 0
    %v661 = vsel %vm426, %v395, 0
    %663 = vmatprep.subr.bf16.mxu0 0
    %664 = vmatpush1.bf16.xpose.msra.mxu0 %v661
    %665 = vmatprep.subr.bf16.mxu0 0
    %666 = vmatpush1.bf16.xpose.msra.mxu0 0
    %667 = vmatprep.subr.bf16.mxu0 0
    %668 = vmatpush1.bf16.xpose.msra.mxu0 0
    %669 = vmatprep.subr.bf16.mxu0 0
    %670 = vmatpush1.bf16.xpose.msra.mxu0 0
    %671 = vmatprep.subr.bf16.mxu0 0
    %672 = vmatpush1.bf16.xpose.msra.mxu0 0
    %673 = vmatprep.subr.bf16.mxu0 0
    %674 = vmatpush1.bf16.xpose.msra.mxu0 0
    %675 = vmatprep.subr.bf16.mxu0 0
    %676 = vmatpush1.bf16.xpose.msra.mxu0 0
    %677 = vmatprep.subr.bf16.mxu0 0
    %678 = vmatpush1.bf16.xpose.msra.mxu0 0
    %679 = vmatprep.subr.bf16.mxu0 0
    %680 = vmatpush1.bf16.xpose.msra.mxu0 0
    %681 = vmatprep.subr.bf16.mxu0 0
    %682 = vmatpush1.bf16.xpose.msra.mxu0 0
    %683 = vmatprep.subr.bf16.mxu0 0
    %684 = vmatpush1.bf16.xpose.msra.mxu0 0
    %685 = vmatprep.subr.bf16.mxu0 0
    %686 = vmatpush1.bf16.xpose.msra.mxu0 0
    %687 = vmatprep.subr.bf16.mxu0 0
    %688 = vmatpush1.bf16.xpose.msra.mxu0 0
    %689 = vmatprep.subr.bf16.mxu0 0
    %690 = vmatpush1.bf16.xpose.msra.mxu0 0
    %691 = vmatprep.subr.bf16.mxu0 0
    %692 = vmatpush1.bf16.xpose.msra.mxu0 0
    %693 = vmatprep.subr.bf16.mxu0 0
    %694 = vmatpush1.bf16.xpose.msra.mxu0 0
    %695 = vmatprep.mubr.bf16.mxu0 0
    %696 = vmatmul.mubr.bf16.gmra.mrb[0].mxu0 %v658
    %v697 = vpop.f32.mrb[0].mxu0
    %v698 = vadd.f32 0.0, %v697
    %v699 = vpop.f32.mrb[0].mxu0
    %v700 = vpop.f32.mrb[0].mxu0
    %v701 = vpop.f32.mrb[0].mxu0
    %702 = vdwg.mxu0
    %v704 = vsel %vm426, %v368, 0
    %v707 = vsel %vm426, %v396, 0
    %709 = vmatprep.subr.bf16.mxu0 0
    %710 = vmatpush1.bf16.xpose.msra.mxu0 %v707
    %711 = vmatprep.subr.bf16.mxu0 0
    %712 = vmatpush1.bf16.xpose.msra.mxu0 0
    %713 = vmatprep.subr.bf16.mxu0 0
    %714 = vmatpush1.bf16.xpose.msra.mxu0 0
    %715 = vmatprep.subr.bf16.mxu0 0
    %716 = vmatpush1.bf16.xpose.msra.mxu0 0
    %717 = vmatprep.subr.bf16.mxu0 0
    %718 = vmatpush1.bf16.xpose.msra.mxu0 0
    %719 = vmatprep.subr.bf16.mxu0 0
    %720 = vmatpush1.bf16.xpose.msra.mxu0 0
    %721 = vmatprep.subr.bf16.mxu0 0
    %722 = vmatpush1.bf16.xpose.msra.mxu0 0
    %723 = vmatprep.subr.bf16.mxu0 0
    %724 = vmatpush1.bf16.xpose.msra.mxu0 0
    %725 = vmatprep.subr.bf16.mxu0 0
    %726 = vmatpush1.bf16.xpose.msra.mxu0 0
    %727 = vmatprep.subr.bf16.mxu0 0
    %728 = vmatpush1.bf16.xpose.msra.mxu0 0
    %729 = vmatprep.subr.bf16.mxu0 0
    %730 = vmatpush1.bf16.xpose.msra.mxu0 0
    %731 = vmatprep.subr.bf16.mxu0 0
    %732 = vmatpush1.bf16.xpose.msra.mxu0 0
    %733 = vmatprep.subr.bf16.mxu0 0
    %734 = vmatpush1.bf16.xpose.msra.mxu0 0
    %735 = vmatprep.subr.bf16.mxu0 0
    %736 = vmatpush1.bf16.xpose.msra.mxu0 0
    %737 = vmatprep.subr.bf16.mxu0 0
    %738 = vmatpush1.bf16.xpose.msra.mxu0 0
    %739 = vmatprep.subr.bf16.mxu0 0
    %740 = vmatpush1.bf16.xpose.msra.mxu0 0
    %741 = vmatprep.mubr.bf16.mxu0 0
    %742 = vmatmul.mubr.bf16.gmra.mrb[0].mxu0 %v704
    %v743 = vpop.f32.mrb[0].mxu0
    %v744 = vadd.f32 0.0, %v743
    %v745 = vpop.f32.mrb[0].mxu0
    %v746 = vpop.f32.mrb[0].mxu0
    %v747 = vpop.f32.mrb[0].mxu0
    %748 = vdwg.mxu0
    %v750 = vsel %vm426, %v369, 0
    %v753 = vsel %vm426, %v397, 0
    %755 = vmatprep.subr.bf16.mxu0 0
    %756 = vmatpush1.bf16.xpose.msra.mxu0 %v753
    %757 = vmatprep.subr.bf16.mxu0 0
    %758 = vmatpush1.bf16.xpose.msra.mxu0 0
    %759 = vmatprep.subr.bf16.mxu0 0
    %760 = vmatpush1.bf16.xpose.msra.mxu0 0
    %761 = vmatprep.subr.bf16.mxu0 0
    %762 = vmatpush1.bf16.xpose.msra.mxu0 0
    %763 = vmatprep.subr.bf16.mxu0 0
    %764 = vmatpush1.bf16.xpose.msra.mxu0 0
    %765 = vmatprep.subr.bf16.mxu0 0
    %766 = vmatpush1.bf16.xpose.msra.mxu0 0
    %767 = vmatprep.subr.bf16.mxu0 0
    %768 = vmatpush1.bf16.xpose.msra.mxu0 0
    %769 = vmatprep.subr.bf16.mxu0 0
    %770 = vmatpush1.bf16.xpose.msra.mxu0 0
    %771 = vmatprep.subr.bf16.mxu0 0
    %772 = vmatpush1.bf16.xpose.msra.mxu0 0
    %773 = vmatprep.subr.bf16.mxu0 0
    %774 = vmatpush1.bf16.xpose.msra.mxu0 0
    %775 = vmatprep.subr.bf16.mxu0 0
    %776 = vmatpush1.bf16.xpose.msra.mxu0 0
    %777 = vmatprep.subr.bf16.mxu0 0
    %778 = vmatpush1.bf16.xpose.msra.mxu0 0
    %779 = vmatprep.subr.bf16.mxu0 0
    %780 = vmatpush1.bf16.xpose.msra.mxu0 0
    %781 = vmatprep.subr.bf16.mxu0 0
    %782 = vmatpush1.bf16.xpose.msra.mxu0 0
    %783 = vmatprep.subr.bf16.mxu0 0
    %784 = vmatpush1.bf16.xpose.msra.mxu0 0
    %785 = vmatprep.subr.bf16.mxu0 0
    %786 = vmatpush1.bf16.xpose.msra.mxu0 0
    %787 = vmatprep.mubr.bf16.mxu0 0
    %788 = vmatmul.mubr.bf16.gmra.mrb[0].mxu0 %v750
    %v789 = vpop.f32.mrb[0].mxu0
    %v790 = vadd.f32 0.0, %v789
    %v791 = vpop.f32.mrb[0].mxu0
    %v792 = vpop.f32.mrb[0].mxu0
    %v793 = vpop.f32.mrb[0].mxu0
    %794 = vdwg.mxu0
    %vm795 = vcmask 64512
    %v796 = vsel %vm795, %v468, -inf
    %797 = vmax.xlane.f32.xlu0 %v796
    %v798 = vpop.xlane.xlu0 %797
    %v799 = vsel %vm795, %v514, -inf
    %800 = vmax.xlane.f32.xlu0 %v799
    %v801 = vpop.xlane.xlu0 %800
    %v802 = vsel %vm795, %v560, -inf
    %803 = vmax.xlane.f32.xlu0 %v802
    %v804 = vpop.xlane.xlu0 %803
    %v805 = vsel %vm795, %v606, -inf
    %806 = vmax.xlane.f32.xlu0 %v805
    %v807 = vpop.xlane.xlu0 %806
    %v808 = vsel %vm795, %v652, -inf
    %809 = vmax.xlane.f32.xlu0 %v808
    %v810 = vpop.xlane.xlu0 %809
    %v811 = vsel %vm795, %v698, -inf
    %812 = vmax.xlane.f32.xlu0 %v811
    %v813 = vpop.xlane.xlu0 %812
    %v814 = vsel %vm795, %v744, -inf
    %815 = vmax.xlane.f32.xlu0 %v814
    %v816 = vpop.xlane.xlu0 %815
    %v817 = vsel %vm795, %v790, -inf
    %818 = vmax.xlane.f32.xlu0 %v817
    %v819 = vpop.xlane.xlu0 %818
    %v820 = vsub.f32 %v468, %v798
    %v821 = vsub.f32 %v514, %v801
    %v822 = vsub.f32 %v560, %v804
    %v823 = vsub.f32 %v606, %v807
    %v824 = vsub.f32 %v652, %v810
    %v825 = vsub.f32 %v698, %v813
    %v826 = vsub.f32 %v744, %v816
    %v827 = vsub.f32 %v790, %v819
    %v828 = vmul.f32 %v820, 1.442695
    %v829 = vpow.pop %v828
    %v830 = vmul.f32 %v821, 1.442695
    %v831 = vpow.pop %v830
    %v832 = vmul.f32 %v822, 1.442695
    %v833 = vpow.pop %v832
    %v834 = vmul.f32 %v823, 1.442695
    %v835 = vpow.pop %v834
    %v836 = vmul.f32 %v824, 1.442695
    %v837 = vpow.pop %v836
    %v838 = vmul.f32 %v825, 1.442695
    %v839 = vpow.pop %v838
    %v840 = vmul.f32 %v826, 1.442695
    %v841 = vpow.pop %v840
    %v842 = vmul.f32 %v827, 1.442695
    %v843 = vpow.pop %v842
    %v844 = vsel %vm795, %v829, 0.0
    %845 = vadd.xlane.f32.xlu0 %v844
    %v846 = vpop.xlane.xlu0 %845
    %v847 = vsel %vm795, %v831, 0.0
    %848 = vadd.xlane.f32.xlu0 %v847
    %v849 = vpop.xlane.xlu0 %848
    %v850 = vsel %vm795, %v833, 0.0
    %851 = vadd.xlane.f32.xlu0 %v850
    %v852 = vpop.xlane.xlu0 %851
    %v853 = vsel %vm795, %v835, 0.0
    %854 = vadd.xlane.f32.xlu0 %v853
    %v855 = vpop.xlane.xlu0 %854
    %v856 = vsel %vm795, %v837, 0.0
    %857 = vadd.xlane.f32.xlu0 %v856
    %v858 = vpop.xlane.xlu0 %857
    %v859 = vsel %vm795, %v839, 0.0
    %860 = vadd.xlane.f32.xlu0 %v859
    %v861 = vpop.xlane.xlu0 %860
    %v862 = vsel %vm795, %v841, 0.0
    %863 = vadd.xlane.f32.xlu0 %v862
    %v864 = vpop.xlane.xlu0 %863
    %v865 = vsel %vm795, %v843, 0.0
    %866 = vadd.xlane.f32.xlu0 %v865
    %v867 = vpop.xlane.xlu0 %866
    %v868 = vrcp.pop %v846
    %v869 = vrcp.pop %v849
    %v870 = vrcp.pop %v852
    %v871 = vrcp.pop %v855
    %v872 = vrcp.pop %v858
    %v873 = vrcp.pop %v861
    %v874 = vrcp.pop %v864
    %v875 = vrcp.pop %v867
    %v876 = vmul.f32 %v829, %v868
    %v877 = vmul.f32 %v831, %v869
    %v878 = vmul.f32 %v833, %v870
    %v879 = vmul.f32 %v835, %v871
    %v880 = vmul.f32 %v837, %v872
    %v881 = vmul.f32 %v839, %v873
    %v882 = vmul.f32 %v841, %v874
    %v883 = vmul.f32 %v843, %v875
    %v884 = vpack.c.bf16 %v876, %v876
    %v885 = vpack.c.bf16 %v877, %v877
    %v886 = vpack.c.bf16 %v878, %v878
    %v887 = vpack.c.bf16 %v879, %v879
    %v888 = vpack.c.bf16 %v880, %v880
    %v889 = vpack.c.bf16 %v881, %v881
    %v890 = vpack.c.bf16 %v882, %v882
    %v891 = vpack.c.bf16 %v883, %v883
    %v893 = vsel %vm795, %v884, 0
    %vm895 = vcmask 1043456
    %v897 = vsel %vm895, %v418, 0
    %899 = vmatprep.subr.bf16.mxu0 0
    %900 = vmatpush1.bf16.msra.mxu0 %v897
    %901 = vmatprep.subr.bf16.mxu0 0
    %902 = vmatpush1.bf16.msra.mxu0 0
    %903 = vmatprep.subr.bf16.mxu0 0
    %904 = vmatpush1.bf16.msra.mxu0 0
    %905 = vmatprep.subr.bf16.mxu0 0
    %906 = vmatpush1.bf16.msra.mxu0 0
    %907 = vmatprep.subr.bf16.mxu0 0
    %908 = vmatpush1.bf16.msra.mxu0 0
    %909 = vmatprep.subr.bf16.mxu0 0
    %910 = vmatpush1.bf16.msra.mxu0 0
    %911 = vmatprep.subr.bf16.mxu0 0
    %912 = vmatpush1.bf16.msra.mxu0 0
    %913 = vmatprep.subr.bf16.mxu0 0
    %914 = vmatpush1.bf16.msra.mxu0 0
    %915 = vmatprep.subr.bf16.mxu0 0
    %916 = vmatpush1.bf16.msra.mxu0 0
    %917 = vmatprep.subr.bf16.mxu0 0
    %918 = vmatpush1.bf16.msra.mxu0 0
    %919 = vmatprep.subr.bf16.mxu0 0
    %920 = vmatpush1.bf16.msra.mxu0 0
    %921 = vmatprep.subr.bf16.mxu0 0
    %922 = vmatpush1.bf16.msra.mxu0 0
    %923 = vmatprep.subr.bf16.mxu0 0
    %924 = vmatpush1.bf16.msra.mxu0 0
    %925 = vmatprep.subr.bf16.mxu0 0
    %926 = vmatpush1.bf16.msra.mxu0 0
    %927 = vmatprep.subr.bf16.mxu0 0
    %928 = vmatpush1.bf16.msra.mxu0 0
    %929 = vmatprep.subr.bf16.mxu0 0
    %930 = vmatpush1.bf16.msra.mxu0 0
    %931 = vmatprep.mubr.bf16.mxu0 0
    %932 = vmatmul.mubr.bf16.gmra.mrb[0].mxu0 %v893
    %v933 = vpop.f32.mrb[0].mxu0
    %v934 = vadd.f32 0.0, %v933
    %v935 = vpop.f32.mrb[0].mxu0
    %v936 = vpop.f32.mrb[0].mxu0
    %v937 = vpop.f32.mrb[0].mxu0
    %938 = vdwg.mxu0
    %v940 = vsel %vm795, %v885, 0
    %v943 = vsel %vm895, %v419, 0
    %945 = vmatprep.subr.bf16.mxu0 0
    %946 = vmatpush1.bf16.msra.mxu0 %v943
    %947 = vmatprep.subr.bf16.mxu0 0
    %948 = vmatpush1.bf16.msra.mxu0 0
    %949 = vmatprep.subr.bf16.mxu0 0
    %950 = vmatpush1.bf16.msra.mxu0 0
    %951 = vmatprep.subr.bf16.mxu0 0
    %952 = vmatpush1.bf16.msra.mxu0 0
    %953 = vmatprep.subr.bf16.mxu0 0
    %954 = vmatpush1.bf16.msra.mxu0 0
    %955 = vmatprep.subr.bf16.mxu0 0
    %956 = vmatpush1.bf16.msra.mxu0 0
    %957 = vmatprep.subr.bf16.mxu0 0
    %958 = vmatpush1.bf16.msra.mxu0 0
    %959 = vmatprep.subr.bf16.mxu0 0
    %960 = vmatpush1.bf16.msra.mxu0 0
    %961 = vmatprep.subr.bf16.mxu0 0
    %962 = vmatpush1.bf16.msra.mxu0 0
    %963 = vmatprep.subr.bf16.mxu0 0
    %964 = vmatpush1.bf16.msra.mxu0 0
    %965 = vmatprep.subr.bf16.mxu0 0
    %966 = vmatpush1.bf16.msra.mxu0 0
    %967 = vmatprep.subr.bf16.mxu0 0
    %968 = vmatpush1.bf16.msra.mxu0 0
    %969 = vmatprep.subr.bf16.mxu0 0
    %970 = vmatpush1.bf16.msra.mxu0 0
    %971 = vmatprep.subr.bf16.mxu0 0
    %972 = vmatpush1.bf16.msra.mxu0 0
    %973 = vmatprep.subr.bf16.mxu0 0
    %974 = vmatpush1.bf16.msra.mxu0 0
    %975 = vmatprep.subr.bf16.mxu0 0
    %976 = vmatpush1.bf16.msra.mxu0 0
    %977 = vmatprep.mubr.bf16.mxu0 0
    %978 = vmatmul.mubr.bf16.gmra.mrb[0].mxu0 %v940
    %v979 = vpop.f32.mrb[0].mxu0
    %v980 = vadd.f32 0.0, %v979
    %v981 = vpop.f32.mrb[0].mxu0
    %v982 = vpop.f32.mrb[0].mxu0
    %v983 = vpop.f32.mrb[0].mxu0
    %984 = vdwg.mxu0
    %v986 = vsel %vm795, %v886, 0
    %v989 = vsel %vm895, %v420, 0
    %991 = vmatprep.subr.bf16.mxu0 0
    %992 = vmatpush1.bf16.msra.mxu0 %v989
    %993 = vmatprep.subr.bf16.mxu0 0
    %994 = vmatpush1.bf16.msra.mxu0 0
    %995 = vmatprep.subr.bf16.mxu0 0
    %996 = vmatpush1.bf16.msra.mxu0 0
    %997 = vmatprep.subr.bf16.mxu0 0
    %998 = vmatpush1.bf16.msra.mxu0 0
    %999 = vmatprep.subr.bf16.mxu0 0
    %1000 = vmatpush1.bf16.msra.mxu0 0
    %1001 = vmatprep.subr.bf16.mxu0 0
    %1002 = vmatpush1.bf16.msra.mxu0 0
    %1003 = vmatprep.subr.bf16.mxu0 0
    %1004 = vmatpush1.bf16.msra.mxu0 0
    %1005 = vmatprep.subr.bf16.mxu0 0
    %1006 = vmatpush1.bf16.msra.mxu0 0
    %1007 = vmatprep.subr.bf16.mxu0 0
    %1008 = vmatpush1.bf16.msra.mxu0 0
    %1009 = vmatprep.subr.bf16.mxu0 0
    %1010 = vmatpush1.bf16.msra.mxu0 0
    %1011 = vmatprep.subr.bf16.mxu0 0
    %1012 = vmatpush1.bf16.msra.mxu0 0
    %1013 = vmatprep.subr.bf16.mxu0 0
    %1014 = vmatpush1.bf16.msra.mxu0 0
    %1015 = vmatprep.subr.bf16.mxu0 0
    %1016 = vmatpush1.bf16.msra.mxu0 0
    %1017 = vmatprep.subr.bf16.mxu0 0
    %1018 = vmatpush1.bf16.msra.mxu0 0
    %1019 = vmatprep.subr.bf16.mxu0 0
    %1020 = vmatpush1.bf16.msra.mxu0 0
    %1021 = vmatprep.subr.bf16.mxu0 0
    %1022 = vmatpush1.bf16.msra.mxu0 0
    %1023 = vmatprep.mubr.bf16.mxu0 0
    %1024 = vmatmul.mubr.bf16.gmra.mrb[0].mxu0 %v986
    %v1025 = vpop.f32.mrb[0].mxu0
    %v1026 = vadd.f32 0.0, %v1025
    %v1027 = vpop.f32.mrb[0].mxu0
    %v1028 = vpop.f32.mrb[0].mxu0
    %v1029 = vpop.f32.mrb[0].mxu0
    %1030 = vdwg.mxu0
    %v1032 = vsel %vm795, %v887, 0
    %v1035 = vsel %vm895, %v421, 0
    %1037 = vmatprep.subr.bf16.mxu0 0
    %1038 = vmatpush1.bf16.msra.mxu0 %v1035
    %1039 = vmatprep.subr.bf16.mxu0 0
    %1040 = vmatpush1.bf16.msra.mxu0 0
    %1041 = vmatprep.subr.bf16.mxu0 0
    %1042 = vmatpush1.bf16.msra.mxu0 0
    %1043 = vmatprep.subr.bf16.mxu0 0
    %1044 = vmatpush1.bf16.msra.mxu0 0
    %1045 = vmatprep.subr.bf16.mxu0 0
    %1046 = vmatpush1.bf16.msra.mxu0 0
    %1047 = vmatprep.subr.bf16.mxu0 0
    %1048 = vmatpush1.bf16.msra.mxu0 0
    %1049 = vmatprep.subr.bf16.mxu0 0
    %1050 = vmatpush1.bf16.msra.mxu0 0
    %1051 = vmatprep.subr.bf16.mxu0 0
    %1052 = vmatpush1.bf16.msra.mxu0 0
    %1053 = vmatprep.subr.bf16.mxu0 0
    %1054 = vmatpush1.bf16.msra.mxu0 0
    %1055 = vmatprep.subr.bf16.mxu0 0
    %1056 = vmatpush1.bf16.msra.mxu0 0
    %1057 = vmatprep.subr.bf16.mxu0 0
    %1058 = vmatpush1.bf16.msra.mxu0 0
    %1059 = vmatprep.subr.bf16.mxu0 0
    %1060 = vmatpush1.bf16.msra.mxu0 0
    %1061 = vmatprep.subr.bf16.mxu0 0
    %1062 = vmatpush1.bf16.msra.mxu0 0
    %1063 = vmatprep.subr.bf16.mxu0 0
    %1064 = vmatpush1.bf16.msra.mxu0 0
    %1065 = vmatprep.subr.bf16.mxu0 0
    %1066 = vmatpush1.bf16.msra.mxu0 0
    %1067 = vmatprep.subr.bf16.mxu0 0
    %1068 = vmatpush1.bf16.msra.mxu0 0
    %1069 = vmatprep.mubr.bf16.mxu0 0
    %1070 = vmatmul.mubr.bf16.gmra.mrb[0].mxu0 %v1032
    %v1071 = vpop.f32.mrb[0].mxu0
    %v1072 = vadd.f32 0.0, %v1071
    %v1073 = vpop.f32.mrb[0].mxu0
    %v1074 = vpop.f32.mrb[0].mxu0
    %v1075 = vpop.f32.mrb[0].mxu0
    %1076 = vdwg.mxu0
    %v1078 = vsel %vm795, %v888, 0
    %v1081 = vsel %vm895, %v422, 0
    %1083 = vmatprep.subr.bf16.mxu0 0
    %1084 = vmatpush1.bf16.msra.mxu0 %v1081
    %1085 = vmatprep.subr.bf16.mxu0 0
    %1086 = vmatpush1.bf16.msra.mxu0 0
    %1087 = vmatprep.subr.bf16.mxu0 0
    %1088 = vmatpush1.bf16.msra.mxu0 0
    %1089 = vmatprep.subr.bf16.mxu0 0
    %1090 = vmatpush1.bf16.msra.mxu0 0
    %1091 = vmatprep.subr.bf16.mxu0 0
    %1092 = vmatpush1.bf16.msra.mxu0 0
    %1093 = vmatprep.subr.bf16.mxu0 0
    %1094 = vmatpush1.bf16.msra.mxu0 0
    %1095 = vmatprep.subr.bf16.mxu0 0
    %1096 = vmatpush1.bf16.msra.mxu0 0
    %1097 = vmatprep.subr.bf16.mxu0 0
    %1098 = vmatpush1.bf16.msra.mxu0 0
    %1099 = vmatprep.subr.bf16.mxu0 0
    %1100 = vmatpush1.bf16.msra.mxu0 0
    %1101 = vmatprep.subr.bf16.mxu0 0
    %1102 = vmatpush1.bf16.msra.mxu0 0
    %1103 = vmatprep.subr.bf16.mxu0 0
    %1104 = vmatpush1.bf16.msra.mxu0 0
    %1105 = vmatprep.subr.bf16.mxu0 0
    %1106 = vmatpush1.bf16.msra.mxu0 0
    %1107 = vmatprep.subr.bf16.mxu0 0
    %1108 = vmatpush1.bf16.msra.mxu0 0
    %1109 = vmatprep.subr.bf16.mxu0 0
    %1110 = vmatpush1.bf16.msra.mxu0 0
    %1111 = vmatprep.subr.bf16.mxu0 0
    %1112 = vmatpush1.bf16.msra.mxu0 0
    %1113 = vmatprep.subr.bf16.mxu0 0
    %1114 = vmatpush1.bf16.msra.mxu0 0
    %1115 = vmatprep.mubr.bf16.mxu0 0
    %1116 = vmatmul.mubr.bf16.gmra.mrb[0].mxu0 %v1078
    %v1117 = vpop.f32.mrb[0].mxu0
    %v1118 = vadd.f32 0.0, %v1117
    %v1119 = vpop.f32.mrb[0].mxu0
    %v1120 = vpop.f32.mrb[0].mxu0
    %v1121 = vpop.f32.mrb[0].mxu0
    %1122 = vdwg.mxu0
    %v1124 = vsel %vm795, %v889, 0
    %v1127 = vsel %vm895, %v423, 0
    %1129 = vmatprep.subr.bf16.mxu0 0
    %1130 = vmatpush1.bf16.msra.mxu0 %v1127
    %1131 = vmatprep.subr.bf16.mxu0 0
    %1132 = vmatpush1.bf16.msra.mxu0 0
    %1133 = vmatprep.subr.bf16.mxu0 0
    %1134 = vmatpush1.bf16.msra.mxu0 0
    %1135 = vmatprep.subr.bf16.mxu0 0
    %1136 = vmatpush1.bf16.msra.mxu0 0
    %1137 = vmatprep.subr.bf16.mxu0 0
    %1138 = vmatpush1.bf16.msra.mxu0 0
    %1139 = vmatprep.subr.bf16.mxu0 0
    %1140 = vmatpush1.bf16.msra.mxu0 0
    %1141 = vmatprep.subr.bf16.mxu0 0
    %1142 = vmatpush1.bf16.msra.mxu0 0
    %1143 = vmatprep.subr.bf16.mxu0 0
    %1144 = vmatpush1.bf16.msra.mxu0 0
    %1145 = vmatprep.subr.bf16.mxu0 0
    %1146 = vmatpush1.bf16.msra.mxu0 0
    %1147 = vmatprep.subr.bf16.mxu0 0
    %1148 = vmatpush1.bf16.msra.mxu0 0
    %1149 = vmatprep.subr.bf16.mxu0 0
    %1150 = vmatpush1.bf16.msra.mxu0 0
    %1151 = vmatprep.subr.bf16.mxu0 0
    %1152 = vmatpush1.bf16.msra.mxu0 0
    %1153 = vmatprep.subr.bf16.mxu0 0
    %1154 = vmatpush1.bf16.msra.mxu0 0
    %1155 = vmatprep.subr.bf16.mxu0 0
    %1156 = vmatpush1.bf16.msra.mxu0 0
    %1157 = vmatprep.subr.bf16.mxu0 0
    %1158 = vmatpush1.bf16.msra.mxu0 0
    %1159 = vmatprep.subr.bf16.mxu0 0
    %1160 = vmatpush1.bf16.msra.mxu0 0
    %1161 = vmatprep.mubr.bf16.mxu0 0
    %1162 = vmatmul.mubr.bf16.gmra.mrb[0].mxu0 %v1124
    %v1163 = vpop.f32.mrb[0].mxu0
    %v1164 = vadd.f32 0.0, %v1163
    %v1165 = vpop.f32.mrb[0].mxu0
    %v1166 = vpop.f32.mrb[0].mxu0
    %v1167 = vpop.f32.mrb[0].mxu0
    %1168 = vdwg.mxu0
    %v1170 = vsel %vm795, %v890, 0
    %v1173 = vsel %vm895, %v424, 0
    %1175 = vmatprep.subr.bf16.mxu0 0
    %1176 = vmatpush1.bf16.msra.mxu0 %v1173
    %1177 = vmatprep.subr.bf16.mxu0 0
    %1178 = vmatpush1.bf16.msra.mxu0 0
    %1179 = vmatprep.subr.bf16.mxu0 0
    %1180 = vmatpush1.bf16.msra.mxu0 0
    %1181 = vmatprep.subr.bf16.mxu0 0
    %1182 = vmatpush1.bf16.msra.mxu0 0
    %1183 = vmatprep.subr.bf16.mxu0 0
    %1184 = vmatpush1.bf16.msra.mxu0 0
    %1185 = vmatprep.subr.bf16.mxu0 0
    %1186 = vmatpush1.bf16.msra.mxu0 0
    %1187 = vmatprep.subr.bf16.mxu0 0
    %1188 = vmatpush1.bf16.msra.mxu0 0
    %1189 = vmatprep.subr.bf16.mxu0 0
    %1190 = vmatpush1.bf16.msra.mxu0 0
    %1191 = vmatprep.subr.bf16.mxu0 0
    %1192 = vmatpush1.bf16.msra.mxu0 0
    %1193 = vmatprep.subr.bf16.mxu0 0
    %1194 = vmatpush1.bf16.msra.mxu0 0
    %1195 = vmatprep.subr.bf16.mxu0 0
    %1196 = vmatpush1.bf16.msra.mxu0 0
    %1197 = vmatprep.subr.bf16.mxu0 0
    %1198 = vmatpush1.bf16.msra.mxu0 0
    %1199 = vmatprep.subr.bf16.mxu0 0
    %1200 = vmatpush1.bf16.msra.mxu0 0
    %1201 = vmatprep.subr.bf16.mxu0 0
    %1202 = vmatpush1.bf16.msra.mxu0 0
    %1203 = vmatprep.subr.bf16.mxu0 0
    %1204 = vmatpush1.bf16.msra.mxu0 0
    %1205 = vmatprep.subr.bf16.mxu0 0
    %1206 = vmatpush1.bf16.msra.mxu0 0
    %1207 = vmatprep.mubr.bf16.mxu0 0
    %1208 = vmatmul.mubr.bf16.gmra.mrb[0].mxu0 %v1170
    %v1209 = vpop.f32.mrb[0].mxu0
    %v1210 = vadd.f32 0.0, %v1209
    %v1211 = vpop.f32.mrb[0].mxu0
    %v1212 = vpop.f32.mrb[0].mxu0
    %v1213 = vpop.f32.mrb[0].mxu0
    %1214 = vdwg.mxu0
    %v1216 = vsel %vm795, %v891, 0
    %v1219 = vsel %vm895, %v425, 0
    %1221 = vmatprep.subr.bf16.mxu0 0
    %1222 = vmatpush1.bf16.msra.mxu0 %v1219
    %1223 = vmatprep.subr.bf16.mxu0 0
    %1224 = vmatpush1.bf16.msra.mxu0 0
    %1225 = vmatprep.subr.bf16.mxu0 0
    %1226 = vmatpush1.bf16.msra.mxu0 0
    %1227 = vmatprep.subr.bf16.mxu0 0
    %1228 = vmatpush1.bf16.msra.mxu0 0
    %1229 = vmatprep.subr.bf16.mxu0 0
    %1230 = vmatpush1.bf16.msra.mxu0 0
    %1231 = vmatprep.subr.bf16.mxu0 0
    %1232 = vmatpush1.bf16.msra.mxu0 0
    %1233 = vmatprep.subr.bf16.mxu0 0
    %1234 = vmatpush1.bf16.msra.mxu0 0
    %1235 = vmatprep.subr.bf16.mxu0 0
    %1236 = vmatpush1.bf16.msra.mxu0 0
    %1237 = vmatprep.subr.bf16.mxu0 0
    %1238 = vmatpush1.bf16.msra.mxu0 0
    %1239 = vmatprep.subr.bf16.mxu0 0
    %1240 = vmatpush1.bf16.msra.mxu0 0
    %1241 = vmatprep.subr.bf16.mxu0 0
    %1242 = vmatpush1.bf16.msra.mxu0 0
    %1243 = vmatprep.subr.bf16.mxu0 0
    %1244 = vmatpush1.bf16.msra.mxu0 0
    %1245 = vmatprep.subr.bf16.mxu0 0
    %1246 = vmatpush1.bf16.msra.mxu0 0
    %1247 = vmatprep.subr.bf16.mxu0 0
    %1248 = vmatpush1.bf16.msra.mxu0 0
    %1249 = vmatprep.subr.bf16.mxu0 0
    %1250 = vmatpush1.bf16.msra.mxu0 0
    %1251 = vmatprep.subr.bf16.mxu0 0
    %1252 = vmatpush1.bf16.msra.mxu0 0
    %1253 = vmatprep.mubr.bf16.mxu0 0
    %1254 = vmatmul.mubr.bf16.gmra.mrb[0].mxu0 %v1216
    %v1255 = vpop.f32.mrb[0].mxu0
    %v1256 = vadd.f32 0.0, %v1255
    %v1257 = vpop.f32.mrb[0].mxu0
    %v1258 = vpop.f32.mrb[0].mxu0
    %v1259 = vpop.f32.mrb[0].mxu0
    %1260 = vdwg.mxu0
    %1263 = vrot.lane.b32.xlu0 %v1026, 32
    %v1264 = vpop.permute.xlu0 %1263
    %1265 = vrot.lane.b32.xlu0 %v1072, 32
    %v1266 = vpop.permute.xlu0 %1265
    %1271 = vrot.lane.b32.xlu0 %v1118, 64
    %v1272 = vpop.permute.xlu0 %1271
    %1273 = vrot.lane.b32.xlu0 %v1164, 64
    %v1274 = vpop.permute.xlu0 %1273
    %1279 = vrot.lane.b32.xlu0 %v1210, 96
    %v1280 = vpop.permute.xlu0 %1279
    %1281 = vrot.lane.b32.xlu0 %v1256, 96
    %v1282 = vpop.permute.xlu0 %1281
    %v1285 = vsel %vm426, %v934, %v1264
    %v1286 = vsel %vm426, %v980, %v1266
    %vm1287 = vcmask 523264
    %v1288 = vsel %vm1287, %v1285, %v1272
    %v1289 = vsel %vm1287, %v1286, %v1274
    %vm1290 = vcmask 785408
    %v1291 = vsel %vm1290, %v1288, %v1280
    %v1292 = vsel %vm1290, %v1289, %v1282
    %v1293 = vld [vmem:[#allocation2 + $0xc0] sm:$0xf]
    %v1294 = vld [vmem:[#allocation2 + $0xcc] sm:$0xf]
    %v1295 = vld [vmem:[#allocation2 + $0xd8] sm:$0xf]
    %v1296 = vld [vmem:[#allocation2 + $0xe4] sm:$0xf]
    %v1297 = vld [vmem:[#allocation2 + $0xf0] sm:$0xf]
    %v1298 = vld [vmem:[#allocation2 + $0xfc] sm:$0xf]
    %v1299 = vld [vmem:[#allocation2 + $0x108] sm:$0xf]
    %v1300 = vld [vmem:[#allocation2 + $0x114] sm:$0xf]
    %v1301 = vld [vmem:[#allocation2 + $0x120] sm:$0xf]
    %v1302 = vld [vmem:[#allocation2 + $0x12c] sm:$0xf]
    %v1303 = vld [vmem:[#allocation2 + $0x138] sm:$0xf]
    %v1304 = vld [vmem:[#allocation2 + $0x144] sm:$0xf]
    %v1305 = vld [vmem:[#allocation2 + $0x150] sm:$0xf]
    %v1306 = vld [vmem:[#allocation2 + $0x15c] sm:$0xf]
    %v1307 = vld [vmem:[#allocation2 + $0x168] sm:$0xf]
    %v1308 = vld [vmem:[#allocation2 + $0x174] sm:$0xf]
    %v1309 = vpack.c.bf16 %v1292, %v1291
    %v1310 = vld [vmem:[#allocation5 + $0x3] ss:$0 sm:$0xff]
    %v1327 = vunpack.c.l.b16 %v1293
    %v1328 = vunpack.c.l.b16 %v1294
    %v1329 = vunpack.c.l.b16 %v1295
    %v1330 = vunpack.c.l.b16 %v1296
    %v1331 = vunpack.c.l.b16 %v1297
    %v1332 = vunpack.c.l.b16 %v1298
    %v1333 = vunpack.c.l.b16 %v1299
    %v1334 = vunpack.c.l.b16 %v1300
    %v1335 = vunpack.c.l.b16 %v1301
    %v1336 = vunpack.c.l.b16 %v1302
    %v1337 = vunpack.c.l.b16 %v1303
    %v1338 = vunpack.c.l.b16 %v1304
    %v1339 = vunpack.c.l.b16 %v1305
    %v1340 = vunpack.c.l.b16 %v1306
    %v1341 = vunpack.c.l.b16 %v1307
    %v1342 = vunpack.c.l.b16 %v1308
    %v1343 = vpack.c.b16 %v1328, %v1327
    %v1344 = vpack.c.b16 %v1330, %v1329
    %v1345 = vpack.c.b16 %v1332, %v1331
    %v1346 = vpack.c.b16 %v1334, %v1333
    %v1347 = vpack.c.b16 %v1336, %v1335
    %v1348 = vpack.c.b16 %v1338, %v1337
    %v1349 = vpack.c.b16 %v1340, %v1339
    %v1350 = vpack.c.b16 %v1342, %v1341
    %1359 = vmatprep.subr.bf16.mxu0 0
    %1360 = vmatpush1.bf16.msra.mxu0 %v1343
    %1361 = vmatprep.subr.bf16.mxu0 0
    %1362 = vmatpush1.bf16.msra.mxu0 %v1344
    %1363 = vmatprep.subr.bf16.mxu0 0
    %1364 = vmatpush1.bf16.msra.mxu0 %v1345
    %1365 = vmatprep.subr.bf16.mxu0 0
    %1366 = vmatpush1.bf16.msra.mxu0 %v1346
    %1367 = vmatprep.subr.bf16.mxu0 0
    %1368 = vmatpush1.bf16.msra.mxu0 %v1347
    %1369 = vmatprep.subr.bf16.mxu0 0
    %1370 = vmatpush1.bf16.msra.mxu0 %v1348
    %1371 = vmatprep.subr.bf16.mxu0 0
    %1372 = vmatpush1.bf16.msra.mxu0 %v1349
    %1373 = vmatprep.subr.bf16.mxu0 0
    %1374 = vmatpush1.bf16.msra.mxu0 %v1350
    %1375 = vmatprep.subr.bf16.mxu0 0
    %1376 = vmatpush1.bf16.msra.mxu0 0
    %1377 = vmatprep.subr.bf16.mxu0 0
    %1378 = vmatpush1.bf16.msra.mxu0 0
    %1379 = vmatprep.subr.bf16.mxu0 0
    %1380 = vmatpush1.bf16.msra.mxu0 0
    %1381 = vmatprep.subr.bf16.mxu0 0
    %1382 = vmatpush1.bf16.msra.mxu0 0
    %1383 = vmatprep.subr.bf16.mxu0 0
    %1384 = vmatpush1.bf16.msra.mxu0 0
    %1385 = vmatprep.subr.bf16.mxu0 0
    %1386 = vmatpush1.bf16.msra.mxu0 0
    %1387 = vmatprep.subr.bf16.mxu0 0
    %1388 = vmatpush1.bf16.msra.mxu0 0
    %1389 = vmatprep.subr.bf16.mxu0 0
    %1390 = vmatpush1.bf16.msra.mxu0 0
    %1391 = vmatprep.mubr.bf16.mxu0 0
    %1392 = vmatmul.mubr.bf16.gmra.mrb[0].mxu0 %v1309
    %v1393 = vpop.f32.mrb[0].mxu0
    %v1394 = vadd.f32 %v1310, %v1393
    %v1395 = vpop.f32.mrb[0].mxu0
    %v1396 = vpop.f32.mrb[0].mxu0
    %v1397 = vadd.f32 %v1310, %v1396
    %v1398 = vpop.f32.mrb[0].mxu0
    %1399 = vdwg.mxu0
    %v1400 = vadd.f32 %v77, %v1394
    %v1401 = vadd.f32 %v78, %v1397
    %v1402 = vld [vmem:[#allocation5 + $0x4] ss:$0 sm:$0xff]
    %v1403 = vld [vmem:[#allocation5 + $0x5] ss:$0 sm:$0xff]
    %1404 = vadd.xlane.f32.xlu0 %v1400
    %v1405 = vpop.xlane.xlu0 %1404
    %1406 = vadd.xlane.f32.xlu0 %v1401
    %v1407 = vpop.xlane.xlu0 %1406
    %v1408 = vmul.f32 %v1405, %v52
    %v1409 = vmul.f32 %v1407, %v52
    %v1410 = vmul.f32 %v1400, %v1400
    %v1411 = vmul.f32 %v1401, %v1401
    %1412 = vadd.xlane.f32.xlu0 %v1410
    %v1413 = vpop.xlane.xlu0 %1412
    %1414 = vadd.xlane.f32.xlu0 %v1411
    %v1415 = vpop.xlane.xlu0 %1414
    %v1416 = vmul.f32 %v1413, %v52
    %v1417 = vmul.f32 %v1415, %v52
    %v1418 = vmul.f32 %v1408, %v1408
    %v1419 = vmul.f32 %v1409, %v1409
    %v1420 = vsub.f32 %v1416, %v1418
    %v1421 = vsub.f32 %v1417, %v1419
    %v1422 = vsub.f32 %v1400, %v1408
    %v1423 = vsub.f32 %v1401, %v1409
    %v1424 = vadd.f32 %v1420, 1e-12
    %v1425 = vadd.f32 %v1421, 1e-12
    %v1426 = vrsqrt.pop %v1424
    %v1427 = vrsqrt.pop %v1425
    %v1428 = vmul.f32 %v1422, %v1426
    %v1429 = vmul.f32 %v1423, %v1427
    %v1430 = vmul.f32 %v1428, %v1402
    %v1431 = vmul.f32 %v1429, %v1402
    %v1432 = vadd.f32 %v1430, %v1403
    %v1433 = vadd.f32 %v1431, %v1403
    %v1434 = vld [vmem:[#allocation2 + $0x180] sm:$0xff]
    %v1435 = vld [vmem:[#allocation2 + $0x18c] sm:$0xff]
    %v1436 = vld [vmem:[#allocation2 + $0x198] sm:$0xff]
    %v1437 = vld [vmem:[#allocation2 + $0x1a4] sm:$0xff]
    %v1438 = vld [vmem:[#allocation2 + $0x1b0] sm:$0xff]
    %v1439 = vld [vmem:[#allocation2 + $0x1bc] sm:$0xff]
    %v1440 = vld [vmem:[#allocation2 + $0x1c8] sm:$0xff]
    %v1441 = vld [vmem:[#allocation2 + $0x1d4] sm:$0xff]
    %v1442 = vld [vmem:[#allocation2 + $0x1e0] sm:$0xff]
    %v1443 = vld [vmem:[#allocation2 + $0x1ec] sm:$0xff]
    %v1444 = vld [vmem:[#allocation2 + $0x1f8] sm:$0xff]
    %v1445 = vld [vmem:[#allocation2 + $0x204] sm:$0xff]
    %v1446 = vld [vmem:[#allocation2 + $0x210] sm:$0xff]
    %v1447 = vld [vmem:[#allocation2 + $0x21c] sm:$0xff]
    %v1448 = vld [vmem:[#allocation2 + $0x228] sm:$0xff]
    %v1449 = vld [vmem:[#allocation2 + $0x234] sm:$0xff]
    %v1450 = vpack.c.bf16 %v1433, %v1432
    %s1451 = scalar_lea.vmem [#allocation5], 6
    %v1452 = vld [vmem:[%s1451] ss:$8 sm:$0x3]
    %v1454 = vlaneseq
    %v1455 = vshrl.u32 %v1454, 7
    %v1456 = vsub.s32 0, %v1455
    %v1457 = vrot.slane %v1452, %v1456
    %v1458 = vlaneseq
    %v1459 = vshrl.u32 %v1458, 7
    %v1460 = vsub.s32 1, %v1459
    %v1461 = vrot.slane %v1452, %v1460
    %v1480 = vunpack.c.l.b16 %v1434
    %v1481 = vunpack.c.h.b16 %v1434
    %v1482 = vunpack.c.l.b16 %v1435
    %v1483 = vunpack.c.h.b16 %v1435
    %v1484 = vunpack.c.l.b16 %v1436
    %v1485 = vunpack.c.h.b16 %v1436
    %v1486 = vunpack.c.l.b16 %v1437
    %v1487 = vunpack.c.h.b16 %v1437
    %v1488 = vunpack.c.l.b16 %v1438
    %v1489 = vunpack.c.h.b16 %v1438
    %v1490 = vunpack.c.l.b16 %v1439
    %v1491 = vunpack.c.h.b16 %v1439
    %v1492 = vunpack.c.l.b16 %v1440
    %v1493 = vunpack.c.h.b16 %v1440
    %v1494 = vunpack.c.l.b16 %v1441
    %v1495 = vunpack.c.h.b16 %v1441
    %v1496 = vunpack.c.l.b16 %v1442
    %v1497 = vunpack.c.h.b16 %v1442
    %v1498 = vunpack.c.l.b16 %v1443
    %v1499 = vunpack.c.h.b16 %v1443
    %v1500 = vunpack.c.l.b16 %v1444
    %v1501 = vunpack.c.h.b16 %v1444
    %v1502 = vunpack.c.l.b16 %v1445
    %v1503 = vunpack.c.h.b16 %v1445
    %v1504 = vunpack.c.l.b16 %v1446
    %v1505 = vunpack.c.h.b16 %v1446
    %v1506 = vunpack.c.l.b16 %v1447
    %v1507 = vunpack.c.h.b16 %v1447
    %v1508 = vunpack.c.l.b16 %v1448
    %v1509 = vunpack.c.h.b16 %v1448
    %v1510 = vunpack.c.l.b16 %v1449
    %v1511 = vunpack.c.h.b16 %v1449
    %v1512 = vpack.c.b16 %v1482, %v1480
    %v1513 = vpack.c.b16 %v1483, %v1481
    %v1514 = vpack.c.b16 %v1486, %v1484
    %v1515 = vpack.c.b16 %v1487, %v1485
    %v1516 = vpack.c.b16 %v1490, %v1488
    %v1517 = vpack.c.b16 %v1491, %v1489
    %v1518 = vpack.c.b16 %v1494, %v1492
    %v1519 = vpack.c.b16 %v1495, %v1493
    %v1520 = vpack.c.b16 %v1498, %v1496
    %v1521 = vpack.c.b16 %v1499, %v1497
    %v1522 = vpack.c.b16 %v1502, %v1500
    %v1523 = vpack.c.b16 %v1503, %v1501
    %v1524 = vpack.c.b16 %v1506, %v1504
    %v1525 = vpack.c.b16 %v1507, %v1505
    %v1526 = vpack.c.b16 %v1510, %v1508
    %v1527 = vpack.c.b16 %v1511, %v1509
    %1544 = vmatprep.subr.bf16.mxu0 %v1513
    %1545 = vmatpush1.bf16.msra.mxu0 %v1512
    %1546 = vmatprep.subr.bf16.mxu0 %v1515
    %1547 = vmatpush1.bf16.msra.mxu0 %v1514
    %1548 = vmatprep.subr.bf16.mxu0 %v1517
    %1549 = vmatpush1.bf16.msra.mxu0 %v1516
    %1550 = vmatprep.subr.bf16.mxu0 %v1519
    %1551 = vmatpush1.bf16.msra.mxu0 %v1518
    %1552 = vmatprep.subr.bf16.mxu0 %v1521
    %1553 = vmatpush1.bf16.msra.mxu0 %v1520
    %1554 = vmatprep.subr.bf16.mxu0 %v1523
    %1555 = vmatpush1.bf16.msra.mxu0 %v1522
    %1556 = vmatprep.subr.bf16.mxu0 %v1525
    %1557 = vmatpush1.bf16.msra.mxu0 %v1524
    %1558 = vmatprep.subr.bf16.mxu0 %v1527
    %1559 = vmatpush1.bf16.msra.mxu0 %v1526
    %1560 = vmatprep.subr.bf16.mxu0 0
    %1561 = vmatpush1.bf16.msra.mxu0 0
    %1562 = vmatprep.subr.bf16.mxu0 0
    %1563 = vmatpush1.bf16.msra.mxu0 0
    %1564 = vmatprep.subr.bf16.mxu0 0
    %1565 = vmatpush1.bf16.msra.mxu0 0
    %1566 = vmatprep.subr.bf16.mxu0 0
    %1567 = vmatpush1.bf16.msra.mxu0 0
    %1568 = vmatprep.subr.bf16.mxu0 0
    %1569 = vmatpush1.bf16.msra.mxu0 0
    %1570 = vmatprep.subr.bf16.mxu0 0
    %1571 = vmatpush1.bf16.msra.mxu0 0
    %1572 = vmatprep.subr.bf16.mxu0 0
    %1573 = vmatpush1.bf16.msra.mxu0 0
    %1574 = vmatprep.subr.bf16.mxu0 0
    %1575 = vmatpush1.bf16.msra.mxu0 0
    %1576 = vmatprep.mubr.bf16.mxu0 0
    %1577 = vmatmul.mubr.bf16.gmra.mrb[0].mxu0 %v1450
    %v1578 = vpop.f32.mrb[0].mxu0
    %v1579 = vadd.f32 %v1457, %v1578
    %v1580 = vpop.f32.mrb[0].mxu0
    %v1581 = vadd.f32 %v1461, %v1580
    %v1582 = vpop.f32.mrb[0].mxu0
    %v1583 = vadd.f32 %v1457, %v1582
    %v1584 = vpop.f32.mrb[0].mxu0
    %v1585 = vadd.f32 %v1461, %v1584
    %1586 = vdwg.mxu0
    %v1587 = vmul.f32 %v1579, %v1579
    %v1588 = vmul.f32 %v1581, %v1581
    %v1589 = vmul.f32 %v1583, %v1583
    %v1590 = vmul.f32 %v1585, %v1585
    %v1591 = vmul.f32 %v1579, %v1587
    %v1592 = vmul.f32 %v1581, %v1588
    %v1593 = vmul.f32 %v1583, %v1589
    %v1594 = vmul.f32 %v1585, %v1590
    %v1595 = vmul.f32 %v1591, 0.044715
    %v1596 = vmul.f32 %v1592, 0.044715
    %v1597 = vmul.f32 %v1593, 0.044715
    %v1598 = vmul.f32 %v1594, 0.044715
    %v1599 = vadd.f32 %v1579, %v1595
    %v1600 = vadd.f32 %v1581, %v1596
    %v1601 = vadd.f32 %v1583, %v1597
    %v1602 = vadd.f32 %v1585, %v1598
    %v1603 = vmul.f32 %v1599, 0.7978846
    %v1604 = vmul.f32 %v1600, 0.7978846
    %v1605 = vmul.f32 %v1601, 0.7978846
    %v1606 = vmul.f32 %v1602, 0.7978846
    %v1607 = vtanh.pop %v1603
    %v1608 = vtanh.pop %v1604
    %v1609 = vtanh.pop %v1605
    %v1610 = vtanh.pop %v1606
    %v1611 = vadd.f32 %v1607, 1.0
    %v1612 = vadd.f32 %v1608, 1.0
    %v1613 = vadd.f32 %v1609, 1.0
    %v1614 = vadd.f32 %v1610, 1.0
    %v1615 = vmul.f32 %v1611, 0.5
    %v1616 = vmul.f32 %v1612, 0.5
    %v1617 = vmul.f32 %v1613, 0.5
    %v1618 = vmul.f32 %v1614, 0.5
    %v1619 = vmul.f32 %v1579, %v1615
    %v1620 = vmul.f32 %v1581, %v1616
    %v1621 = vmul.f32 %v1583, %v1617
    %v1622 = vmul.f32 %v1585, %v1618
    %v1623 = vld [vmem:[#allocation2 + $0x240] sm:$0xf]
    %v1624 = vld [vmem:[#allocation2 + $0x24c] sm:$0xf]
    %v1625 = vld [vmem:[#allocation2 + $0x258] sm:$0xf]
    %v1626 = vld [vmem:[#allocation2 + $0x264] sm:$0xf]
    %v1627 = vld [vmem:[#allocation2 + $0x270] sm:$0xf]
    %v1628 = vld [vmem:[#allocation2 + $0x27c] sm:$0xf]
    %v1629 = vld [vmem:[#allocation2 + $0x288] sm:$0xf]
    %v1630 = vld [vmem:[#allocation2 + $0x294] sm:$0xf]
    %v1631 = vld [vmem:[#allocation2 + $0x2a0] sm:$0xf]
    %v1632 = vld [vmem:[#allocation2 + $0x2ac] sm:$0xf]
    %v1633 = vld [vmem:[#allocation2 + $0x2b8] sm:$0xf]
    %v1634 = vld [vmem:[#allocation2 + $0x2c4] sm:$0xf]
    %v1635 = vld [vmem:[#allocation2 + $0x2d0] sm:$0xf]
    %v1636 = vld [vmem:[#allocation2 + $0x2dc] sm:$0xf]
    %v1637 = vld [vmem:[#allocation2 + $0x2e8] sm:$0xf]
    %v1638 = vld [vmem:[#allocation2 + $0x2f4] sm:$0xf]
    %v1639 = vld [vmem:[#allocation2 + $0x300] sm:$0xf]
    %v1640 = vld [vmem:[#allocation2 + $0x30c] sm:$0xf]
    %v1641 = vld [vmem:[#allocation2 + $0x318] sm:$0xf]
    %v1642 = vld [vmem:[#allocation2 + $0x324] sm:$0xf]
    %v1643 = vld [vmem:[#allocation2 + $0x330] sm:$0xf]
    %v1644 = vld [vmem:[#allocation2 + $0x33c] sm:$0xf]
    %v1645 = vld [vmem:[#allocation2 + $0x348] sm:$0xf]
    %v1646 = vld [vmem:[#allocation2 + $0x354] sm:$0xf]
    %v1647 = vld [vmem:[#allocation2 + $0x360] sm:$0xf]
    %v1648 = vld [vmem:[#allocation2 + $0x36c] sm:$0xf]
    %v1649 = vld [vmem:[#allocation2 + $0x378] sm:$0xf]
    %v1650 = vld [vmem:[#allocation2 + $0x384] sm:$0xf]
    %v1651 = vld [vmem:[#allocation2 + $0x390] sm:$0xf]
    %v1652 = vld [vmem:[#allocation2 + $0x39c] sm:$0xf]
    %v1653 = vld [vmem:[#allocation2 + $0x3a8] sm:$0xf]
    %v1654 = vld [vmem:[#allocation2 + $0x3b4] sm:$0xf]
    %v1655 = vpack.c.bf16 %v1621, %v1619
    %v1656 = vpack.c.bf16 %v1622, %v1620
    %v1657 = vld [vmem:[#allocation5 + $0x7] ss:$0 sm:$0xff]
    %v1690 = vunpack.c.l.b16 %v1623
    %v1691 = vunpack.c.l.b16 %v1624
    %v1692 = vunpack.c.l.b16 %v1625
    %v1693 = vunpack.c.l.b16 %v1626
    %v1694 = vunpack.c.l.b16 %v1627
    %v1695 = vunpack.c.l.b16 %v1628
    %v1696 = vunpack.c.l.b16 %v1629
    %v1697 = vunpack.c.l.b16 %v1630
    %v1698 = vunpack.c.l.b16 %v1631
    %v1699 = vunpack.c.l.b16 %v1632
    %v1700 = vunpack.c.l.b16 %v1633
    %v1701 = vunpack.c.l.b16 %v1634
    %v1702 = vunpack.c.l.b16 %v1635
    %v1703 = vunpack.c.l.b16 %v1636
    %v1704 = vunpack.c.l.b16 %v1637
    %v1705 = vunpack.c.l.b16 %v1638
    %v1706 = vunpack.c.l.b16 %v1639
    %v1707 = vunpack.c.l.b16 %v1640
    %v1708 = vunpack.c.l.b16 %v1641
    %v1709 = vunpack.c.l.b16 %v1642
    %v1710 = vunpack.c.l.b16 %v1643
    %v1711 = vunpack.c.l.b16 %v1644
    %v1712 = vunpack.c.l.b16 %v1645
    %v1713 = vunpack.c.l.b16 %v1646
    %v1714 = vunpack.c.l.b16 %v1647
    %v1715 = vunpack.c.l.b16 %v1648
    %v1716 = vunpack.c.l.b16 %v1649
    %v1717 = vunpack.c.l.b16 %v1650
    %v1718 = vunpack.c.l.b16 %v1651
    %v1719 = vunpack.c.l.b16 %v1652
    %v1720 = vunpack.c.l.b16 %v1653
    %v1721 = vunpack.c.l.b16 %v1654
    %v1722 = vpack.c.b16 %v1691, %v1690
    %v1723 = vpack.c.b16 %v1693, %v1692
    %v1724 = vpack.c.b16 %v1695, %v1694
    %v1725 = vpack.c.b16 %v1697, %v1696
    %v1726 = vpack.c.b16 %v1699, %v1698
    %v1727 = vpack.c.b16 %v1701, %v1700
    %v1728 = vpack.c.b16 %v1703, %v1702
    %v1729 = vpack.c.b16 %v1705, %v1704
    %v1730 = vpack.c.b16 %v1707, %v1706
    %v1731 = vpack.c.b16 %v1709, %v1708
    %v1732 = vpack.c.b16 %v1711, %v1710
    %v1733 = vpack.c.b16 %v1713, %v1712
    %v1734 = vpack.c.b16 %v1715, %v1714
    %v1735 = vpack.c.b16 %v1717, %v1716
    %v1736 = vpack.c.b16 %v1719, %v1718
    %v1737 = vpack.c.b16 %v1721, %v1720
    %1754 = vmatprep.subr.bf16.mxu0 0
    %1755 = vmatpush1.bf16.msra.mxu0 %v1722
    %1756 = vmatprep.subr.bf16.mxu0 0
    %1757 = vmatpush1.bf16.msra.mxu0 %v1723
    %1758 = vmatprep.subr.bf16.mxu0 0
    %1759 = vmatpush1.bf16.msra.mxu0 %v1724
    %1760 = vmatprep.subr.bf16.mxu0 0
    %1761 = vmatpush1.bf16.msra.mxu0 %v1725
    %1762 = vmatprep.subr.bf16.mxu0 0
    %1763 = vmatpush1.bf16.msra.mxu0 %v1726
    %1764 = vmatprep.subr.bf16.mxu0 0
    %1765 = vmatpush1.bf16.msra.mxu0 %v1727
    %1766 = vmatprep.subr.bf16.mxu0 0
    %1767 = vmatpush1.bf16.msra.mxu0 %v1728
    %1768 = vmatprep.subr.bf16.mxu0 0
    %1769 = vmatpush1.bf16.msra.mxu0 %v1729
    %1770 = vmatprep.subr.bf16.mxu0 0
    %1771 = vmatpush1.bf16.msra.mxu0 %v1730
    %1772 = vmatprep.subr.bf16.mxu0 0
    %1773 = vmatpush1.bf16.msra.mxu0 %v1731
    %1774 = vmatprep.subr.bf16.mxu0 0
    %1775 = vmatpush1.bf16.msra.mxu0 %v1732
    %1776 = vmatprep.subr.bf16.mxu0 0
    %1777 = vmatpush1.bf16.msra.mxu0 %v1733
    %1778 = vmatprep.subr.bf16.mxu0 0
    %1779 = vmatpush1.bf16.msra.mxu0 %v1734
    %1780 = vmatprep.subr.bf16.mxu0 0
    %1781 = vmatpush1.bf16.msra.mxu0 %v1735
    %1782 = vmatprep.subr.bf16.mxu0 0
    %1783 = vmatpush1.bf16.msra.mxu0 %v1736
    %1784 = vmatprep.subr.bf16.mxu0 0
    %1785 = vmatpush1.bf16.msra.mxu0 %v1737
    %1786 = vmatprep.mubr.bf16.mxu0 %v1656
    %1787 = vmatmul.mubr.bf16.gmra.mrb[0].mxu0 %v1655
    %v1788 = vpop.f32.mrb[0].mxu0
    %v1789 = vadd.f32 %v1657, %v1788
    %v1790 = vpop.f32.mrb[0].mxu0
    %v1791 = vpop.f32.mrb[0].mxu0
    %v1792 = vadd.f32 %v1657, %v1791
    %v1793 = vpop.f32.mrb[0].mxu0
    %1794 = vdwg.mxu0
    %v1795 = vadd.f32 %v1432, %v1789
    %v1796 = vadd.f32 %v1433, %v1792
    %v1797 = vld [vmem:[#allocation5 + $0x18] ss:$0 sm:$0xff]
    %v1798 = vld [vmem:[#allocation5 + $0x19] ss:$0 sm:$0xff]
    %1799 = vadd.xlane.f32.xlu0 %v1795
    %v1800 = vpop.xlane.xlu0 %1799
    %1801 = vadd.xlane.f32.xlu0 %v1796
    %v1802 = vpop.xlane.xlu0 %1801
    %v1803 = vmul.f32 %v1800, %v52
    %v1804 = vmul.f32 %v1802, %v52
    %v1805 = vmul.f32 %v1795, %v1795
    %v1806 = vmul.f32 %v1796, %v1796
    %1807 = vadd.xlane.f32.xlu0 %v1805
    %v1808 = vpop.xlane.xlu0 %1807
    %1809 = vadd.xlane.f32.xlu0 %v1806
    %v1810 = vpop.xlane.xlu0 %1809
    %v1811 = vmul.f32 %v1808, %v52
    %v1812 = vmul.f32 %v1810, %v52
    %v1813 = vmul.f32 %v1803, %v1803
    %v1814 = vmul.f32 %v1804, %v1804
    %v1815 = vsub.f32 %v1811, %v1813
    %v1816 = vsub.f32 %v1812, %v1814
    %v1817 = vsub.f32 %v1795, %v1803
    %v1818 = vsub.f32 %v1796, %v1804
    %v1819 = vadd.f32 %v1815, 1e-12
    %v1820 = vadd.f32 %v1816, 1e-12
    %v1821 = vrsqrt.pop %v1819
    %v1822 = vrsqrt.pop %v1820
    %v1823 = vmul.f32 %v1817, %v1821
    %v1824 = vmul.f32 %v1818, %v1822
    %v1825 = vmul.f32 %v1823, %v1797
    %v1826 = vmul.f32 %v1824, %v1797
    %v1827 = vadd.f32 %v1825, %v1798
    %v1828 = vadd.f32 %v1826, %v1798
    %v1829 = vld [vmem:[#allocation2 + $0x3c0] sm:$0xff]
    %v1830 = vld [vmem:[#allocation2 + $0x3c8] sm:$0xf]
    %v1831 = vld [vmem:[#allocation2 + $0x3cc] sm:$0xff]
    %v1832 = vld [vmem:[#allocation2 + $0x3d4] sm:$0xf]
    %v1833 = vld [vmem:[#allocation2 + $0x3d8] sm:$0xff]
    %v1834 = vld [vmem:[#allocation2 + $0x3e0] sm:$0xf]
    %v1835 = vld [vmem:[#allocation2 + $0x3e4] sm:$0xff]
    %v1836 = vld [vmem:[#allocation2 + $0x3ec] sm:$0xf]
    %v1837 = vld [vmem:[#allocation2 + $0x3f0] sm:$0xff]
    %v1838 = vld [vmem:[#allocation2 + $0x3f8] sm:$0xf]
    %v1839 = vld [vmem:[#allocation2 + $0x3fc] sm:$0xff]
    %v1840 = vld [vmem:[#allocation2 + $0x404] sm:$0xf]
    %v1841 = vld [vmem:[#allocation2 + $0x408] sm:$0xff]
    %v1842 = vld [vmem:[#allocation2 + $0x410] sm:$0xf]
    %v1843 = vld [vmem:[#allocation2 + $0x414] sm:$0xff]
    %v1844 = vld [vmem:[#allocation2 + $0x41c] sm:$0xf]
    %v1845 = vld [vmem:[#allocation2 + $0x420] sm:$0xff]
    %v1846 = vld [vmem:[#allocation2 + $0x428] sm:$0xf]
    %v1847 = vld [vmem:[#allocation2 + $0x42c] sm:$0xff]
    %v1848 = vld [vmem:[#allocation2 + $0x434] sm:$0xf]
    %v1849 = vld [vmem:[#allocation2 + $0x438] sm:$0xff]
    %v1850 = vld [vmem:[#allocation2 + $0x440] sm:$0xf]
    %v1851 = vld [vmem:[#allocation2 + $0x444] sm:$0xff]
    %v1852 = vld [vmem:[#allocation2 + $0x44c] sm:$0xf]
    %v1853 = vld [vmem:[#allocation2 + $0x450] sm:$0xff]
    %v1854 = vld [vmem:[#allocation2 + $0x458] sm:$0xf]
    %v1855 = vld [vmem:[#allocation2 + $0x45c] sm:$0xff]
    %v1856 = vld [vmem:[#allocation2 + $0x464] sm:$0xf]
    %v1857 = vld [vmem:[#allocation2 + $0x468] sm:$0xff]
    %v1858 = vld [vmem:[#allocation2 + $0x470] sm:$0xf]
    %v1859 = vld [vmem:[#allocation2 + $0x474] sm:$0xff]
    %v1860 = vld [vmem:[#allocation2 + $0x47c] sm:$0xf]
    %v1861 = vpack.c.bf16 %v1828, %v1827
    %s1862 = scalar_lea.vmem [#allocation5], 26
    %v1863 = vld [vmem:[%s1862] ss:$8 sm:$0x7]
    %v1865 = vlaneseq
    %v1866 = vshrl.u32 %v1865, 7
    %v1867 = vsub.s32 0, %v1866
    %v1868 = vrot.slane %v1863, %v1867
    %v1869 = vlaneseq
    %v1870 = vshrl.u32 %v1869, 7
    %v1871 = vsub.s32 1, %v1870
    %v1872 = vrot.slane %v1863, %v1871
    %v1873 = vlaneseq
    %v1874 = vshrl.u32 %v1873, 7
    %v1875 = vsub.s32 2, %v1874
    %v1876 = vrot.slane %v1863, %v1875
    %v1912 = vunpack.c.l.b16 %v1829
    %v1913 = vunpack.c.h.b16 %v1829
    %v1914 = vunpack.c.l.b16 %v1830
    %v1915 = vunpack.c.l.b16 %v1831
    %v1916 = vunpack.c.h.b16 %v1831
    %v1917 = vunpack.c.l.b16 %v1832
    %v1918 = vunpack.c.l.b16 %v1833
    %v1919 = vunpack.c.h.b16 %v1833
    %v1920 = vunpack.c.l.b16 %v1834
    %v1921 = vunpack.c.l.b16 %v1835
    %v1922 = vunpack.c.h.b16 %v1835
    %v1923 = vunpack.c.l.b16 %v1836
    %v1924 = vunpack.c.l.b16 %v1837
    %v1925 = vunpack.c.h.b16 %v1837
    %v1926 = vunpack.c.l.b16 %v1838
    %v1927 = vunpack.c.l.b16 %v1839
    %v1928 = vunpack.c.h.b16 %v1839
    %v1929 = vunpack.c.l.b16 %v1840
    %v1930 = vunpack.c.l.b16 %v1841
    %v1931 = vunpack.c.h.b16 %v1841
    %v1932 = vunpack.c.l.b16 %v1842
    %v1933 = vunpack.c.l.b16 %v1843
    %v1934 = vunpack.c.h.b16 %v1843
    %v1935 = vunpack.c.l.b16 %v1844
    %v1936 = vunpack.c.l.b16 %v1845
    %v1937 = vunpack.c.h.b16 %v1845
    %v1938 = vunpack.c.l.b16 %v1846
    %v1939 = vunpack.c.l.b16 %v1847
    %v1940 = vunpack.c.h.b16 %v1847
    %v1941 = vunpack.c.l.b16 %v1848
    %v1942 = vunpack.c.l.b16 %v1849
    %v1943 = vunpack.c.h.b16 %v1849
    %v1944 = vunpack.c.l.b16 %v1850
    %v1945 = vunpack.c.l.b16 %v1851
    %v1946 = vunpack.c.h.b16 %v1851
    %v1947 = vunpack.c.l.b16 %v1852
    %v1948 = vunpack.c.l.b16 %v1853
    %v1949 = vunpack.c.h.b16 %v1853
    %v1950 = vunpack.c.l.b16 %v1854
    %v1951 = vunpack.c.l.b16 %v1855
    %v1952 = vunpack.c.h.b16 %v1855
    %v1953 = vunpack.c.l.b16 %v1856
    %v1954 = vunpack.c.l.b16 %v1857
    %v1955 = vunpack.c.h.b16 %v1857
    %v1956 = vunpack.c.l.b16 %v1858
    %v1957 = vunpack.c.l.b16 %v1859
    %v1958 = vunpack.c.h.b16 %v1859
    %v1959 = vunpack.c.l.b16 %v1860
    %v1960 = vpack.c.b16 %v1915, %v1912
    %v1961 = vpack.c.b16 %v1916, %v1913
    %v1962 = vpack.c.b16 %v1917, %v1914
    %v1963 = vpack.c.b16 %v1921, %v1918
    %v1964 = vpack.c.b16 %v1922, %v1919
    %v1965 = vpack.c.b16 %v1923, %v1920
    %v1966 = vpack.c.b16 %v1927, %v1924
    %v1967 = vpack.c.b16 %v1928, %v1925
    %v1968 = vpack.c.b16 %v1929, %v1926
    %v1969 = vpack.c.b16 %v1933, %v1930
    %v1970 = vpack.c.b16 %v1934, %v1931
    %v1971 = vpack.c.b16 %v1935, %v1932
    %v1972 = vpack.c.b16 %v1939, %v1936
    %v1973 = vpack.c.b16 %v1940, %v1937
    %v1974 = vpack.c.b16 %v1941, %v1938
    %v1975 = vpack.c.b16 %v1945, %v1942
    %v1976 = vpack.c.b16 %v1946, %v1943
    %v1977 = vpack.c.b16 %v1947, %v1944
    %v1978 = vpack.c.b16 %v1951, %v1948
    %v1979 = vpack.c.b16 %v1952, %v1949
    %v1980 = vpack.c.b16 %v1953, %v1950
    %v1981 = vpack.c.b16 %v1957, %v1954
    %v1982 = vpack.c.b16 %v1958, %v1955
    %v1983 = vpack.c.b16 %v1959, %v1956
    %2008 = vmatprep.subr.bf16.mxu0 %v1961
    %2009 = vmatpush1.bf16.msra.mxu0 %v1960
    %2010 = vmatprep.subr.bf16.mxu0 %v1964
    %2011 = vmatpush1.bf16.msra.mxu0 %v1963
    %2012 = vmatprep.subr.bf16.mxu0 %v1967
    %2013 = vmatpush1.bf16.msra.mxu0 %v1966
    %2014 = vmatprep.subr.bf16.mxu0 %v1970
    %2015 = vmatpush1.bf16.msra.mxu0 %v1969
    %2016 = vmatprep.subr.bf16.mxu0 %v1973
    %2017 = vmatpush1.bf16.msra.mxu0 %v1972
    %2018 = vmatprep.subr.bf16.mxu0 %v1976
    %2019 = vmatpush1.bf16.msra.mxu0 %v1975
    %2020 = vmatprep.subr.bf16.mxu0 %v1979
    %2021 = vmatpush1.bf16.msra.mxu0 %v1978
    %2022 = vmatprep.subr.bf16.mxu0 %v1982
    %2023 = vmatpush1.bf16.msra.mxu0 %v1981
    %2024 = vmatprep.subr.bf16.mxu0 0
    %2025 = vmatpush1.bf16.msra.mxu0 0
    %2026 = vmatprep.subr.bf16.mxu0 0
    %2027 = vmatpush1.bf16.msra.mxu0 0
    %2028 = vmatprep.subr.bf16.mxu0 0
    %2029 = vmatpush1.bf16.msra.mxu0 0
    %2030 = vmatprep.subr.bf16.mxu0 0
    %2031 = vmatpush1.bf16.msra.mxu0 0
    %2032 = vmatprep.subr.bf16.mxu0 0
    %2033 = vmatpush1.bf16.msra.mxu0 0
    %2034 = vmatprep.subr.bf16.mxu0 0
    %2035 = vmatpush1.bf16.msra.mxu0 0
    %2036 = vmatprep.subr.bf16.mxu0 0
    %2037 = vmatpush1.bf16.msra.mxu0 0
    %2038 = vmatprep.subr.bf16.mxu0 0
    %2039 = vmatpush1.bf16.msra.mxu0 0
    %2040 = vmatprep.mubr.bf16.mxu0 0
    %2041 = vmatmul.mubr.bf16.gmra.mrb[0].mxu0 %v1861
    %v2042 = vpop.f32.mrb[0].mxu0
    %v2043 = vadd.f32 %v1868, %v2042
    %v2044 = vpop.f32.mrb[0].mxu0
    %v2045 = vadd.f32 %v1872, %v2044
    %v2046 = vpop.f32.mrb[0].mxu0
    %v2047 = vadd.f32 %v1868, %v2046
    %v2048 = vpop.f32.mrb[0].mxu0
    %v2049 = vadd.f32 %v1872, %v2048
    %2050 = vdwg.mxu0
    %2051 = vmatprep.subr.bf16.mxu0 0
    %2052 = vmatpush1.bf16.msra.mxu0 %v1962
    %2053 = vmatprep.subr.bf16.mxu0 0
    %2054 = vmatpush1.bf16.msra.mxu0 %v1965
    %2055 = vmatprep.subr.bf16.mxu0 0
    %2056 = vmatpush1.bf16.msra.mxu0 %v1968
    %2057 = vmatprep.subr.bf16.mxu0 0
    %2058 = vmatpush1.bf16.msra.mxu0 %v1971
    %2059 = vmatprep.subr.bf16.mxu0 0
    %2060 = vmatpush1.bf16.msra.mxu0 %v1974
    %2061 = vmatprep.subr.bf16.mxu0 0
    %2062 = vmatpush1.bf16.msra.mxu0 %v1977
    %2063 = vmatprep.subr.bf16.mxu0 0
    %2064 = vmatpush1.bf16.msra.mxu0 %v1980
    %2065 = vmatprep.subr.bf16.mxu0 0
    %2066 = vmatpush1.bf16.msra.mxu0 %v1983
    %2067 = vmatprep.subr.bf16.mxu0 0
    %2068 = vmatpush1.bf16.msra.mxu0 0
    %2069 = vmatprep.subr.bf16.mxu0 0
    %2070 = vmatpush1.bf16.msra.mxu0 0
    %2071 = vmatprep.subr.bf16.mxu0 0
    %2072 = vmatpush1.bf16.msra.mxu0 0
    %2073 = vmatprep.subr.bf16.mxu0 0
    %2074 = vmatpush1.bf16.msra.mxu0 0
    %2075 = vmatprep.subr.bf16.mxu0 0
    %2076 = vmatpush1.bf16.msra.mxu0 0
    %2077 = vmatprep.subr.bf16.mxu0 0
    %2078 = vmatpush1.bf16.msra.mxu0 0
    %2079 = vmatprep.subr.bf16.mxu0 0
    %2080 = vmatpush1.bf16.msra.mxu0 0
    %2081 = vmatprep.subr.bf16.mxu0 0
    %2082 = vmatpush1.bf16.msra.mxu0 0
    %2083 = vmatprep.mubr.bf16.mxu0 0
    %2084 = vmatmul.mubr.bf16.gmra.mrb[0].mxu0 %v1861
    %v2085 = vpop.f32.mrb[0].mxu0
    %v2086 = vadd.f32 %v1876, %v2085
    %v2087 = vpop.f32.mrb[0].mxu0
    %v2088 = vpop.f32.mrb[0].mxu0
    %v2089 = vadd.f32 %v1876, %v2088
    %v2090 = vpop.f32.mrb[0].mxu0
    %2091 = vdwg.mxu0
    %2094 = vrot.lane.b32.xlu0 %v2043, 96
    %v2095 = vpop.permute.xlu0 %2094
    %2096 = vrot.lane.b32.xlu0 %v2047, 96
    %v2097 = vpop.permute.xlu0 %2096
    %2100 = vrot.lane.b32.xlu0 %v2043, 64
    %v2101 = vpop.permute.xlu0 %2100
    %2102 = vrot.lane.b32.xlu0 %v2047, 64
    %v2103 = vpop.permute.xlu0 %2102
    %2106 = vrot.lane.b32.xlu0 %v2043, 32
    %v2107 = vpop.permute.xlu0 %2106
    %2108 = vrot.lane.b32.xlu0 %v2047, 32
    %v2109 = vpop.permute.xlu0 %2108
    %v2112 = vpack.c.bf16 %v2043, %v2043
    %v2113 = vpack.c.bf16 %v2047, %v2047
    %v2114 = vpack.c.bf16 %v2095, %v2095
    %v2115 = vpack.c.bf16 %v2097, %v2097
    %v2116 = vpack.c.bf16 %v2101, %v2101
    %v2117 = vpack.c.bf16 %v2103, %v2103
    %v2118 = vpack.c.bf16 %v2107, %v2107
    %v2119 = vpack.c.bf16 %v2109, %v2109
    %2122 = vrot.lane.b32.xlu0 %v2045, 96
    %v2123 = vpop.permute.xlu0 %2122
    %2124 = vrot.lane.b32.xlu0 %v2049, 96
    %v2125 = vpop.permute.xlu0 %2124
    %2128 = vrot.lane.b32.xlu0 %v2045, 64
    %v2129 = vpop.permute.xlu0 %2128
    %2130 = vrot.lane.b32.xlu0 %v2049, 64
    %v2131 = vpop.permute.xlu0 %2130
    %2134 = vrot.lane.b32.xlu0 %v2045, 32
    %v2135 = vpop.permute.xlu0 %2134
    %2136 = vrot.lane.b32.xlu0 %v2049, 32
    %v2137 = vpop.permute.xlu0 %2136
    %v2140 = vpack.c.bf16 %v2045, %v2045
    %v2141 = vpack.c.bf16 %v2049, %v2049
    %v2142 = vpack.c.bf16 %v2123, %v2123
    %v2143 = vpack.c.bf16 %v2125, %v2125
    %v2144 = vpack.c.bf16 %v2129, %v2129
    %v2145 = vpack.c.bf16 %v2131, %v2131
    %v2146 = vpack.c.bf16 %v2135, %v2135
    %v2147 = vpack.c.bf16 %v2137, %v2137
    %2150 = vrot.lane.b32.xlu0 %v2086, 96
    %v2151 = vpop.permute.xlu0 %2150
    %2152 = vrot.lane.b32.xlu0 %v2089, 96
    %v2153 = vpop.permute.xlu0 %2152
    %2156 = vrot.lane.b32.xlu0 %v2086, 64
    %v2157 = vpop.permute.xlu0 %2156
    %2158 = vrot.lane.b32.xlu0 %v2089, 64
    %v2159 = vpop.permute.xlu0 %2158
    %2162 = vrot.lane.b32.xlu0 %v2086, 32
    %v2163 = vpop.permute.xlu0 %2162
    %2164 = vrot.lane.b32.xlu0 %v2089, 32
    %v2165 = vpop.permute.xlu0 %2164
    %v2168 = vpack.c.bf16 %v2086, %v2086
    %v2169 = vpack.c.bf16 %v2089, %v2089
    %v2170 = vpack.c.bf16 %v2151, %v2151
    %v2171 = vpack.c.bf16 %v2153, %v2153
    %v2172 = vpack.c.bf16 %v2157, %v2157
    %v2173 = vpack.c.bf16 %v2159, %v2159
    %v2174 = vpack.c.bf16 %v2163, %v2163
    %v2175 = vpack.c.bf16 %v2165, %v2165
    %v2177 = vsel %vm426, %v2112, 0
    %v2180 = vsel %vm426, %v2140, 0
    %2182 = vmatprep.subr.bf16.mxu0 0
    %2183 = vmatpush1.bf16.xpose.msra.mxu0 %v2180
    %2184 = vmatprep.subr.bf16.mxu0 0
    %2185 = vmatpush1.bf16.xpose.msra.mxu0 0
    %2186 = vmatprep.subr.bf16.mxu0 0
    %2187 = vmatpush1.bf16.xpose.msra.mxu0 0
    %2188 = vmatprep.subr.bf16.mxu0 0
    %2189 = vmatpush1.bf16.xpose.msra.mxu0 0
    %2190 = vmatprep.subr.bf16.mxu0 0
    %2191 = vmatpush1.bf16.xpose.msra.mxu0 0
    %2192 = vmatprep.subr.bf16.mxu0 0
    %2193 = vmatpush1.bf16.xpose.msra.mxu0 0
    %2194 = vmatprep.subr.bf16.mxu0 0
    %2195 = vmatpush1.bf16.xpose.msra.mxu0 0
    %2196 = vmatprep.subr.bf16.mxu0 0
    %2197 = vmatpush1.bf16.xpose.msra.mxu0 0
    %2198 = vmatprep.subr.bf16.mxu0 0
    %2199 = vmatpush1.bf16.xpose.msra.mxu0 0
    %2200 = vmatprep.subr.bf16.mxu0 0
    %2201 = vmatpush1.bf16.xpose.msra.mxu0 0
    %2202 = vmatprep.subr.bf16.mxu0 0
    %2203 = vmatpush1.bf16.xpose.msra.mxu0 0
    %2204 = vmatprep.subr.bf16.mxu0 0
    %2205 = vmatpush1.bf16.xpose.msra.mxu0 0
    %2206 = vmatprep.subr.bf16.mxu0 0
    %2207 = vmatpush1.bf16.xpose.msra.mxu0 0
    %2208 = vmatprep.subr.bf16.mxu0 0
    %2209 = vmatpush1.bf16.xpose.msra.mxu0 0
    %2210 = vmatprep.subr.bf16.mxu0 0
    %2211 = vmatpush1.bf16.xpose.msra.mxu0 0
    %2212 = vmatprep.subr.bf16.mxu0 0
    %2213 = vmatpush1.bf16.xpose.msra.mxu0 0
    %2214 = vmatprep.mubr.bf16.mxu0 0
    %2215 = vmatmul.mubr.bf16.gmra.mrb[0].mxu0 %v2177
    %v2216 = vpop.f32.mrb[0].mxu0
    %v2217 = vadd.f32 0.0, %v2216
    %v2218 = vpop.f32.mrb[0].mxu0
    %v2219 = vpop.f32.mrb[0].mxu0
    %v2220 = vpop.f32.mrb[0].mxu0
    %2221 = vdwg.mxu0
    %v2223 = vsel %vm426, %v2113, 0
    %v2226 = vsel %vm426, %v2141, 0
    %2228 = vmatprep.subr.bf16.mxu0 0
    %2229 = vmatpush1.bf16.xpose.msra.mxu0 %v2226
    %2230 = vmatprep.subr.bf16.mxu0 0
    %2231 = vmatpush1.bf16.xpose.msra.mxu0 0
    %2232 = vmatprep.subr.bf16.mxu0 0
    %2233 = vmatpush1.bf16.xpose.msra.mxu0 0
    %2234 = vmatprep.subr.bf16.mxu0 0
    %2235 = vmatpush1.bf16.xpose.msra.mxu0 0
    %2236 = vmatprep.subr.bf16.mxu0 0
    %2237 = vmatpush1.bf16.xpose.msra.mxu0 0
    %2238 = vmatprep.subr.bf16.mxu0 0
    %2239 = vmatpush1.bf16.xpose.msra.mxu0 0
    %2240 = vmatprep.subr.bf16.mxu0 0
    %2241 = vmatpush1.bf16.xpose.msra.mxu0 0
    %2242 = vmatprep.subr.bf16.mxu0 0
    %2243 = vmatpush1.bf16.xpose.msra.mxu0 0
    %2244 = vmatprep.subr.bf16.mxu0 0
    %2245 = vmatpush1.bf16.xpose.msra.mxu0 0
    %2246 = vmatprep.subr.bf16.mxu0 0
    %2247 = vmatpush1.bf16.xpose.msra.mxu0 0
    %2248 = vmatprep.subr.bf16.mxu0 0
    %2249 = vmatpush1.bf16.xpose.msra.mxu0 0
    %2250 = vmatprep.subr.bf16.mxu0 0
    %2251 = vmatpush1.bf16.xpose.msra.mxu0 0
    %2252 = vmatprep.subr.bf16.mxu0 0
    %2253 = vmatpush1.bf16.xpose.msra.mxu0 0
    %2254 = vmatprep.subr.bf16.mxu0 0
    %2255 = vmatpush1.bf16.xpose.msra.mxu0 0
    %2256 = vmatprep.subr.bf16.mxu0 0
    %2257 = vmatpush1.bf16.xpose.msra.mxu0 0
    %2258 = vmatprep.subr.bf16.mxu0 0
    %2259 = vmatpush1.bf16.xpose.msra.mxu0 0
    %2260 = vmatprep.mubr.bf16.mxu0 0
    %2261 = vmatmul.mubr.bf16.gmra.mrb[0].mxu0 %v2223
    %v2262 = vpop.f32.mrb[0].mxu0
    %v2263 = vadd.f32 0.0, %v2262
    %v2264 = vpop.f32.mrb[0].mxu0
    %v2265 = vpop.f32.mrb[0].mxu0
    %v2266 = vpop.f32.mrb[0].mxu0
    %2267 = vdwg.mxu0
    %v2269 = vsel %vm426, %v2114, 0
    %v2272 = vsel %vm426, %v2142, 0
    %2274 = vmatprep.subr.bf16.mxu0 0
    %2275 = vmatpush1.bf16.xpose.msra.mxu0 %v2272
    %2276 = vmatprep.subr.bf16.mxu0 0
    %2277 = vmatpush1.bf16.xpose.msra.mxu0 0
    %2278 = vmatprep.subr.bf16.mxu0 0
    %2279 = vmatpush1.bf16.xpose.msra.mxu0 0
    %2280 = vmatprep.subr.bf16.mxu0 0
    %2281 = vmatpush1.bf16.xpose.msra.mxu0 0
    %2282 = vmatprep.subr.bf16.mxu0 0
    %2283 = vmatpush1.bf16.xpose.msra.mxu0 0
    %2284 = vmatprep.subr.bf16.mxu0 0
    %2285 = vmatpush1.bf16.xpose.msra.mxu0 0
    %2286 = vmatprep.subr.bf16.mxu0 0
    %2287 = vmatpush1.bf16.xpose.msra.mxu0 0
    %2288 = vmatprep.subr.bf16.mxu0 0
    %2289 = vmatpush1.bf16.xpose.msra.mxu0 0
    %2290 = vmatprep.subr.bf16.mxu0 0
    %2291 = vmatpush1.bf16.xpose.msra.mxu0 0
    %2292 = vmatprep.subr.bf16.mxu0 0
    %2293 = vmatpush1.bf16.xpose.msra.mxu0 0
    %2294 = vmatprep.subr.bf16.mxu0 0
    %2295 = vmatpush1.bf16.xpose.msra.mxu0 0
    %2296 = vmatprep.subr.bf16.mxu0 0
    %2297 = vmatpush1.bf16.xpose.msra.mxu0 0
    %2298 = vmatprep.subr.bf16.mxu0 0
    %2299 = vmatpush1.bf16.xpose.msra.mxu0 0
    %2300 = vmatprep.subr.bf16.mxu0 0
    %2301 = vmatpush1.bf16.xpose.msra.mxu0 0
    %2302 = vmatprep.subr.bf16.mxu0 0
    %2303 = vmatpush1.bf16.xpose.msra.mxu0 0
    %2304 = vmatprep.subr.bf16.mxu0 0
    %2305 = vmatpush1.bf16.xpose.msra.mxu0 0
    %2306 = vmatprep.mubr.bf16.mxu0 0
    %2307 = vmatmul.mubr.bf16.gmra.mrb[0].mxu0 %v2269
    %v2308 = vpop.f32.mrb[0].mxu0
    %v2309 = vadd.f32 0.0, %v2308
    %v2310 = vpop.f32.mrb[0].mxu0
    %v2311 = vpop.f32.mrb[0].mxu0
    %v2312 = vpop.f32.mrb[0].mxu0
    %2313 = vdwg.mxu0
    %v2315 = vsel %vm426, %v2115, 0
    %v2318 = vsel %vm426, %v2143, 0
    %2320 = vmatprep.subr.bf16.mxu0 0
    %2321 = vmatpush1.bf16.xpose.msra.mxu0 %v2318
    %2322 = vmatprep.subr.bf16.mxu0 0
    %2323 = vmatpush1.bf16.xpose.msra.mxu0 0
    %2324 = vmatprep.subr.bf16.mxu0 0
    %2325 = vmatpush1.bf16.xpose.msra.mxu0 0
    %2326 = vmatprep.subr.bf16.mxu0 0
    %2327 = vmatpush1.bf16.xpose.msra.mxu0 0
    %2328 = vmatprep.subr.bf16.mxu0 0
    %2329 = vmatpush1.bf16.xpose.msra.mxu0 0
    %2330 = vmatprep.subr.bf16.mxu0 0
    %2331 = vmatpush1.bf16.xpose.msra.mxu0 0
    %2332 = vmatprep.subr.bf16.mxu0 0
    %2333 = vmatpush1.bf16.xpose.msra.mxu0 0
    %2334 = vmatprep.subr.bf16.mxu0 0
    %2335 = vmatpush1.bf16.xpose.msra.mxu0 0
    %2336 = vmatprep.subr.bf16.mxu0 0
    %2337 = vmatpush1.bf16.xpose.msra.mxu0 0
    %2338 = vmatprep.subr.bf16.mxu0 0
    %2339 = vmatpush1.bf16.xpose.msra.mxu0 0
    %2340 = vmatprep.subr.bf16.mxu0 0
    %2341 = vmatpush1.bf16.xpose.msra.mxu0 0
    %2342 = vmatprep.subr.bf16.mxu0 0
    %2343 = vmatpush1.bf16.xpose.msra.mxu0 0
    %2344 = vmatprep.subr.bf16.mxu0 0
    %2345 = vmatpush1.bf16.xpose.msra.mxu0 0
    %2346 = vmatprep.subr.bf16.mxu0 0
    %2347 = vmatpush1.bf16.xpose.msra.mxu0 0
    %2348 = vmatprep.subr.bf16.mxu0 0
    %2349 = vmatpush1.bf16.xpose.msra.mxu0 0
    %2350 = vmatprep.subr.bf16.mxu0 0
    %2351 = vmatpush1.bf16.xpose.msra.mxu0 0
    %2352 = vmatprep.mubr.bf16.mxu0 0
    %2353 = vmatmul.mubr.bf16.gmra.mrb[0].mxu0 %v2315
    %v2354 = vpop.f32.mrb[0].mxu0
    %v2355 = vadd.f32 0.0, %v2354
    %v2356 = vpop.f32.mrb[0].mxu0
    %v2357 = vpop.f32.mrb[0].mxu0
    %v2358 = vpop.f32.mrb[0].mxu0
    %2359 = vdwg.mxu0
    %v2361 = vsel %vm426, %v2116, 0
    %v2364 = vsel %vm426, %v2144, 0
    %2366 = vmatprep.subr.bf16.mxu0 0
    %2367 = vmatpush1.bf16.xpose.msra.mxu0 %v2364
    %2368 = vmatprep.subr.bf16.mxu0 0
    %2369 = vmatpush1.bf16.xpose.msra.mxu0 0
    %2370 = vmatprep.subr.bf16.mxu0 0
    %2371 = vmatpush1.bf16.xpose.msra.mxu0 0
    %2372 = vmatprep.subr.bf16.mxu0 0
    %2373 = vmatpush1.bf16.xpose.msra.mxu0 0
    %2374 = vmatprep.subr.bf16.mxu0 0
    %2375 = vmatpush1.bf16.xpose.msra.mxu0 0
    %2376 = vmatprep.subr.bf16.mxu0 0
    %2377 = vmatpush1.bf16.xpose.msra.mxu0 0
    %2378 = vmatprep.subr.bf16.mxu0 0
    %2379 = vmatpush1.bf16.xpose.msra.mxu0 0
    %2380 = vmatprep.subr.bf16.mxu0 0
    %2381 = vmatpush1.bf16.xpose.msra.mxu0 0
    %2382 = vmatprep.subr.bf16.mxu0 0
    %2383 = vmatpush1.bf16.xpose.msra.mxu0 0
    %2384 = vmatprep.subr.bf16.mxu0 0
    %2385 = vmatpush1.bf16.xpose.msra.mxu0 0
    %2386 = vmatprep.subr.bf16.mxu0 0
    %2387 = vmatpush1.bf16.xpose.msra.mxu0 0
    %2388 = vmatprep.subr.bf16.mxu0 0
    %2389 = vmatpush1.bf16.xpose.msra.mxu0 0
    %2390 = vmatprep.subr.bf16.mxu0 0
    %2391 = vmatpush1.bf16.xpose.msra.mxu0 0
    %2392 = vmatprep.subr.bf16.mxu0 0
    %2393 = vmatpush1.bf16.xpose.msra.mxu0 0
    %2394 = vmatprep.subr.bf16.mxu0 0
    %2395 = vmatpush1.bf16.xpose.msra.mxu0 0
    %2396 = vmatprep.subr.bf16.mxu0 0
    %2397 = vmatpush1.bf16.xpose.msra.mxu0 0
    %2398 = vmatprep.mubr.bf16.mxu0 0
    %2399 = vmatmul.mubr.bf16.gmra.mrb[0].mxu0 %v2361
    %v2400 = vpop.f32.mrb[0].mxu0
    %v2401 = vadd.f32 0.0, %v2400
    %v2402 = vpop.f32.mrb[0].mxu0
    %v2403 = vpop.f32.mrb[0].mxu0
    %v2404 = vpop.f32.mrb[0].mxu0
    %2405 = vdwg.mxu0
    %v2407 = vsel %vm426, %v2117, 0
    %v2410 = vsel %vm426, %v2145, 0
    %2412 = vmatprep.subr.bf16.mxu0 0
    %2413 = vmatpush1.bf16.xpose.msra.mxu0 %v2410
    %2414 = vmatprep.subr.bf16.mxu0 0
    %2415 = vmatpush1.bf16.xpose.msra.mxu0 0
    %2416 = vmatprep.subr.bf16.mxu0 0
    %2417 = vmatpush1.bf16.xpose.msra.mxu0 0
    %2418 = vmatprep.subr.bf16.mxu0 0
    %2419 = vmatpush1.bf16.xpose.msra.mxu0 0
    %2420 = vmatprep.subr.bf16.mxu0 0
    %2421 = vmatpush1.bf16.xpose.msra.mxu0 0
    %2422 = vmatprep.subr.bf16.mxu0 0
    %2423 = vmatpush1.bf16.xpose.msra.mxu0 0
    %2424 = vmatprep.subr.bf16.mxu0 0
    %2425 = vmatpush1.bf16.xpose.msra.mxu0 0
    %2426 = vmatprep.subr.bf16.mxu0 0
    %2427 = vmatpush1.bf16.xpose.msra.mxu0 0
    %2428 = vmatprep.subr.bf16.mxu0 0
    %2429 = vmatpush1.bf16.xpose.msra.mxu0 0
    %2430 = vmatprep.subr.bf16.mxu0 0
    %2431 = vmatpush1.bf16.xpose.msra.mxu0 0
    %2432 = vmatprep.subr.bf16.mxu0 0
    %2433 = vmatpush1.bf16.xpose.msra.mxu0 0
    %2434 = vmatprep.subr.bf16.mxu0 0
    %2435 = vmatpush1.bf16.xpose.msra.mxu0 0
    %2436 = vmatprep.subr.bf16.mxu0 0
    %2437 = vmatpush1.bf16.xpose.msra.mxu0 0
    %2438 = vmatprep.subr.bf16.mxu0 0
    %2439 = vmatpush1.bf16.xpose.msra.mxu0 0
    %2440 = vmatprep.subr.bf16.mxu0 0
    %2441 = vmatpush1.bf16.xpose.msra.mxu0 0
    %2442 = vmatprep.subr.bf16.mxu0 0
    %2443 = vmatpush1.bf16.xpose.msra.mxu0 0
    %2444 = vmatprep.mubr.bf16.mxu0 0
    %2445 = vmatmul.mubr.bf16.gmra.mrb[0].mxu0 %v2407
    %v2446 = vpop.f32.mrb[0].mxu0
    %v2447 = vadd.f32 0.0, %v2446
    %v2448 = vpop.f32.mrb[0].mxu0
    %v2449 = vpop.f32.mrb[0].mxu0
    %v2450 = vpop.f32.mrb[0].mxu0
    %2451 = vdwg.mxu0
    %v2453 = vsel %vm426, %v2118, 0
    %v2456 = vsel %vm426, %v2146, 0
    %2458 = vmatprep.subr.bf16.mxu0 0
    %2459 = vmatpush1.bf16.xpose.msra.mxu0 %v2456
    %2460 = vmatprep.subr.bf16.mxu0 0
    %2461 = vmatpush1.bf16.xpose.msra.mxu0 0
    %2462 = vmatprep.subr.bf16.mxu0 0
    %2463 = vmatpush1.bf16.xpose.msra.mxu0 0
    %2464 = vmatprep.subr.bf16.mxu0 0
    %2465 = vmatpush1.bf16.xpose.msra.mxu0 0
    %2466 = vmatprep.subr.bf16.mxu0 0
    %2467 = vmatpush1.bf16.xpose.msra.mxu0 0
    %2468 = vmatprep.subr.bf16.mxu0 0
    %2469 = vmatpush1.bf16.xpose.msra.mxu0 0
    %2470 = vmatprep.subr.bf16.mxu0 0
    %2471 = vmatpush1.bf16.xpose.msra.mxu0 0
    %2472 = vmatprep.subr.bf16.mxu0 0
    %2473 = vmatpush1.bf16.xpose.msra.mxu0 0
    %2474 = vmatprep.subr.bf16.mxu0 0
    %2475 = vmatpush1.bf16.xpose.msra.mxu0 0
    %2476 = vmatprep.subr.bf16.mxu0 0
    %2477 = vmatpush1.bf16.xpose.msra.mxu0 0
    %2478 = vmatprep.subr.bf16.mxu0 0
    %2479 = vmatpush1.bf16.xpose.msra.mxu0 0
    %2480 = vmatprep.subr.bf16.mxu0 0
    %2481 = vmatpush1.bf16.xpose.msra.mxu0 0
    %2482 = vmatprep.subr.bf16.mxu0 0
    %2483 = vmatpush1.bf16.xpose.msra.mxu0 0
    %2484 = vmatprep.subr.bf16.mxu0 0
    %2485 = vmatpush1.bf16.xpose.msra.mxu0 0
    %2486 = vmatprep.subr.bf16.mxu0 0
    %2487 = vmatpush1.bf16.xpose.msra.mxu0 0
    %2488 = vmatprep.subr.bf16.mxu0 0
    %2489 = vmatpush1.bf16.xpose.msra.mxu0 0
    %2490 = vmatprep.mubr.bf16.mxu0 0
    %2491 = vmatmul.mubr.bf16.gmra.mrb[0].mxu0 %v2453
    %v2492 = vpop.f32.mrb[0].mxu0
    %v2493 = vadd.f32 0.0, %v2492
    %v2494 = vpop.f32.mrb[0].mxu0
    %v2495 = vpop.f32.mrb[0].mxu0
    %v2496 = vpop.f32.mrb[0].mxu0
    %2497 = vdwg.mxu0
    %v2499 = vsel %vm426, %v2119, 0
    %v2502 = vsel %vm426, %v2147, 0
    %2504 = vmatprep.subr.bf16.mxu0 0
    %2505 = vmatpush1.bf16.xpose.msra.mxu0 %v2502
    %2506 = vmatprep.subr.bf16.mxu0 0
    %2507 = vmatpush1.bf16.xpose.msra.mxu0 0
    %2508 = vmatprep.subr.bf16.mxu0 0
    %2509 = vmatpush1.bf16.xpose.msra.mxu0 0
    %2510 = vmatprep.subr.bf16.mxu0 0
    %2511 = vmatpush1.bf16.xpose.msra.mxu0 0
    %2512 = vmatprep.subr.bf16.mxu0 0
    %2513 = vmatpush1.bf16.xpose.msra.mxu0 0
    %2514 = vmatprep.subr.bf16.mxu0 0
    %2515 = vmatpush1.bf16.xpose.msra.mxu0 0
    %2516 = vmatprep.subr.bf16.mxu0 0
    %2517 = vmatpush1.bf16.xpose.msra.mxu0 0
    %2518 = vmatprep.subr.bf16.mxu0 0
    %2519 = vmatpush1.bf16.xpose.msra.mxu0 0
    %2520 = vmatprep.subr.bf16.mxu0 0
    %2521 = vmatpush1.bf16.xpose.msra.mxu0 0
    %2522 = vmatprep.subr.bf16.mxu0 0
    %2523 = vmatpush1.bf16.xpose.msra.mxu0 0
    %2524 = vmatprep.subr.bf16.mxu0 0
    %2525 = vmatpush1.bf16.xpose.msra.mxu0 0
    %2526 = vmatprep.subr.bf16.mxu0 0
    %2527 = vmatpush1.bf16.xpose.msra.mxu0 0
    %2528 = vmatprep.subr.bf16.mxu0 0
    %2529 = vmatpush1.bf16.xpose.msra.mxu0 0
    %2530 = vmatprep.subr.bf16.mxu0 0
    %2531 = vmatpush1.bf16.xpose.msra.mxu0 0
    %2532 = vmatprep.subr.bf16.mxu0 0
    %2533 = vmatpush1.bf16.xpose.msra.mxu0 0
    %2534 = vmatprep.subr.bf16.mxu0 0
    %2535 = vmatpush1.bf16.xpose.msra.mxu0 0
    %2536 = vmatprep.mubr.bf16.mxu0 0
    %2537 = vmatmul.mubr.bf16.gmra.mrb[0].mxu0 %v2499
    %v2538 = vpop.f32.mrb[0].mxu0
    %v2539 = vadd.f32 0.0, %v2538
    %v2540 = vpop.f32.mrb[0].mxu0
    %v2541 = vpop.f32.mrb[0].mxu0
    %v2542 = vpop.f32.mrb[0].mxu0
    %2543 = vdwg.mxu0
    %v2544 = vsel %vm795, %v2217, -inf
    %2545 = vmax.xlane.f32.xlu0 %v2544
    %v2546 = vpop.xlane.xlu0 %2545
    %v2547 = vsel %vm795, %v2263, -inf
    %2548 = vmax.xlane.f32.xlu0 %v2547
    %v2549 = vpop.xlane.xlu0 %2548
    %v2550 = vsel %vm795, %v2309, -inf
    %2551 = vmax.xlane.f32.xlu0 %v2550
    %v2552 = vpop.xlane.xlu0 %2551
    %v2553 = vsel %vm795, %v2355, -inf
    %2554 = vmax.xlane.f32.xlu0 %v2553
    %v2555 = vpop.xlane.xlu0 %2554
    %v2556 = vsel %vm795, %v2401, -inf
    %2557 = vmax.xlane.f32.xlu0 %v2556
    %v2558 = vpop.xlane.xlu0 %2557
    %v2559 = vsel %vm795, %v2447, -inf
    %2560 = vmax.xlane.f32.xlu0 %v2559
    %v2561 = vpop.xlane.xlu0 %2560
    %v2562 = vsel %vm795, %v2493, -inf
    %2563 = vmax.xlane.f32.xlu0 %v2562
    %v2564 = vpop.xlane.xlu0 %2563
    %v2565 = vsel %vm795, %v2539, -inf
    %2566 = vmax.xlane.f32.xlu0 %v2565
    %v2567 = vpop.xlane.xlu0 %2566
    %v2568 = vsub.f32 %v2217, %v2546
    %v2569 = vsub.f32 %v2263, %v2549
    %v2570 = vsub.f32 %v2309, %v2552
    %v2571 = vsub.f32 %v2355, %v2555
    %v2572 = vsub.f32 %v2401, %v2558
    %v2573 = vsub.f32 %v2447, %v2561
    %v2574 = vsub.f32 %v2493, %v2564
    %v2575 = vsub.f32 %v2539, %v2567
    %v2576 = vmul.f32 %v2568, 1.442695
    %v2577 = vpow.pop %v2576
    %v2578 = vmul.f32 %v2569, 1.442695
    %v2579 = vpow.pop %v2578
    %v2580 = vmul.f32 %v2570, 1.442695
    %v2581 = vpow.pop %v2580
    %v2582 = vmul.f32 %v2571, 1.442695
    %v2583 = vpow.pop %v2582
    %v2584 = vmul.f32 %v2572, 1.442695
    %v2585 = vpow.pop %v2584
    %v2586 = vmul.f32 %v2573, 1.442695
    %v2587 = vpow.pop %v2586
    %v2588 = vmul.f32 %v2574, 1.442695
    %v2589 = vpow.pop %v2588
    %v2590 = vmul.f32 %v2575, 1.442695
    %v2591 = vpow.pop %v2590
    %v2592 = vsel %vm795, %v2577, 0.0
    %2593 = vadd.xlane.f32.xlu0 %v2592
    %v2594 = vpop.xlane.xlu0 %2593
    %v2595 = vsel %vm795, %v2579, 0.0
    %2596 = vadd.xlane.f32.xlu0 %v2595
    %v2597 = vpop.xlane.xlu0 %2596
    %v2598 = vsel %vm795, %v2581, 0.0
    %2599 = vadd.xlane.f32.xlu0 %v2598
    %v2600 = vpop.xlane.xlu0 %2599
    %v2601 = vsel %vm795, %v2583, 0.0
    %2602 = vadd.xlane.f32.xlu0 %v2601
    %v2603 = vpop.xlane.xlu0 %2602
    %v2604 = vsel %vm795, %v2585, 0.0
    %2605 = vadd.xlane.f32.xlu0 %v2604
    %v2606 = vpop.xlane.xlu0 %2605
    %v2607 = vsel %vm795, %v2587, 0.0
    %2608 = vadd.xlane.f32.xlu0 %v2607
    %v2609 = vpop.xlane.xlu0 %2608
    %v2610 = vsel %vm795, %v2589, 0.0
    %2611 = vadd.xlane.f32.xlu0 %v2610
    %v2612 = vpop.xlane.xlu0 %2611
    %v2613 = vsel %vm795, %v2591, 0.0
    %2614 = vadd.xlane.f32.xlu0 %v2613
    %v2615 = vpop.xlane.xlu0 %2614
    %v2616 = vrcp.pop %v2594
    %v2617 = vrcp.pop %v2597
    %v2618 = vrcp.pop %v2600
    %v2619 = vrcp.pop %v2603
    %v2620 = vrcp.pop %v2606
    %v2621 = vrcp.pop %v2609
    %v2622 = vrcp.pop %v2612
    %v2623 = vrcp.pop %v2615
    %v2624 = vmul.f32 %v2577, %v2616
    %v2625 = vmul.f32 %v2579, %v2617
    %v2626 = vmul.f32 %v2581, %v2618
    %v2627 = vmul.f32 %v2583, %v2619
    %v2628 = vmul.f32 %v2585, %v2620
    %v2629 = vmul.f32 %v2587, %v2621
    %v2630 = vmul.f32 %v2589, %v2622
    %v2631 = vmul.f32 %v2591, %v2623
    %v2632 = vpack.c.bf16 %v2624, %v2624
    %v2633 = vpack.c.bf16 %v2625, %v2625
    %v2634 = vpack.c.bf16 %v2626, %v2626
    %v2635 = vpack.c.bf16 %v2627, %v2627
    %v2636 = vpack.c.bf16 %v2628, %v2628
    %v2637 = vpack.c.bf16 %v2629, %v2629
    %v2638 = vpack.c.bf16 %v2630, %v2630
    %v2639 = vpack.c.bf16 %v2631, %v2631
    %v2641 = vsel %vm795, %v2632, 0
    %v2644 = vsel %vm895, %v2168, 0
    %2646 = vmatprep.subr.bf16.mxu0 0
    %2647 = vmatpush1.bf16.msra.mxu0 %v2644
    %2648 = vmatprep.subr.bf16.mxu0 0
    %2649 = vmatpush1.bf16.msra.mxu0 0
    %2650 = vmatprep.subr.bf16.mxu0 0
    %2651 = vmatpush1.bf16.msra.mxu0 0
    %2652 = vmatprep.subr.bf16.mxu0 0
    %2653 = vmatpush1.bf16.msra.mxu0 0
    %2654 = vmatprep.subr.bf16.mxu0 0
    %2655 = vmatpush1.bf16.msra.mxu0 0
    %2656 = vmatprep.subr.bf16.mxu0 0
    %2657 = vmatpush1.bf16.msra.mxu0 0
    %2658 = vmatprep.subr.bf16.mxu0 0
    %2659 = vmatpush1.bf16.msra.mxu0 0
    %2660 = vmatprep.subr.bf16.mxu0 0
    %2661 = vmatpush1.bf16.msra.mxu0 0
    %2662 = vmatprep.subr.bf16.mxu0 0
    %2663 = vmatpush1.bf16.msra.mxu0 0
    %2664 = vmatprep.subr.bf16.mxu0 0
    %2665 = vmatpush1.bf16.msra.mxu0 0
    %2666 = vmatprep.subr.bf16.mxu0 0
    %2667 = vmatpush1.bf16.msra.mxu0 0
    %2668 = vmatprep.subr.bf16.mxu0 0
    %2669 = vmatpush1.bf16.msra.mxu0 0
    %2670 = vmatprep.subr.bf16.mxu0 0
    %2671 = vmatpush1.bf16.msra.mxu0 0
    %2672 = vmatprep.subr.bf16.mxu0 0
    %2673 = vmatpush1.bf16.msra.mxu0 0
    %2674 = vmatprep.subr.bf16.mxu0 0
    %2675 = vmatpush1.bf16.msra.mxu0 0
    %2676 = vmatprep.subr.bf16.mxu0 0
    %2677 = vmatpush1.bf16.msra.mxu0 0
    %2678 = vmatprep.mubr.bf16.mxu0 0
    %2679 = vmatmul.mubr.bf16.gmra.mrb[0].mxu0 %v2641
    %v2680 = vpop.f32.mrb[0].mxu0
    %v2681 = vadd.f32 0.0, %v2680
    %v2682 = vpop.f32.mrb[0].mxu0
    %v2683 = vpop.f32.mrb[0].mxu0
    %v2684 = vpop.f32.mrb[0].mxu0
    %2685 = vdwg.mxu0
    %v2687 = vsel %vm795, %v2633, 0
    %v2690 = vsel %vm895, %v2169, 0
    %2692 = vmatprep.subr.bf16.mxu0 0
    %2693 = vmatpush1.bf16.msra.mxu0 %v2690
    %2694 = vmatprep.subr.bf16.mxu0 0
    %2695 = vmatpush1.bf16.msra.mxu0 0
    %2696 = vmatprep.subr.bf16.mxu0 0
    %2697 = vmatpush1.bf16.msra.mxu0 0
    %2698 = vmatprep.subr.bf16.mxu0 0
    %2699 = vmatpush1.bf16.msra.mxu0 0
    %2700 = vmatprep.subr.bf16.mxu0 0
    %2701 = vmatpush1.bf16.msra.mxu0 0
    %2702 = vmatprep.subr.bf16.mxu0 0
    %2703 = vmatpush1.bf16.msra.mxu0 0
    %2704 = vmatprep.subr.bf16.mxu0 0
    %2705 = vmatpush1.bf16.msra.mxu0 0
    %2706 = vmatprep.subr.bf16.mxu0 0
    %2707 = vmatpush1.bf16.msra.mxu0 0
    %2708 = vmatprep.subr.bf16.mxu0 0
    %2709 = vmatpush1.bf16.msra.mxu0 0
    %2710 = vmatprep.subr.bf16.mxu0 0
    %2711 = vmatpush1.bf16.msra.mxu0 0
    %2712 = vmatprep.subr.bf16.mxu0 0
    %2713 = vmatpush1.bf16.msra.mxu0 0
    %2714 = vmatprep.subr.bf16.mxu0 0
    %2715 = vmatpush1.bf16.msra.mxu0 0
    %2716 = vmatprep.subr.bf16.mxu0 0
    %2717 = vmatpush1.bf16.msra.mxu0 0
    %2718 = vmatprep.subr.bf16.mxu0 0
    %2719 = vmatpush1.bf16.msra.mxu0 0
    %2720 = vmatprep.subr.bf16.mxu0 0
    %2721 = vmatpush1.bf16.msra.mxu0 0
    %2722 = vmatprep.subr.bf16.mxu0 0
    %2723 = vmatpush1.bf16.msra.mxu0 0
    %2724 = vmatprep.mubr.bf16.mxu0 0
    %2725 = vmatmul.mubr.bf16.gmra.mrb[0].mxu0 %v2687
    %v2726 = vpop.f32.mrb[0].mxu0
    %v2727 = vadd.f32 0.0, %v2726
    %v2728 = vpop.f32.mrb[0].mxu0
    %v2729 = vpop.f32.mrb[0].mxu0
    %v2730 = vpop.f32.mrb[0].mxu0
    %2731 = vdwg.mxu0
    %v2733 = vsel %vm795, %v2634, 0
    %v2736 = vsel %vm895, %v2170, 0
    %2738 = vmatprep.subr.bf16.mxu0 0
    %2739 = vmatpush1.bf16.msra.mxu0 %v2736
    %2740 = vmatprep.subr.bf16.mxu0 0
    %2741 = vmatpush1.bf16.msra.mxu0 0
    %2742 = vmatprep.subr.bf16.mxu0 0
    %2743 = vmatpush1.bf16.msra.mxu0 0
    %2744 = vmatprep.subr.bf16.mxu0 0
    %2745 = vmatpush1.bf16.msra.mxu0 0
    %2746 = vmatprep.subr.bf16.mxu0 0
    %2747 = vmatpush1.bf16.msra.mxu0 0
    %2748 = vmatprep.subr.bf16.mxu0 0
    %2749 = vmatpush1.bf16.msra.mxu0 0
    %2750 = vmatprep.subr.bf16.mxu0 0
    %2751 = vmatpush1.bf16.msra.mxu0 0
    %2752 = vmatprep.subr.bf16.mxu0 0
    %2753 = vmatpush1.bf16.msra.mxu0 0
    %2754 = vmatprep.subr.bf16.mxu0 0
    %2755 = vmatpush1.bf16.msra.mxu0 0
    %2756 = vmatprep.subr.bf16.mxu0 0
    %2757 = vmatpush1.bf16.msra.mxu0 0
    %2758 = vmatprep.subr.bf16.mxu0 0
    %2759 = vmatpush1.bf16.msra.mxu0 0
    %2760 = vmatprep.subr.bf16.mxu0 0
    %2761 = vmatpush1.bf16.msra.mxu0 0
    %2762 = vmatprep.subr.bf16.mxu0 0
    %2763 = vmatpush1.bf16.msra.mxu0 0
    %2764 = vmatprep.subr.bf16.mxu0 0
    %2765 = vmatpush1.bf16.msra.mxu0 0
    %2766 = vmatprep.subr.bf16.mxu0 0
    %2767 = vmatpush1.bf16.msra.mxu0 0
    %2768 = vmatprep.subr.bf16.mxu0 0
    %2769 = vmatpush1.bf16.msra.mxu0 0
    %2770 = vmatprep.mubr.bf16.mxu0 0
    %2771 = vmatmul.mubr.bf16.gmra.mrb[0].mxu0 %v2733
    %v2772 = vpop.f32.mrb[0].mxu0
    %v2773 = vadd.f32 0.0, %v2772
    %v2774 = vpop.f32.mrb[0].mxu0
    %v2775 = vpop.f32.mrb[0].mxu0
    %v2776 = vpop.f32.mrb[0].mxu0
    %2777 = vdwg.mxu0
    %v2779 = vsel %vm795, %v2635, 0
    %v2782 = vsel %vm895, %v2171, 0
    %2784 = vmatprep.subr.bf16.mxu0 0
    %2785 = vmatpush1.bf16.msra.mxu0 %v2782
    %2786 = vmatprep.subr.bf16.mxu0 0
    %2787 = vmatpush1.bf16.msra.mxu0 0
    %2788 = vmatprep.subr.bf16.mxu0 0
    %2789 = vmatpush1.bf16.msra.mxu0 0
    %2790 = vmatprep.subr.bf16.mxu0 0
    %2791 = vmatpush1.bf16.msra.mxu0 0
    %2792 = vmatprep.subr.bf16.mxu0 0
    %2793 = vmatpush1.bf16.msra.mxu0 0
    %2794 = vmatprep.subr.bf16.mxu0 0
    %2795 = vmatpush1.bf16.msra.mxu0 0
    %2796 = vmatprep.subr.bf16.mxu0 0
    %2797 = vmatpush1.bf16.msra.mxu0 0
    %2798 = vmatprep.subr.bf16.mxu0 0
    %2799 = vmatpush1.bf16.msra.mxu0 0
    %2800 = vmatprep.subr.bf16.mxu0 0
    %2801 = vmatpush1.bf16.msra.mxu0 0
    %2802 = vmatprep.subr.bf16.mxu0 0
    %2803 = vmatpush1.bf16.msra.mxu0 0
    %2804 = vmatprep.subr.bf16.mxu0 0
    %2805 = vmatpush1.bf16.msra.mxu0 0
    %2806 = vmatprep.subr.bf16.mxu0 0
    %2807 = vmatpush1.bf16.msra.mxu0 0
    %2808 = vmatprep.subr.bf16.mxu0 0
    %2809 = vmatpush1.bf16.msra.mxu0 0
    %2810 = vmatprep.subr.bf16.mxu0 0
    %2811 = vmatpush1.bf16.msra.mxu0 0
    %2812 = vmatprep.subr.bf16.mxu0 0
    %2813 = vmatpush1.bf16.msra.mxu0 0
    %2814 = vmatprep.subr.bf16.mxu0 0
    %2815 = vmatpush1.bf16.msra.mxu0 0
    %2816 = vmatprep.mubr.bf16.mxu0 0
    %2817 = vmatmul.mubr.bf16.gmra.mrb[0].mxu0 %v2779
    %v2818 = vpop.f32.mrb[0].mxu0
    %v2819 = vadd.f32 0.0, %v2818
    %v2820 = vpop.f32.mrb[0].mxu0
    %v2821 = vpop.f32.mrb[0].mxu0
    %v2822 = vpop.f32.mrb[0].mxu0
    %2823 = vdwg.mxu0
    %v2825 = vsel %vm795, %v2636, 0
    %v2828 = vsel %vm895, %v2172, 0
    %2830 = vmatprep.subr.bf16.mxu0 0
    %2831 = vmatpush1.bf16.msra.mxu0 %v2828
    %2832 = vmatprep.subr.bf16.mxu0 0
    %2833 = vmatpush1.bf16.msra.mxu0 0
    %2834 = vmatprep.subr.bf16.mxu0 0
    %2835 = vmatpush1.bf16.msra.mxu0 0
    %2836 = vmatprep.subr.bf16.mxu0 0
    %2837 = vmatpush1.bf16.msra.mxu0 0
    %2838 = vmatprep.subr.bf16.mxu0 0
    %2839 = vmatpush1.bf16.msra.mxu0 0
    %2840 = vmatprep.subr.bf16.mxu0 0
    %2841 = vmatpush1.bf16.msra.mxu0 0
    %2842 = vmatprep.subr.bf16.mxu0 0
    %2843 = vmatpush1.bf16.msra.mxu0 0
    %2844 = vmatprep.subr.bf16.mxu0 0
    %2845 = vmatpush1.bf16.msra.mxu0 0
    %2846 = vmatprep.subr.bf16.mxu0 0
    %2847 = vmatpush1.bf16.msra.mxu0 0
    %2848 = vmatprep.subr.bf16.mxu0 0
    %2849 = vmatpush1.bf16.msra.mxu0 0
    %2850 = vmatprep.subr.bf16.mxu0 0
    %2851 = vmatpush1.bf16.msra.mxu0 0
    %2852 = vmatprep.subr.bf16.mxu0 0
    %2853 = vmatpush1.bf16.msra.mxu0 0
    %2854 = vmatprep.subr.bf16.mxu0 0
    %2855 = vmatpush1.bf16.msra.mxu0 0
    %2856 = vmatprep.subr.bf16.mxu0 0
    %2857 = vmatpush1.bf16.msra.mxu0 0
    %2858 = vmatprep.subr.bf16.mxu0 0
    %2859 = vmatpush1.bf16.msra.mxu0 0
    %2860 = vmatprep.subr.bf16.mxu0 0
    %2861 = vmatpush1.bf16.msra.mxu0 0
    %2862 = vmatprep.mubr.bf16.mxu0 0
    %2863 = vmatmul.mubr.bf16.gmra.mrb[0].mxu0 %v2825
    %v2864 = vpop.f32.mrb[0].mxu0
    %v2865 = vadd.f32 0.0, %v2864
    %v2866 = vpop.f32.mrb[0].mxu0
    %v2867 = vpop.f32.mrb[0].mxu0
    %v2868 = vpop.f32.mrb[0].mxu0
    %2869 = vdwg.mxu0
    %v2871 = vsel %vm795, %v2637, 0
    %v2874 = vsel %vm895, %v2173, 0
    %2876 = vmatprep.subr.bf16.mxu0 0
    %2877 = vmatpush1.bf16.msra.mxu0 %v2874
    %2878 = vmatprep.subr.bf16.mxu0 0
    %2879 = vmatpush1.bf16.msra.mxu0 0
    %2880 = vmatprep.subr.bf16.mxu0 0
    %2881 = vmatpush1.bf16.msra.mxu0 0
    %2882 = vmatprep.subr.bf16.mxu0 0
    %2883 = vmatpush1.bf16.msra.mxu0 0
    %2884 = vmatprep.subr.bf16.mxu0 0
    %2885 = vmatpush1.bf16.msra.mxu0 0
    %2886 = vmatprep.subr.bf16.mxu0 0
    %2887 = vmatpush1.bf16.msra.mxu0 0
    %2888 = vmatprep.subr.bf16.mxu0 0
    %2889 = vmatpush1.bf16.msra.mxu0 0
    %2890 = vmatprep.subr.bf16.mxu0 0
    %2891 = vmatpush1.bf16.msra.mxu0 0
    %2892 = vmatprep.subr.bf16.mxu0 0
    %2893 = vmatpush1.bf16.msra.mxu0 0
    %2894 = vmatprep.subr.bf16.mxu0 0
    %2895 = vmatpush1.bf16.msra.mxu0 0
    %2896 = vmatprep.subr.bf16.mxu0 0
    %2897 = vmatpush1.bf16.msra.mxu0 0
    %2898 = vmatprep.subr.bf16.mxu0 0
    %2899 = vmatpush1.bf16.msra.mxu0 0
    %2900 = vmatprep.subr.bf16.mxu0 0
    %2901 = vmatpush1.bf16.msra.mxu0 0
    %2902 = vmatprep.subr.bf16.mxu0 0
    %2903 = vmatpush1.bf16.msra.mxu0 0
    %2904 = vmatprep.subr.bf16.mxu0 0
    %2905 = vmatpush1.bf16.msra.mxu0 0
    %2906 = vmatprep.subr.bf16.mxu0 0
    %2907 = vmatpush1.bf16.msra.mxu0 0
    %2908 = vmatprep.mubr.bf16.mxu0 0
    %2909 = vmatmul.mubr.bf16.gmra.mrb[0].mxu0 %v2871
    %v2910 = vpop.f32.mrb[0].mxu0
    %v2911 = vadd.f32 0.0, %v2910
    %v2912 = vpop.f32.mrb[0].mxu0
    %v2913 = vpop.f32.mrb[0].mxu0
    %v2914 = vpop.f32.mrb[0].mxu0
    %2915 = vdwg.mxu0
    %v2917 = vsel %vm795, %v2638, 0
    %v2920 = vsel %vm895, %v2174, 0
    %2922 = vmatprep.subr.bf16.mxu0 0
    %2923 = vmatpush1.bf16.msra.mxu0 %v2920
    %2924 = vmatprep.subr.bf16.mxu0 0
    %2925 = vmatpush1.bf16.msra.mxu0 0
    %2926 = vmatprep.subr.bf16.mxu0 0
    %2927 = vmatpush1.bf16.msra.mxu0 0
    %2928 = vmatprep.subr.bf16.mxu0 0
    %2929 = vmatpush1.bf16.msra.mxu0 0
    %2930 = vmatprep.subr.bf16.mxu0 0
    %2931 = vmatpush1.bf16.msra.mxu0 0
    %2932 = vmatprep.subr.bf16.mxu0 0
    %2933 = vmatpush1.bf16.msra.mxu0 0
    %2934 = vmatprep.subr.bf16.mxu0 0
    %2935 = vmatpush1.bf16.msra.mxu0 0
    %2936 = vmatprep.subr.bf16.mxu0 0
    %2937 = vmatpush1.bf16.msra.mxu0 0
    %2938 = vmatprep.subr.bf16.mxu0 0
    %2939 = vmatpush1.bf16.msra.mxu0 0
    %2940 = vmatprep.subr.bf16.mxu0 0
    %2941 = vmatpush1.bf16.msra.mxu0 0
    %2942 = vmatprep.subr.bf16.mxu0 0
    %2943 = vmatpush1.bf16.msra.mxu0 0
    %2944 = vmatprep.subr.bf16.mxu0 0
    %2945 = vmatpush1.bf16.msra.mxu0 0
    %2946 = vmatprep.subr.bf16.mxu0 0
    %2947 = vmatpush1.bf16.msra.mxu0 0
    %2948 = vmatprep.subr.bf16.mxu0 0
    %2949 = vmatpush1.bf16.msra.mxu0 0
    %2950 = vmatprep.subr.bf16.mxu0 0
    %2951 = vmatpush1.bf16.msra.mxu0 0
    %2952 = vmatprep.subr.bf16.mxu0 0
    %2953 = vmatpush1.bf16.msra.mxu0 0
    %2954 = vmatprep.mubr.bf16.mxu0 0
    %2955 = vmatmul.mubr.bf16.gmra.mrb[0].mxu0 %v2917
    %v2956 = vpop.f32.mrb[0].mxu0
    %v2957 = vadd.f32 0.0, %v2956
    %v2958 = vpop.f32.mrb[0].mxu0
    %v2959 = vpop.f32.mrb[0].mxu0
    %v2960 = vpop.f32.mrb[0].mxu0
    %2961 = vdwg.mxu0
    %v2963 = vsel %vm795, %v2639, 0
    %v2966 = vsel %vm895, %v2175, 0
    %2968 = vmatprep.subr.bf16.mxu0 0
    %2969 = vmatpush1.bf16.msra.mxu0 %v2966
    %2970 = vmatprep.subr.bf16.mxu0 0
    %2971 = vmatpush1.bf16.msra.mxu0 0
    %2972 = vmatprep.subr.bf16.mxu0 0
    %2973 = vmatpush1.bf16.msra.mxu0 0
    %2974 = vmatprep.subr.bf16.mxu0 0
    %2975 = vmatpush1.bf16.msra.mxu0 0
    %2976 = vmatprep.subr.bf16.mxu0 0
    %2977 = vmatpush1.bf16.msra.mxu0 0
    %2978 = vmatprep.subr.bf16.mxu0 0
    %2979 = vmatpush1.bf16.msra.mxu0 0
    %2980 = vmatprep.subr.bf16.mxu0 0
    %2981 = vmatpush1.bf16.msra.mxu0 0
    %2982 = vmatprep.subr.bf16.mxu0 0
    %2983 = vmatpush1.bf16.msra.mxu0 0
    %2984 = vmatprep.subr.bf16.mxu0 0
    %2985 = vmatpush1.bf16.msra.mxu0 0
    %2986 = vmatprep.subr.bf16.mxu0 0
    %2987 = vmatpush1.bf16.msra.mxu0 0
    %2988 = vmatprep.subr.bf16.mxu0 0
    %2989 = vmatpush1.bf16.msra.mxu0 0
    %2990 = vmatprep.subr.bf16.mxu0 0
    %2991 = vmatpush1.bf16.msra.mxu0 0
    %2992 = vmatprep.subr.bf16.mxu0 0
    %2993 = vmatpush1.bf16.msra.mxu0 0
    %2994 = vmatprep.subr.bf16.mxu0 0
    %2995 = vmatpush1.bf16.msra.mxu0 0
    %2996 = vmatprep.subr.bf16.mxu0 0
    %2997 = vmatpush1.bf16.msra.mxu0 0
    %2998 = vmatprep.subr.bf16.mxu0 0
    %2999 = vmatpush1.bf16.msra.mxu0 0
    %3000 = vmatprep.mubr.bf16.mxu0 0
    %3001 = vmatmul.mubr.bf16.gmra.mrb[0].mxu0 %v2963
    %v3002 = vpop.f32.mrb[0].mxu0
    %v3003 = vadd.f32 0.0, %v3002
    %v3004 = vpop.f32.mrb[0].mxu0
    %v3005 = vpop.f32.mrb[0].mxu0
    %v3006 = vpop.f32.mrb[0].mxu0
    %3007 = vdwg.mxu0
    %3010 = vrot.lane.b32.xlu0 %v2773, 32
    %v3011 = vpop.permute.xlu0 %3010
    %3012 = vrot.lane.b32.xlu0 %v2819, 32
    %v3013 = vpop.permute.xlu0 %3012
    %3018 = vrot.lane.b32.xlu0 %v2865, 64
    %v3019 = vpop.permute.xlu0 %3018
    %3020 = vrot.lane.b32.xlu0 %v2911, 64
    %v3021 = vpop.permute.xlu0 %3020
    %3026 = vrot.lane.b32.xlu0 %v2957, 96
    %v3027 = vpop.permute.xlu0 %3026
    %3028 = vrot.lane.b32.xlu0 %v3003, 96
    %v3029 = vpop.permute.xlu0 %3028
    %v3032 = vsel %vm426, %v2681, %v3011
    %v3033 = vsel %vm426, %v2727, %v3013
    %v3034 = vsel %vm1287, %v3032, %v3019
    %v3035 = vsel %vm1287, %v3033, %v3021
    %v3036 = vsel %vm1290, %v3034, %v3027
    %v3037 = vsel %vm1290, %v3035, %v3029
    %v3038 = vld [vmem:[#allocation2 + $0x480] sm:$0xf]
    %v3039 = vld [vmem:[#allocation2 + $0x48c] sm:$0xf]
    %v3040 = vld [vmem:[#allocation2 + $0x498] sm:$0xf]
    %v3041 = vld [vmem:[#allocation2 + $0x4a4] sm:$0xf]
    %v3042 = vld [vmem:[#allocation2 + $0x4b0] sm:$0xf]
    %v3043 = vld [vmem:[#allocation2 + $0x4bc] sm:$0xf]
    %v3044 = vld [vmem:[#allocation2 + $0x4c8] sm:$0xf]
    %v3045 = vld [vmem:[#allocation2 + $0x4d4] sm:$0xf]
    %v3046 = vld [vmem:[#allocation2 + $0x4e0] sm:$0xf]
    %v3047 = vld [vmem:[#allocation2 + $0x4ec] sm:$0xf]
    %v3048 = vld [vmem:[#allocation2 + $0x4f8] sm:$0xf]
    %v3049 = vld [vmem:[#allocation2 + $0x504] sm:$0xf]
    %v3050 = vld [vmem:[#allocation2 + $0x510] sm:$0xf]
    %v3051 = vld [vmem:[#allocation2 + $0x51c] sm:$0xf]
    %v3052 = vld [vmem:[#allocation2 + $0x528] sm:$0xf]
    %v3053 = vld [vmem:[#allocation2 + $0x534] sm:$0xf]
    %v3054 = vpack.c.bf16 %v3037, %v3036
    %v3055 = vld [vmem:[#allocation5 + $0x1b] ss:$0 sm:$0xff]
    %v3072 = vunpack.c.l.b16 %v3038
    %v3073 = vunpack.c.l.b16 %v3039
    %v3074 = vunpack.c.l.b16 %v3040
    %v3075 = vunpack.c.l.b16 %v3041
    %v3076 = vunpack.c.l.b16 %v3042
    %v3077 = vunpack.c.l.b16 %v3043
    %v3078 = vunpack.c.l.b16 %v3044
    %v3079 = vunpack.c.l.b16 %v3045
    %v3080 = vunpack.c.l.b16 %v3046
    %v3081 = vunpack.c.l.b16 %v3047
    %v3082 = vunpack.c.l.b16 %v3048
    %v3083 = vunpack.c.l.b16 %v3049
    %v3084 = vunpack.c.l.b16 %v3050
    %v3085 = vunpack.c.l.b16 %v3051
    %v3086 = vunpack.c.l.b16 %v3052
    %v3087 = vunpack.c.l.b16 %v3053
    %v3088 = vpack.c.b16 %v3073, %v3072
    %v3089 = vpack.c.b16 %v3075, %v3074
    %v3090 = vpack.c.b16 %v3077, %v3076
    %v3091 = vpack.c.b16 %v3079, %v3078
    %v3092 = vpack.c.b16 %v3081, %v3080
    %v3093 = vpack.c.b16 %v3083, %v3082
    %v3094 = vpack.c.b16 %v3085, %v3084
    %v3095 = vpack.c.b16 %v3087, %v3086
    %3104 = vmatprep.subr.bf16.mxu0 0
    %3105 = vmatpush1.bf16.msra.mxu0 %v3088
    %3106 = vmatprep.subr.bf16.mxu0 0
    %3107 = vmatpush1.bf16.msra.mxu0 %v3089
    %3108 = vmatprep.subr.bf16.mxu0 0
    %3109 = vmatpush1.bf16.msra.mxu0 %v3090
    %3110 = vmatprep.subr.bf16.mxu0 0
    %3111 = vmatpush1.bf16.msra.mxu0 %v3091
    %3112 = vmatprep.subr.bf16.mxu0 0
    %3113 = vmatpush1.bf16.msra.mxu0 %v3092
    %3114 = vmatprep.subr.bf16.mxu0 0
    %3115 = vmatpush1.bf16.msra.mxu0 %v3093
    %3116 = vmatprep.subr.bf16.mxu0 0
    %3117 = vmatpush1.bf16.msra.mxu0 %v3094
    %3118 = vmatprep.subr.bf16.mxu0 0
    %3119 = vmatpush1.bf16.msra.mxu0 %v3095
    %3120 = vmatprep.subr.bf16.mxu0 0
    %3121 = vmatpush1.bf16.msra.mxu0 0
    %3122 = vmatprep.subr.bf16.mxu0 0
    %3123 = vmatpush1.bf16.msra.mxu0 0
    %3124 = vmatprep.subr.bf16.mxu0 0
    %3125 = vmatpush1.bf16.msra.mxu0 0
    %3126 = vmatprep.subr.bf16.mxu0 0
    %3127 = vmatpush1.bf16.msra.mxu0 0
    %3128 = vmatprep.subr.bf16.mxu0 0
    %3129 = vmatpush1.bf16.msra.mxu0 0
    %3130 = vmatprep.subr.bf16.mxu0 0
    %3131 = vmatpush1.bf16.msra.mxu0 0
    %3132 = vmatprep.subr.bf16.mxu0 0
    %3133 = vmatpush1.bf16.msra.mxu0 0
    %3134 = vmatprep.subr.bf16.mxu0 0
    %3135 = vmatpush1.bf16.msra.mxu0 0
    %3136 = vmatprep.mubr.bf16.mxu0 0
    %3137 = vmatmul.mubr.bf16.gmra.mrb[0].mxu0 %v3054
    %v3138 = vpop.f32.mrb[0].mxu0
    %v3139 = vadd.f32 %v3055, %v3138
    %v3140 = vpop.f32.mrb[0].mxu0
    %v3141 = vpop.f32.mrb[0].mxu0
    %v3142 = vadd.f32 %v3055, %v3141
    %v3143 = vpop.f32.mrb[0].mxu0
    %3144 = vdwg.mxu0
    %v3145 = vadd.f32 %v1827, %v3139
    %v3146 = vadd.f32 %v1828, %v3142
    %v3147 = vld [vmem:[#allocation5 + $0x1c] ss:$0 sm:$0xff]
    %v3148 = vld [vmem:[#allocation5 + $0x1d] ss:$0 sm:$0xff]
    %3149 = vadd.xlane.f32.xlu0 %v3145
    %v3150 = vpop.xlane.xlu0 %3149
    %3151 = vadd.xlane.f32.xlu0 %v3146
    %v3152 = vpop.xlane.xlu0 %3151
    %v3153 = vmul.f32 %v3150, %v52
    %v3154 = vmul.f32 %v3152, %v52
    %v3155 = vmul.f32 %v3145, %v3145
    %v3156 = vmul.f32 %v3146, %v3146
    %3157 = vadd.xlane.f32.xlu0 %v3155
    %v3158 = vpop.xlane.xlu0 %3157
    %3159 = vadd.xlane.f32.xlu0 %v3156
    %v3160 = vpop.xlane.xlu0 %3159
    %v3161 = vmul.f32 %v3158, %v52
    %v3162 = vmul.f32 %v3160, %v52
    %v3163 = vmul.f32 %v3153, %v3153
    %v3164 = vmul.f32 %v3154, %v3154
    %v3165 = vsub.f32 %v3161, %v3163
    %v3166 = vsub.f32 %v3162, %v3164
    %v3167 = vsub.f32 %v3145, %v3153
    %v3168 = vsub.f32 %v3146, %v3154
    %v3169 = vadd.f32 %v3165, 1e-12
    %v3170 = vadd.f32 %v3166, 1e-12
    %v3171 = vrsqrt.pop %v3169
    %v3172 = vrsqrt.pop %v3170
    %v3173 = vmul.f32 %v3167, %v3171
    %v3174 = vmul.f32 %v3168, %v3172
    %v3175 = vmul.f32 %v3173, %v3147
    %v3176 = vmul.f32 %v3174, %v3147
    %v3177 = vadd.f32 %v3175, %v3148
    %v3178 = vadd.f32 %v3176, %v3148
    %v3179 = vld [vmem:[#allocation2 + $0x540] sm:$0xff]
    %v3180 = vld [vmem:[#allocation2 + $0x54c] sm:$0xff]
    %v3181 = vld [vmem:[#allocation2 + $0x558] sm:$0xff]
    %v3182 = vld [vmem:[#allocation2 + $0x564] sm:$0xff]
    %v3183 = vld [vmem:[#allocation2 + $0x570] sm:$0xff]
    %v3184 = vld [vmem:[#allocation2 + $0x57c] sm:$0xff]
    %v3185 = vld [vmem:[#allocation2 + $0x588] sm:$0xff]
    %v3186 = vld [vmem:[#allocation2 + $0x594] sm:$0xff]
    %v3187 = vld [vmem:[#allocation2 + $0x5a0] sm:$0xff]
    %v3188 = vld [vmem:[#allocation2 + $0x5ac] sm:$0xff]
    %v3189 = vld [vmem:[#allocation2 + $0x5b8] sm:$0xff]
    %v3190 = vld [vmem:[#allocation2 + $0x5c4] sm:$0xff]
    %v3191 = vld [vmem:[#allocation2 + $0x5d0] sm:$0xff]
    %v3192 = vld [vmem:[#allocation2 + $0x5dc] sm:$0xff]
    %v3193 = vld [vmem:[#allocation2 + $0x5e8] sm:$0xff]
    %v3194 = vld [vmem:[#allocation2 + $0x5f4] sm:$0xff]
    %v3195 = vpack.c.bf16 %v3178, %v3177
    %s3196 = scalar_lea.vmem [#allocation5], 30
    %v3197 = vld [vmem:[%s3196] ss:$8 sm:$0x3]
    %v3199 = vlaneseq
    %v3200 = vshrl.u32 %v3199, 7
    %v3201 = vsub.s32 0, %v3200
    %v3202 = vrot.slane %v3197, %v3201
    %v3203 = vlaneseq
    %v3204 = vshrl.u32 %v3203, 7
    %v3205 = vsub.s32 1, %v3204
    %v3206 = vrot.slane %v3197, %v3205
    %v3225 = vunpack.c.l.b16 %v3179
    %v3226 = vunpack.c.h.b16 %v3179
    %v3227 = vunpack.c.l.b16 %v3180
    %v3228 = vunpack.c.h.b16 %v3180
    %v3229 = vunpack.c.l.b16 %v3181
    %v3230 = vunpack.c.h.b16 %v3181
    %v3231 = vunpack.c.l.b16 %v3182
    %v3232 = vunpack.c.h.b16 %v3182
    %v3233 = vunpack.c.l.b16 %v3183
    %v3234 = vunpack.c.h.b16 %v3183
    %v3235 = vunpack.c.l.b16 %v3184
    %v3236 = vunpack.c.h.b16 %v3184
    %v3237 = vunpack.c.l.b16 %v3185
    %v3238 = vunpack.c.h.b16 %v3185
    %v3239 = vunpack.c.l.b16 %v3186
    %v3240 = vunpack.c.h.b16 %v3186
    %v3241 = vunpack.c.l.b16 %v3187
    %v3242 = vunpack.c.h.b16 %v3187
    %v3243 = vunpack.c.l.b16 %v3188
    %v3244 = vunpack.c.h.b16 %v3188
    %v3245 = vunpack.c.l.b16 %v3189
    %v3246 = vunpack.c.h.b16 %v3189
    %v3247 = vunpack.c.l.b16 %v3190
    %v3248 = vunpack.c.h.b16 %v3190
    %v3249 = vunpack.c.l.b16 %v3191
    %v3250 = vunpack.c.h.b16 %v3191
    %v3251 = vunpack.c.l.b16 %v3192
    %v3252 = vunpack.c.h.b16 %v3192
    %v3253 = vunpack.c.l.b16 %v3193
    %v3254 = vunpack.c.h.b16 %v3193
    %v3255 = vunpack.c.l.b16 %v3194
    %v3256 = vunpack.c.h.b16 %v3194
    %v3257 = vpack.c.b16 %v3227, %v3225
    %v3258 = vpack.c.b16 %v3228, %v3226
    %v3259 = vpack.c.b16 %v3231, %v3229
    %v3260 = vpack.c.b16 %v3232, %v3230
    %v3261 = vpack.c.b16 %v3235, %v3233
    %v3262 = vpack.c.b16 %v3236, %v3234
    %v3263 = vpack.c.b16 %v3239, %v3237
    %v3264 = vpack.c.b16 %v3240, %v3238
    %v3265 = vpack.c.b16 %v3243, %v3241
    %v3266 = vpack.c.b16 %v3244, %v3242
    %v3267 = vpack.c.b16 %v3247, %v3245
    %v3268 = vpack.c.b16 %v3248, %v3246
    %v3269 = vpack.c.b16 %v3251, %v3249
    %v3270 = vpack.c.b16 %v3252, %v3250
    %v3271 = vpack.c.b16 %v3255, %v3253
    %v3272 = vpack.c.b16 %v3256, %v3254
    %3289 = vmatprep.subr.bf16.mxu0 %v3258
    %3290 = vmatpush1.bf16.msra.mxu0 %v3257
    %3291 = vmatprep.subr.bf16.mxu0 %v3260
    %3292 = vmatpush1.bf16.msra.mxu0 %v3259
    %3293 = vmatprep.subr.bf16.mxu0 %v3262
    %3294 = vmatpush1.bf16.msra.mxu0 %v3261
    %3295 = vmatprep.subr.bf16.mxu0 %v3264
    %3296 = vmatpush1.bf16.msra.mxu0 %v3263
    %3297 = vmatprep.subr.bf16.mxu0 %v3266
    %3298 = vmatpush1.bf16.msra.mxu0 %v3265
    %3299 = vmatprep.subr.bf16.mxu0 %v3268
    %3300 = vmatpush1.bf16.msra.mxu0 %v3267
    %3301 = vmatprep.subr.bf16.mxu0 %v3270
    %3302 = vmatpush1.bf16.msra.mxu0 %v3269
    %3303 = vmatprep.subr.bf16.mxu0 %v3272
    %3304 = vmatpush1.bf16.msra.mxu0 %v3271
    %3305 = vmatprep.subr.bf16.mxu0 0
    %3306 = vmatpush1.bf16.msra.mxu0 0
    %3307 = vmatprep.subr.bf16.mxu0 0
    %3308 = vmatpush1.bf16.msra.mxu0 0
    %3309 = vmatprep.subr.bf16.mxu0 0
    %3310 = vmatpush1.bf16.msra.mxu0 0
    %3311 = vmatprep.subr.bf16.mxu0 0
    %3312 = vmatpush1.bf16.msra.mxu0 0
    %3313 = vmatprep.subr.bf16.mxu0 0
    %3314 = vmatpush1.bf16.msra.mxu0 0
    %3315 = vmatprep.subr.bf16.mxu0 0
    %3316 = vmatpush1.bf16.msra.mxu0 0
    %3317 = vmatprep.subr.bf16.mxu0 0
    %3318 = vmatpush1.bf16.msra.mxu0 0
    %3319 = vmatprep.subr.bf16.mxu0 0
    %3320 = vmatpush1.bf16.msra.mxu0 0
    %3321 = vmatprep.mubr.bf16.mxu0 0
    %3322 = vmatmul.mubr.bf16.gmra.mrb[0].mxu0 %v3195
    %v3323 = vpop.f32.mrb[0].mxu0
    %v3324 = vadd.f32 %v3202, %v3323
    %v3325 = vpop.f32.mrb[0].mxu0
    %v3326 = vadd.f32 %v3206, %v3325
    %v3327 = vpop.f32.mrb[0].mxu0
    %v3328 = vadd.f32 %v3202, %v3327
    %v3329 = vpop.f32.mrb[0].mxu0
    %v3330 = vadd.f32 %v3206, %v3329
    %3331 = vdwg.mxu0
    %v3332 = vmul.f32 %v3324, %v3324
    %v3333 = vmul.f32 %v3326, %v3326
    %v3334 = vmul.f32 %v3328, %v3328
    %v3335 = vmul.f32 %v3330, %v3330
    %v3336 = vmul.f32 %v3324, %v3332
    %v3337 = vmul.f32 %v3326, %v3333
    %v3338 = vmul.f32 %v3328, %v3334
    %v3339 = vmul.f32 %v3330, %v3335
    %v3340 = vmul.f32 %v3336, 0.044715
    %v3341 = vmul.f32 %v3337, 0.044715
    %v3342 = vmul.f32 %v3338, 0.044715
    %v3343 = vmul.f32 %v3339, 0.044715
    %v3344 = vadd.f32 %v3324, %v3340
    %v3345 = vadd.f32 %v3326, %v3341
    %v3346 = vadd.f32 %v3328, %v3342
    %v3347 = vadd.f32 %v3330, %v3343
    %v3348 = vmul.f32 %v3344, 0.7978846
    %v3349 = vmul.f32 %v3345, 0.7978846
    %v3350 = vmul.f32 %v3346, 0.7978846
    %v3351 = vmul.f32 %v3347, 0.7978846
    %v3352 = vtanh.pop %v3348
    %v3353 = vtanh.pop %v3349
    %v3354 = vtanh.pop %v3350
    %v3355 = vtanh.pop %v3351
    %v3356 = vadd.f32 %v3352, 1.0
    %v3357 = vadd.f32 %v3353, 1.0
    %v3358 = vadd.f32 %v3354, 1.0
    %v3359 = vadd.f32 %v3355, 1.0
    %v3360 = vmul.f32 %v3356, 0.5
    %v3361 = vmul.f32 %v3357, 0.5
    %v3362 = vmul.f32 %v3358, 0.5
    %v3363 = vmul.f32 %v3359, 0.5
    %v3364 = vmul.f32 %v3324, %v3360
    %v3365 = vmul.f32 %v3326, %v3361
    %v3366 = vmul.f32 %v3328, %v3362
    %v3367 = vmul.f32 %v3330, %v3363
    %v3368 = vld [vmem:[#allocation2 + $0x600] sm:$0xf]
    %v3369 = vld [vmem:[#allocation2 + $0x60c] sm:$0xf]
    %v3370 = vld [vmem:[#allocation2 + $0x618] sm:$0xf]
    %v3371 = vld [vmem:[#allocation2 + $0x624] sm:$0xf]
    %v3372 = vld [vmem:[#allocation2 + $0x630] sm:$0xf]
    %v3373 = vld [vmem:[#allocation2 + $0x63c] sm:$0xf]
    %v3374 = vld [vmem:[#allocation2 + $0x648] sm:$0xf]
    %v3375 = vld [vmem:[#allocation2 + $0x654] sm:$0xf]
    %v3376 = vld [vmem:[#allocation2 + $0x660] sm:$0xf]
    %v3377 = vld [vmem:[#allocation2 + $0x66c] sm:$0xf]
    %v3378 = vld [vmem:[#allocation2 + $0x678] sm:$0xf]
    %v3379 = vld [vmem:[#allocation2 + $0x684] sm:$0xf]
    %v3380 = vld [vmem:[#allocation2 + $0x690] sm:$0xf]
    %v3381 = vld [vmem:[#allocation2 + $0x69c] sm:$0xf]
    %v3382 = vld [vmem:[#allocation2 + $0x6a8] sm:$0xf]
    %v3383 = vld [vmem:[#allocation2 + $0x6b4] sm:$0xf]
    %v3384 = vld [vmem:[#allocation2 + $0x6c0] sm:$0xf]
    %v3385 = vld [vmem:[#allocation2 + $0x6cc] sm:$0xf]
    %v3386 = vld [vmem:[#allocation2 + $0x6d8] sm:$0xf]
    %v3387 = vld [vmem:[#allocation2 + $0x6e4] sm:$0xf]
    %v3388 = vld [vmem:[#allocation2 + $0x6f0] sm:$0xf]
    %v3389 = vld [vmem:[#allocation2 + $0x6fc] sm:$0xf]
    %v3390 = vld [vmem:[#allocation2 + $0x708] sm:$0xf]
    %v3391 = vld [vmem:[#allocation2 + $0x714] sm:$0xf]
    %v3392 = vld [vmem:[#allocation2 + $0x720] sm:$0xf]
    %v3393 = vld [vmem:[#allocation2 + $0x72c] sm:$0xf]
    %v3394 = vld [vmem:[#allocation2 + $0x738] sm:$0xf]
    %v3395 = vld [vmem:[#allocation2 + $0x744] sm:$0xf]
    %v3396 = vld [vmem:[#allocation2 + $0x750] sm:$0xf]
    %v3397 = vld [vmem:[#allocation2 + $0x75c] sm:$0xf]
    %v3398 = vld [vmem:[#allocation2 + $0x768] sm:$0xf]
    %v3399 = vld [vmem:[#allocation2 + $0x774] sm:$0xf]
    %v3400 = vpack.c.bf16 %v3366, %v3364
    %v3401 = vpack.c.bf16 %v3367, %v3365
    %v3402 = vld [vmem:[#allocation5 + $0x1f] ss:$0 sm:$0xff]
    %v3435 = vunpack.c.l.b16 %v3368
    %v3436 = vunpack.c.l.b16 %v3369
    %v3437 = vunpack.c.l.b16 %v3370
    %v3438 = vunpack.c.l.b16 %v3371
    %v3439 = vunpack.c.l.b16 %v3372
    %v3440 = vunpack.c.l.b16 %v3373
    %v3441 = vunpack.c.l.b16 %v3374
    %v3442 = vunpack.c.l.b16 %v3375
    %v3443 = vunpack.c.l.b16 %v3376
    %v3444 = vunpack.c.l.b16 %v3377
    %v3445 = vunpack.c.l.b16 %v3378
    %v3446 = vunpack.c.l.b16 %v3379
    %v3447 = vunpack.c.l.b16 %v3380
    %v3448 = vunpack.c.l.b16 %v3381
    %v3449 = vunpack.c.l.b16 %v3382
    %v3450 = vunpack.c.l.b16 %v3383
    %v3451 = vunpack.c.l.b16 %v3384
    %v3452 = vunpack.c.l.b16 %v3385
    %v3453 = vunpack.c.l.b16 %v3386
    %v3454 = vunpack.c.l.b16 %v3387
    %v3455 = vunpack.c.l.b16 %v3388
    %v3456 = vunpack.c.l.b16 %v3389
    %v3457 = vunpack.c.l.b16 %v3390
    %v3458 = vunpack.c.l.b16 %v3391
    %v3459 = vunpack.c.l.b16 %v3392
    %v3460 = vunpack.c.l.b16 %v3393
    %v3461 = vunpack.c.l.b16 %v3394
    %v3462 = vunpack.c.l.b16 %v3395
    %v3463 = vunpack.c.l.b16 %v3396
    %v3464 = vunpack.c.l.b16 %v3397
    %v3465 = vunpack.c.l.b16 %v3398
    %v3466 = vunpack.c.l.b16 %v3399
    %v3467 = vpack.c.b16 %v3436, %v3435
    %v3468 = vpack.c.b16 %v3438, %v3437
    %v3469 = vpack.c.b16 %v3440, %v3439
    %v3470 = vpack.c.b16 %v3442, %v3441
    %v3471 = vpack.c.b16 %v3444, %v3443
    %v3472 = vpack.c.b16 %v3446, %v3445
    %v3473 = vpack.c.b16 %v3448, %v3447
    %v3474 = vpack.c.b16 %v3450, %v3449
    %v3475 = vpack.c.b16 %v3452, %v3451
    %v3476 = vpack.c.b16 %v3454, %v3453
    %v3477 = vpack.c.b16 %v3456, %v3455
    %v3478 = vpack.c.b16 %v3458, %v3457
    %v3479 = vpack.c.b16 %v3460, %v3459
    %v3480 = vpack.c.b16 %v3462, %v3461
    %v3481 = vpack.c.b16 %v3464, %v3463
    %v3482 = vpack.c.b16 %v3466, %v3465
    %3499 = vmatprep.subr.bf16.mxu0 0
    %3500 = vmatpush1.bf16.msra.mxu0 %v3467
    %3501 = vmatprep.subr.bf16.mxu0 0
    %3502 = vmatpush1.bf16.msra.mxu0 %v3468
    %3503 = vmatprep.subr.bf16.mxu0 0
    %3504 = vmatpush1.bf16.msra.mxu0 %v3469
    %3505 = vmatprep.subr.bf16.mxu0 0
    %3506 = vmatpush1.bf16.msra.mxu0 %v3470
    %3507 = vmatprep.subr.bf16.mxu0 0
    %3508 = vmatpush1.bf16.msra.mxu0 %v3471
    %3509 = vmatprep.subr.bf16.mxu0 0
    %3510 = vmatpush1.bf16.msra.mxu0 %v3472
    %3511 = vmatprep.subr.bf16.mxu0 0
    %3512 = vmatpush1.bf16.msra.mxu0 %v3473
    %3513 = vmatprep.subr.bf16.mxu0 0
    %3514 = vmatpush1.bf16.msra.mxu0 %v3474
    %3515 = vmatprep.subr.bf16.mxu0 0
    %3516 = vmatpush1.bf16.msra.mxu0 %v3475
    %3517 = vmatprep.subr.bf16.mxu0 0
    %3518 = vmatpush1.bf16.msra.mxu0 %v3476
    %3519 = vmatprep.subr.bf16.mxu0 0
    %3520 = vmatpush1.bf16.msra.mxu0 %v3477
    %3521 = vmatprep.subr.bf16.mxu0 0
    %3522 = vmatpush1.bf16.msra.mxu0 %v3478
    %3523 = vmatprep.subr.bf16.mxu0 0
    %3524 = vmatpush1.bf16.msra.mxu0 %v3479
    %3525 = vmatprep.subr.bf16.mxu0 0
    %3526 = vmatpush1.bf16.msra.mxu0 %v3480
    %3527 = vmatprep.subr.bf16.mxu0 0
    %3528 = vmatpush1.bf16.msra.mxu0 %v3481
    %3529 = vmatprep.subr.bf16.mxu0 0
    %3530 = vmatpush1.bf16.msra.mxu0 %v3482
    %3531 = vmatprep.mubr.bf16.mxu0 %v3401
    %3532 = vmatmul.mubr.bf16.gmra.mrb[0].mxu0 %v3400
    %v3533 = vpop.f32.mrb[0].mxu0
    %v3534 = vadd.f32 %v3402, %v3533
    %v3535 = vpop.f32.mrb[0].mxu0
    %v3536 = vpop.f32.mrb[0].mxu0
    %v3537 = vadd.f32 %v3402, %v3536
    %v3538 = vpop.f32.mrb[0].mxu0
    %3539 = vdwg.mxu0
    %v3540 = vadd.f32 %v3177, %v3534
    %v3541 = vadd.f32 %v3178, %v3537
    %v3542 = vld [vmem:[#allocation5 + $0x30] ss:$0 sm:$0xff]
    %v3543 = vld [vmem:[#allocation5 + $0x31] ss:$0 sm:$0xff]
    %3544 = vadd.xlane.f32.xlu0 %v3540
    %v3545 = vpop.xlane.xlu0 %3544
    %3546 = vadd.xlane.f32.xlu0 %v3541
    %v3547 = vpop.xlane.xlu0 %3546
    %v3548 = vmul.f32 %v3545, %v52
    %v3549 = vmul.f32 %v3547, %v52
    %v3550 = vmul.f32 %v3540, %v3540
    %v3551 = vmul.f32 %v3541, %v3541
    %3552 = vadd.xlane.f32.xlu0 %v3550
    %v3553 = vpop.xlane.xlu0 %3552
    %3554 = vadd.xlane.f32.xlu0 %v3551
    %v3555 = vpop.xlane.xlu0 %3554
    %v3556 = vmul.f32 %v3553, %v52
    %v3557 = vmul.f32 %v3555, %v52
    %v3558 = vmul.f32 %v3548, %v3548
    %v3559 = vmul.f32 %v3549, %v3549
    %v3560 = vsub.f32 %v3556, %v3558
    %v3561 = vsub.f32 %v3557, %v3559
    %v3562 = vsub.f32 %v3540, %v3548
    %v3563 = vsub.f32 %v3541, %v3549
    %v3564 = vadd.f32 %v3560, 1e-12
    %v3565 = vadd.f32 %v3561, 1e-12
    %v3566 = vrsqrt.pop %v3564
    %v3567 = vrsqrt.pop %v3565
    %v3568 = vmul.f32 %v3562, %v3566
    %v3569 = vmul.f32 %v3563, %v3567
    %v3570 = vmul.f32 %v3568, %v3542
    %v3571 = vmul.f32 %v3569, %v3542
    %v3572 = vadd.f32 %v3570, %v3543
    %v3573 = vadd.f32 %v3571, %v3543
    %v3574 = vld [vmem:[#allocation2 + $0x780] sm:$0xf]
    %v3575 = vld [vmem:[#allocation2 + $0x78c] sm:$0xf]
    %v3576 = vld [vmem:[#allocation2 + $0x798] sm:$0xf]
    %v3577 = vld [vmem:[#allocation2 + $0x7a4] sm:$0xf]
    %v3578 = vld [vmem:[#allocation2 + $0x7b0] sm:$0xf]
    %v3579 = vld [vmem:[#allocation2 + $0x7bc] sm:$0xf]
    %v3580 = vld [vmem:[#allocation2 + $0x7c8] sm:$0xf]
    %v3581 = vld [vmem:[#allocation2 + $0x7d4] sm:$0xf]
    %v3582 = vld [vmem:[#allocation2 + $0x7e0] sm:$0xf]
    %v3583 = vld [vmem:[#allocation2 + $0x7ec] sm:$0xf]
    %v3584 = vld [vmem:[#allocation2 + $0x7f8] sm:$0xf]
    %v3585 = vld [vmem:[#allocation2 + $0x804] sm:$0xf]
    %v3586 = vld [vmem:[#allocation2 + $0x810] sm:$0xf]
    %v3587 = vld [vmem:[#allocation2 + $0x81c] sm:$0xf]
    %v3588 = vld [vmem:[#allocation2 + $0x828] sm:$0xf]
    %v3589 = vld [vmem:[#allocation2 + $0x834] sm:$0xf]
    %v3590 = vpack.c.bf16 %v3572, %v3572
    %v3591 = vpack.c.bf16 %v3573, %v3573
    %v3592 = vld [vmem:[#allocation5 + $0x32] ss:$0 sm:$0xff]
    %v3595 = vunpack.c.l.b16 %v3590
    %v3596 = vunpack.c.l.b16 %v3591
    %v3597 = vrot.slane %v3596, 7
    %vm3598 = vcmask 1041409
    %v3599 = vsel %vm3598, %v3597, %v3595
    %v3600 = vpack.c.b16 %v3599, %v3599
    %v3618 = vunpack.c.l.b16 %v3574
    %v3619 = vunpack.c.l.b16 %v3575
    %v3620 = vunpack.c.l.b16 %v3576
    %v3621 = vunpack.c.l.b16 %v3577
    %v3622 = vunpack.c.l.b16 %v3578
    %v3623 = vunpack.c.l.b16 %v3579
    %v3624 = vunpack.c.l.b16 %v3580
    %v3625 = vunpack.c.l.b16 %v3581
    %v3626 = vunpack.c.l.b16 %v3582
    %v3627 = vunpack.c.l.b16 %v3583
    %v3628 = vunpack.c.l.b16 %v3584
    %v3629 = vunpack.c.l.b16 %v3585
    %v3630 = vunpack.c.l.b16 %v3586
    %v3631 = vunpack.c.l.b16 %v3587
    %v3632 = vunpack.c.l.b16 %v3588
    %v3633 = vunpack.c.l.b16 %v3589
    %v3634 = vpack.c.b16 %v3619, %v3618
    %v3635 = vpack.c.b16 %v3621, %v3620
    %v3636 = vpack.c.b16 %v3623, %v3622
    %v3637 = vpack.c.b16 %v3625, %v3624
    %v3638 = vpack.c.b16 %v3627, %v3626
    %v3639 = vpack.c.b16 %v3629, %v3628
    %v3640 = vpack.c.b16 %v3631, %v3630
    %v3641 = vpack.c.b16 %v3633, %v3632
    %3650 = vmatprep.subr.bf16.mxu0 0
    %3651 = vmatpush1.bf16.msra.mxu0 %v3634
    %3652 = vmatprep.subr.bf16.mxu0 0
    %3653 = vmatpush1.bf16.msra.mxu0 %v3635
    %3654 = vmatprep.subr.bf16.mxu0 0
    %3655 = vmatpush1.bf16.msra.mxu0 %v3636
    %3656 = vmatprep.subr.bf16.mxu0 0
    %3657 = vmatpush1.bf16.msra.mxu0 %v3637
    %3658 = vmatprep.subr.bf16.mxu0 0
    %3659 = vmatpush1.bf16.msra.mxu0 %v3638
    %3660 = vmatprep.subr.bf16.mxu0 0
    %3661 = vmatpush1.bf16.msra.mxu0 %v3639
    %3662 = vmatprep.subr.bf16.mxu0 0
    %3663 = vmatpush1.bf16.msra.mxu0 %v3640
    %3664 = vmatprep.subr.bf16.mxu0 0
    %3665 = vmatpush1.bf16.msra.mxu0 %v3641
    %3666 = vmatprep.subr.bf16.mxu0 0
    %3667 = vmatpush1.bf16.msra.mxu0 0
    %3668 = vmatprep.subr.bf16.mxu0 0
    %3669 = vmatpush1.bf16.msra.mxu0 0
    %3670 = vmatprep.subr.bf16.mxu0 0
    %3671 = vmatpush1.bf16.msra.mxu0 0
    %3672 = vmatprep.subr.bf16.mxu0 0
    %3673 = vmatpush1.bf16.msra.mxu0 0
    %3674 = vmatprep.subr.bf16.mxu0 0
    %3675 = vmatpush1.bf16.msra.mxu0 0
    %3676 = vmatprep.subr.bf16.mxu0 0
    %3677 = vmatpush1.bf16.msra.mxu0 0
    %3678 = vmatprep.subr.bf16.mxu0 0
    %3679 = vmatpush1.bf16.msra.mxu0 0
    %3680 = vmatprep.subr.bf16.mxu0 0
    %3681 = vmatpush1.bf16.msra.mxu0 0
    %3682 = vmatprep.mubr.bf16.mxu0 0
    %3683 = vmatmul.mubr.bf16.gmra.mrb[0].mxu0 %v3600
    %v3684 = vpop.f32.mrb[0].mxu0
    %v3685 = vadd.f32 %v3592, %v3684
    %v3686 = vpop.f32.mrb[0].mxu0
    %v3687 = vpop.f32.mrb[0].mxu0
    %v3688 = vpop.f32.mrb[0].mxu0
    %3689 = vdwg.mxu0
    %v3690 = vtanh.pop %v3685
    %v3691 = vld [vmem:[#allocation2 + $0x840] sm:$0xf]
    %v3692 = vld [vmem:[#allocation2 + $0x84c] sm:$0xf]
    %v3693 = vld [vmem:[#allocation2 + $0x858] sm:$0xf]
    %v3694 = vld [vmem:[#allocation2 + $0x864] sm:$0xf]
    %v3695 = vld [vmem:[#allocation2 + $0x870] sm:$0xf]
    %v3696 = vld [vmem:[#allocation2 + $0x87c] sm:$0xf]
    %v3697 = vld [vmem:[#allocation2 + $0x888] sm:$0xf]
    %v3698 = vld [vmem:[#allocation2 + $0x894] sm:$0xf]
    %v3699 = vld [vmem:[#allocation2 + $0x8a0] sm:$0xf]
    %v3700 = vld [vmem:[#allocation2 + $0x8ac] sm:$0xf]
    %v3701 = vld [vmem:[#allocation2 + $0x8b8] sm:$0xf]
    %v3702 = vld [vmem:[#allocation2 + $0x8c4] sm:$0xf]
    %v3703 = vld [vmem:[#allocation2 + $0x8d0] sm:$0xf]
    %v3704 = vld [vmem:[#allocation2 + $0x8dc] sm:$0xf]
    %v3705 = vld [vmem:[#allocation2 + $0x8e8] sm:$0xf]
    %v3706 = vld [vmem:[#allocation2 + $0x8f4] sm:$0xf]
    %v3707 = vpack.c.bf16 %v3690, %v3690
    %v3708 = vld [vmem:[#allocation5 + $0x33] ss:$0 sm:$0xff]
    %v3725 = vunpack.c.l.b16 %v3691
    %v3726 = vunpack.c.l.b16 %v3692
    %v3727 = vunpack.c.l.b16 %v3693
    %v3728 = vunpack.c.l.b16 %v3694
    %v3729 = vunpack.c.l.b16 %v3695
    %v3730 = vunpack.c.l.b16 %v3696
    %v3731 = vunpack.c.l.b16 %v3697
    %v3732 = vunpack.c.l.b16 %v3698
    %v3733 = vunpack.c.l.b16 %v3699
    %v3734 = vunpack.c.l.b16 %v3700
    %v3735 = vunpack.c.l.b16 %v3701
    %v3736 = vunpack.c.l.b16 %v3702
    %v3737 = vunpack.c.l.b16 %v3703
    %v3738 = vunpack.c.l.b16 %v3704
    %v3739 = vunpack.c.l.b16 %v3705
    %v3740 = vunpack.c.l.b16 %v3706
    %v3741 = vpack.c.b16 %v3726, %v3725
    %v3742 = vpack.c.b16 %v3728, %v3727
    %v3743 = vpack.c.b16 %v3730, %v3729
    %v3744 = vpack.c.b16 %v3732, %v3731
    %v3745 = vpack.c.b16 %v3734, %v3733
    %v3746 = vpack.c.b16 %v3736, %v3735
    %v3747 = vpack.c.b16 %v3738, %v3737
    %v3748 = vpack.c.b16 %v3740, %v3739
    %3757 = vmatprep.subr.bf16.mxu0 0
    %3758 = vmatpush1.bf16.msra.mxu0 %v3741
    %3759 = vmatprep.subr.bf16.mxu0 0
    %3760 = vmatpush1.bf16.msra.mxu0 %v3742
    %3761 = vmatprep.subr.bf16.mxu0 0
    %3762 = vmatpush1.bf16.msra.mxu0 %v3743
    %3763 = vmatprep.subr.bf16.mxu0 0
    %3764 = vmatpush1.bf16.msra.mxu0 %v3744
    %3765 = vmatprep.subr.bf16.mxu0 0
    %3766 = vmatpush1.bf16.msra.mxu0 %v3745
    %3767 = vmatprep.subr.bf16.mxu0 0
    %3768 = vmatpush1.bf16.msra.mxu0 %v3746
    %3769 = vmatprep.subr.bf16.mxu0 0
    %3770 = vmatpush1.bf16.msra.mxu0 %v3747
    %3771 = vmatprep.subr.bf16.mxu0 0
    %3772 = vmatpush1.bf16.msra.mxu0 %v3748
    %3773 = vmatprep.subr.bf16.mxu0 0
    %3774 = vmatpush1.bf16.msra.mxu0 0
    %3775 = vmatprep.subr.bf16.mxu0 0
    %3776 = vmatpush1.bf16.msra.mxu0 0
    %3777 = vmatprep.subr.bf16.mxu0 0
    %3778 = vmatpush1.bf16.msra.mxu0 0
    %3779 = vmatprep.subr.bf16.mxu0 0
    %3780 = vmatpush1.bf16.msra.mxu0 0
    %3781 = vmatprep.subr.bf16.mxu0 0
    %3782 = vmatpush1.bf16.msra.mxu0 0
    %3783 = vmatprep.subr.bf16.mxu0 0
    %3784 = vmatpush1.bf16.msra.mxu0 0
    %3785 = vmatprep.subr.bf16.mxu0 0
    %3786 = vmatpush1.bf16.msra.mxu0 0
    %3787 = vmatprep.subr.bf16.mxu0 0
    %3788 = vmatpush1.bf16.msra.mxu0 0
    %3789 = vmatprep.mubr.bf16.mxu0 0
    %3790 = vmatmul.mubr.bf16.gmra.mrb[0].mxu0 %v3707
    %v3791 = vpop.f32.mrb[0].mxu0
    %v3792 = vadd.f32 %v3708, %v3791
    %v3793 = vpop.f32.mrb[0].mxu0
    %v3794 = vpop.f32.mrb[0].mxu0
    %v3795 = vpop.f32.mrb[0].mxu0
    %3796 = vdwg.mxu0
    %3797 = vst [vmem:[#allocation7] sm:$0x3] %v3792
    // Predicated region
    $region22: #{bert_utt_encoder.1} parent=1 // pred_check
      _
    $region23: #{bert_utt_encoder.1} parent=1 // pred_check_branch
      %3799 = sbr.rel (0) target = $region25
    $region24: #{bert_utt_encoder.1} parent=1 // pred_region
      %s3801 = ssub.s32 32, 32
      %3802 = vsyncadd [#allocation4], %s3801
      %s3804 = sshll.u32 [#allocation7], 4
      %s3805 = int_to_ptr.vmem [resolvable:$true] %s3804
      %3807 = dma.vmem_to_hbm [thread:$0]  %s3805, 32, %s3, [#allocation4]
    $region25: #{bert_utt_encoder.1} parent=1 // pred_fallthru
      _
    // Predicated region
    $region26: #{bert_utt_encoder.1} parent=1 // pred_check
      _
    $region27: #{bert_utt_encoder.1} parent=1 // pred_check_branch
      %3809 = sbr.rel (0) target = $region29
    $region28: #{bert_utt_encoder.1} parent=1 // pred_region
      %3810 = dma.done [#allocation4], 32
    $region29: #{bert_utt_encoder.1} parent=1 // pred_fallthru
      _
    %3811 = vsyncpa [#allocation3], 1
    %3812 = vsyncpa [#allocation6], 1
    %3813 = vsyncpa [#allocation4], 1

</llo_original>
